<compile_context>
chip_gen: v6e
topology: v6e:2x2x1
jax: 0.10.0
libtpu: 0.0.40
codegen_flags: <defaults>
</compile_context>

<pallas_src>
import functools

import jax
import jax.numpy as jnp
from jax import lax
from jax.experimental import pallas as pl
from jax.experimental.pallas import tpu as pltpu


def _layernorm(z, gamma, beta, eps=1e-5):
    mu = jnp.mean(z, axis=-1, keepdims=True)
    var = jnp.mean((z - mu) ** 2, axis=-1, keepdims=True)
    return (z - mu) * lax.rsqrt(var + eps) * gamma + beta


def transformer_block_kernel(
    x_ref,
    wqkv_ref, bqkv_ref, wo_ref, bo_ref,
    w1_ref, b1_ref, w2_ref, b2_ref,
    g1_ref, be1_ref, g2_ref, be2_ref,
    o_ref,
    qkv_scr, attn_scr,
    *, num_heads, f_chunk, approx_recip,
):
    Bt, S, E = x_ref.shape
    H = num_heads
    D = E // H
    M = Bt * S
    scale = 1.0 / (D ** 0.5)
    cd = wqkv_ref.dtype                       # MXU compute dtype (f32 or bf16)

    # x stays f32 for the residual / LayerNorm path (parity with the PyTorch
    # reference); it is cast to the MXU dtype only where it feeds a matmul.
    x_f32 = x_ref[...].reshape(M, E).astype(jnp.float32)

    # --- Fused QKV projection: one (M,E) x (E,3E) MXU pass, f32 accumulate ---
    qkv = jnp.dot(x_f32.astype(cd), wqkv_ref[...],
                  preferred_element_type=jnp.float32) + bqkv_ref[...]
    # Fold 1/sqrt(D) into q, then stash q|k|v in a VMEM scratch so the batch
    # loop below can slice it with a dynamic sublane offset.
    qkv_scr[:, :E] = (qkv[:, :E] * scale).astype(cd)
    qkv_scr[:, E:] = qkv[:, E:].astype(cd)

    # --- Attention: fori over batch elements, static unroll over heads. ------
    # Each head writes its normalized (S, D) output straight into an (M, E)
    # scratch at lane offset h*D; nothing but ref stores survives an iteration,
    # so live ranges stay bounded regardless of Bt*H.
    def per_batch(b, carry):
        r = pl.multiple_of(b * S, S)
        for h in range(H):                                     # H is small/static
            c = h * D
            qh = qkv_scr[pl.ds(r, S), c:c + D]
            kh = qkv_scr[pl.ds(r, S), E + c:E + c + D]
            vh = qkv_scr[pl.ds(r, S), 2 * E + c:2 * E + c + D]
            # Contract on D directly (no kh.T -> no XLU transpose per head).
            s_bh = lax.dot_general(qh, kh, (((1,), (1,)), ((), ())),
                                   preferred_element_type=jnp.float32)
            s_bh = s_bh - jnp.max(s_bh, axis=-1, keepdims=True)
            p = jnp.exp(s_bh)
            l = jnp.sum(p, axis=-1, keepdims=True)             # (S, 1), l >= 1
            oh = jnp.dot(p.astype(cd), vh, preferred_element_type=jnp.float32)
            oh = oh * pl.reciprocal(l, approx=approx_recip)    # deferred softmax norm
            attn_scr[pl.ds(r, S), c:c + D] = oh.astype(cd)
        return carry

    lax.fori_loop(0, Bt, per_batch, 0, unroll=Bt <= 8)

    # --- Output projection: ONE full-K (M,E) x (E,E) matmul -------------------
    attn = jnp.dot(attn_scr[...], wo_ref[...],
                   preferred_element_type=jnp.float32) + bo_ref[...]

    # --- Residual + LayerNorm 1 (dropout1 == identity), f32 math --------------
    out1 = _layernorm(x_f32 + attn, g1_ref[...], be1_ref[...])

    # --- FFN tiled over the hidden dim F: caps the live intermediate at -------
    # (M, f_chunk) instead of (M, F); MXU K/N stay full-width.
    out1_cd = out1.astype(cd)
    F = w1_ref.shape[1]
    ffn = jnp.zeros((M, E), jnp.float32)
    for f0 in range(0, F, f_chunk):                            # static chunk loop
        h1c = jnp.dot(out1_cd, w1_ref[:, f0:f0 + f_chunk],
                      preferred_element_type=jnp.float32)
        h1c = jnp.maximum(h1c + b1_ref[:, f0:f0 + f_chunk], 0.0)
        ffn = ffn + jnp.dot(h1c.astype(cd), w2_ref[f0:f0 + f_chunk, :],
                            preferred_element_type=jnp.float32)
    ffn = ffn + b2_ref[...]

    # --- Residual + LayerNorm 2 (dropout2 == identity) ------------------------
    out2 = _layernorm(out1 + ffn, g2_ref[...], be2_ref[...])
    o_ref[...] = out2.reshape(Bt, S, E).astype(o_ref.dtype)


def _default_vmem_limit_bytes():
    """~80% of this generation's physical VMEM (v5e/v6e: 128 MiB -> ~102 MiB,
    v7x: 64 MiB -> ~51 MiB)."""
    try:
        cap = pltpu.get_tpu_info().vmem_capacity_bytes
    except Exception:  # pragma: no cover -- query unavailable
        cap = 64 * 1024 * 1024
    return int(cap * 0.8)


def _pick_f_chunk(F, cap=512):
    """Largest divisor of F that is <= cap (full F when it already fits)."""
    if F <= cap:
        return F
    for d in range(cap, 0, -1):
        if F % d == 0:
            return d
    return F


def _default_block_b(B, S, E, F, f_chunk, cd_bytes, out_bytes, vmem_bytes):
    """VMEM-budgeted block_b, generation-aware via the VMEM capacity hint."""
    # Weights resident once (single-buffered constant blocks) + small f32 biases.
    weight_bytes = (4 * E * E + 2 * E * F) * cd_bytes + (9 * E + F) * 4
    budget = int(vmem_bytes * 0.85) - weight_bytes
    # Per row of M = block_b*S: x block (f32, 2 bufs) + out block (2 bufs)
    # + qkv/attn scratch (4E, compute dtype) + f32 transients (~8E + 2*f_chunk).
    per_row = (2 * E * 4 + 2 * E * out_bytes + 4 * E * cd_bytes
               + (8 * E + 2 * f_chunk) * 4)
    max_rows = max(S, budget // max(per_row, 1))
    max_rows = min(max_rows, 1024)            # diminishing returns past ~1k rows
    divs = [d for d in range(1, B + 1) if B % d == 0 and d * S <= max_rows]
    if not divs:
        return 1
    # 64-MiB parts (v7x) have 2 TensorCores: keep >= 2 grid steps so the
    # "parallel" batch axis feeds both cores.  On 128-MiB single-core parts
    # (v5e/v6e) a single big step avoids per-step pipeline overhead.
    if vmem_bytes < (100 << 20):
        multi = [d for d in divs if B // d >= 2]
        if multi:
            return max(multi)
    return max(divs)


def prepare_params(params, compute_dtype=jnp.float32):
    """Fuse the QKV weights and cast matmul operands to the MXU compute dtype
    ONCE per model (hoisted out of the per-call path).  Biases / LayerNorm
    params stay f32 (they are added to f32 accumulators inside the kernel)."""
    cd = jnp.dtype(compute_dtype)
    f32 = jnp.float32
    return {
        "wqkv": jnp.concatenate([params["wq"], params["wk"], params["wv"]],
                                axis=1).astype(cd),
        "bqkv": jnp.concatenate([params["bq"], params["bk"], params["bv"]],
                                axis=1).astype(f32),
        "wo": params["wo"].astype(cd), "bo": params["bo"].astype(f32),
        "w1": params["w1"].astype(cd), "b1": params["b1"].astype(f32),
        "w2": params["w2"].astype(cd), "b2": params["b2"].astype(f32),
        "g1": params["g1"].astype(f32), "be1": params["be1"].astype(f32),
        "g2": params["g2"].astype(f32), "be2": params["be2"].astype(f32),
    }


def transformer_block(x, prepared, *, num_heads, block_b=None, out_dtype=None,
                      vmem_limit_bytes=None):
    B, S, E = x.shape
    assert E % num_heads == 0, "embed_dim must be divisible by num_heads"
    cd = prepared["wqkv"].dtype
    F = prepared["w1"].shape[1]
    out_dtype = jnp.dtype(out_dtype) if out_dtype is not None else x.dtype
    if vmem_limit_bytes is None:
        vmem_limit_bytes = _default_vmem_limit_bytes()

    f_chunk = _pick_f_chunk(F)
    if block_b is None:
        block_b = _default_block_b(B, S, E, F, f_chunk, cd.itemsize,
                                   jnp.dtype(out_dtype).itemsize,
                                   vmem_limit_bytes)
    assert B % block_b == 0, "block_b must divide the batch size"
    grid = (B // block_b,)
    M = block_b * S

    weight_args = (
        prepared["wqkv"], prepared["bqkv"],
        prepared["wo"], prepared["bo"],
        prepared["w1"], prepared["b1"],
        prepared["w2"], prepared["b2"],
        prepared["g1"], prepared["be1"],
        prepared["g2"], prepared["be2"],
    )

    kernel = functools.partial(
        transformer_block_kernel,
        num_heads=num_heads,
        f_chunk=f_chunk,
        approx_recip=(cd != jnp.dtype(jnp.float32)),
    )

    def _invoke(single_buffer_weights):
        def const_spec(shape):
            if single_buffer_weights:
                # Constant-index blocks never change across the grid: single-
                # buffer them so weights occupy half the VMEM.
                return pl.BlockSpec(shape, lambda i: (0, 0),
                                    pipeline_mode=pl.Buffered(1))
            return pl.BlockSpec(shape, lambda i: (0, 0))

        in_specs = [pl.BlockSpec((block_b, S, E), lambda i: (i, 0, 0))]
        in_specs += [const_spec(w.shape) for w in weight_args]

        return pl.pallas_call(
            kernel,
            out_shape=jax.ShapeDtypeStruct((B, S, E), out_dtype),
            grid_spec=pltpu.PrefetchScalarGridSpec(
                num_scalar_prefetch=0,
                grid=grid,
                in_specs=in_specs,
                out_specs=pl.BlockSpec((block_b, S, E), lambda i: (i, 0, 0)),
                scratch_shapes=[pltpu.VMEM((M, 3 * E), cd),   # q|k|v
                                pltpu.VMEM((M, E), cd)],      # per-head attn out
            ),
            compiler_params=pltpu.CompilerParams(
                dimension_semantics=("parallel",),
                vmem_limit_bytes=vmem_limit_bytes,
            ),
        )(x, *weight_args)

    try:
        return _invoke(True)
    except Exception:
        # Fallback if pipeline_mode=pl.Buffered(1) is rejected by this toolchain.
        return _invoke(False)


def transformer_block_ref(x, params, *, num_heads):
    """Pure-JAX reference mirroring PyTorch semantics (dropout = identity)."""
    B, S, E = x.shape
    D = E // num_heads
    q = x @ params["wq"] + params["bq"]
    k = x @ params["wk"] + params["bk"]
    v = x @ params["wv"] + params["bv"]
    q = q.reshape(B, S, num_heads, D).transpose(0, 2, 1, 3)
    k = k.reshape(B, S, num_heads, D).transpose(0, 2, 1, 3)
    v = v.reshape(B, S, num_heads, D).transpose(0, 2, 1, 3)
    s = jnp.einsum("bhqd,bhkd->bhqk", q, k) / jnp.sqrt(D).astype(x.dtype)
    p = jax.nn.softmax(s, axis=-1)
    attn = jnp.einsum("bhqk,bhkd->bhqd", p, v).transpose(0, 2, 1, 3).reshape(B, S, E)
    attn = attn @ params["wo"] + params["bo"]

    def ln(z, g, b, eps=1e-5):
        mu = jnp.mean(z, axis=-1, keepdims=True)
        var = jnp.mean((z - mu) ** 2, axis=-1, keepdims=True)
        return (z - mu) / jnp.sqrt(var + eps) * g + b

    out1 = ln(x + attn, params["g1"], params["be1"])
    ffn = jnp.maximum(out1 @ params["w1"] + params["b1"], 0.0) @ params["w2"] + params["b2"]
    return ln(out1 + ffn, params["g2"], params["be2"])


def init_params(key, input_dim, ff_dim):
    E, F = input_dim, ff_dim
    ks = jax.random.split(key, 12)
    sc_e = 1.0 / jnp.sqrt(E)
    sc_f = 1.0 / jnp.sqrt(F)
    return {
        # attention in-proj (stored pre-transposed: (E_in, E_out))
        "wq": jax.random.normal(ks[0], (E, E), jnp.float32) * sc_e,
        "wk": jax.random.normal(ks[1], (E, E), jnp.float32) * sc_e,
        "wv": jax.random.normal(ks[2], (E, E), jnp.float32) * sc_e,
        "bq": jax.random.normal(ks[3], (1, E), jnp.float32) * 0.01,
        "bk": jax.random.normal(ks[4], (1, E), jnp.float32) * 0.01,
        "bv": jax.random.normal(ks[5], (1, E), jnp.float32) * 0.01,
        # attention out-proj
        "wo": jax.random.normal(ks[6], (E, E), jnp.float32) * sc_e,
        "bo": jax.random.normal(ks[7], (1, E), jnp.float32) * 0.01,
        # FFN
        "w1": jax.random.normal(ks[8], (E, F), jnp.float32) * sc_e,
        "b1": jax.random.normal(ks[9], (1, F), jnp.float32) * 0.01,
        "w2": jax.random.normal(ks[10], (F, E), jnp.float32) * sc_f,
        "b2": jax.random.normal(ks[11], (1, E), jnp.float32) * 0.01,
        # LayerNorms
        "g1": jnp.ones((1, E), jnp.float32),
        "be1": jnp.zeros((1, E), jnp.float32),
        "g2": jnp.ones((1, E), jnp.float32),
        "be2": jnp.zeros((1, E), jnp.float32),
    }


if __name__ == "__main__":
    B, S, E, H, F = 4, 8, 32, 4, 64   # batch, seq, input_dim, num_heads, ff_dim

    key = jax.random.PRNGKey(0)
    kx, kp = jax.random.split(key)
    x = jax.random.normal(kx, (B, S, E), jnp.float32)
    params = init_params(kp, E, F)

    ref = transformer_block_ref(x, params, num_heads=H)

    # f32 MXU path (exact reciprocal), VMEM-driven default block_b.
    prep_f32 = prepare_params(params, jnp.float32)
    out = transformer_block(x, prep_f32, num_heads=H)
    out = jax.block_until_ready(out)
    assert out.shape == (B, S, E)
    assert jnp.allclose(out, ref, atol=5e-4, rtol=5e-4), "f32 kernel mismatch"

    # bf16 MXU path (production config); x stays f32 on the residual/LN path.
    prep_bf16 = prepare_params(params, jnp.bfloat16)
    out_bf16 = transformer_block(x, prep_bf16, num_heads=H, block_b=2)
    out_bf16 = jax.block_until_ready(out_bf16)
    assert jnp.allclose(out_bf16, ref, atol=7.5e-2, rtol=7.5e-2), "bf16 kernel mismatch"

    print("KERNEL_OK")
</pallas_src>

<mosaic_0001>
module attributes {stable_mosaic.version = 11 : i64} {
  func.func @transformer_block_kernel(%arg0: i32, %arg1: memref<2x8x32xf32, #tpu.memory_space<vmem>>, %arg2: memref<32x96xf32, #tpu.memory_space<vmem>>, %arg3: memref<1x96xf32, #tpu.memory_space<vmem>>, %arg4: memref<32x32xf32, #tpu.memory_space<vmem>>, %arg5: memref<1x32xf32, #tpu.memory_space<vmem>>, %arg6: memref<32x64xf32, #tpu.memory_space<vmem>>, %arg7: memref<1x64xf32, #tpu.memory_space<vmem>>, %arg8: memref<64x32xf32, #tpu.memory_space<vmem>>, %arg9: memref<1x32xf32, #tpu.memory_space<vmem>>, %arg10: memref<1x32xf32, #tpu.memory_space<vmem>>, %arg11: memref<1x32xf32, #tpu.memory_space<vmem>>, %arg12: memref<1x32xf32, #tpu.memory_space<vmem>>, %arg13: memref<1x32xf32, #tpu.memory_space<vmem>>, %arg14: memref<2x8x32xf32, #tpu.memory_space<vmem>>, %arg15: memref<16x96xf32, #tpu.memory_space<vmem>>, %arg16: memref<16x32xf32, #tpu.memory_space<vmem>>) attributes {dimension_semantics = [#tpu.dimension_semantics<parallel>], iteration_bounds = array<i64: 2>, scalar_prefetch = 0 : i64, scratch_operands = 2 : i64, tpu.core_type = #tpu.core_type<tc>, window_params = [{transform_indices = @transform_0, window_bounds = array<i64: 2, 8, 32>}, {pipeline_mode = #tpu.pipeline_mode<synchronous>, transform_indices = @transform_1, window_bounds = array<i64: 32, 96>}, {pipeline_mode = #tpu.pipeline_mode<synchronous>, transform_indices = @transform_2, window_bounds = array<i64: 1, 96>}, {pipeline_mode = #tpu.pipeline_mode<synchronous>, transform_indices = @transform_3, window_bounds = array<i64: 32, 32>}, {pipeline_mode = #tpu.pipeline_mode<synchronous>, transform_indices = @transform_4, window_bounds = array<i64: 1, 32>}, {pipeline_mode = #tpu.pipeline_mode<synchronous>, transform_indices = @transform_5, window_bounds = array<i64: 32, 64>}, {pipeline_mode = #tpu.pipeline_mode<synchronous>, transform_indices = @transform_6, window_bounds = array<i64: 1, 64>}, {pipeline_mode = #tpu.pipeline_mode<synchronous>, transform_indices = @transform_7, window_bounds = array<i64: 64, 32>}, {pipeline_mode = #tpu.pipeline_mode<synchronous>, transform_indices = @transform_8, window_bounds = array<i64: 1, 32>}, {pipeline_mode = #tpu.pipeline_mode<synchronous>, transform_indices = @transform_9, window_bounds = array<i64: 1, 32>}, {pipeline_mode = #tpu.pipeline_mode<synchronous>, transform_indices = @transform_10, window_bounds = array<i64: 1, 32>}, {pipeline_mode = #tpu.pipeline_mode<synchronous>, transform_indices = @transform_11, window_bounds = array<i64: 1, 32>}, {pipeline_mode = #tpu.pipeline_mode<synchronous>, transform_indices = @transform_12, window_bounds = array<i64: 1, 32>}, {transform_indices = @transform_13, window_bounds = array<i64: 2, 8, 32>}]} {
    %c0 = arith.constant 0 : index
    %c0_0 = arith.constant 0 : index
    %c0_1 = arith.constant 0 : index
    %0 = vector.load %arg1[%c0, %c0_0, %c0_1] : memref<2x8x32xf32, #tpu.memory_space<vmem>>, vector<2x8x32xf32>
    %1 = vector.shape_cast %0 : vector<2x8x32xf32> to vector<16x32xf32>
    %c0_2 = arith.constant 0 : index
    %c0_3 = arith.constant 0 : index
    %2 = vector.load %arg2[%c0_2, %c0_3] : memref<32x96xf32, #tpu.memory_space<vmem>>, vector<32x96xf32>
    %cst = arith.constant dense<0.000000e+00> : vector<16x96xf32>
    %3 = tpu.matmul %1, %2, %cst {dimension_numbers = #tpu.dot_dimension_numbers<[1], [0], [0], [1], [0, 0, 1, 1], [], []>} : vector<16x32xf32>, vector<32x96xf32>, vector<16x96xf32> -> vector<16x96xf32>
    %c0_4 = arith.constant 0 : index
    %c0_5 = arith.constant 0 : index
    %4 = vector.load %arg3[%c0_4, %c0_5] : memref<1x96xf32, #tpu.memory_space<vmem>>, vector<1x96xf32>
    %5 = vector.broadcast %4 : vector<1x96xf32> to vector<16x96xf32>
    %6 = arith.addf %3, %5 : vector<16x96xf32>
    %7 = vector.extract_strided_slice %6 {offsets = [0, 0], sizes = [16, 32], strides = [1, 1]} : vector<16x96xf32> to vector<16x32xf32>
    %cst_6 = arith.constant 0.353553385 : f32
    %8 = vector.broadcast %cst_6 : f32 to vector<16x32xf32>
    %9 = arith.mulf %7, %8 : vector<16x32xf32>
    %c0_7 = arith.constant 0 : index
    %c0_8 = arith.constant 0 : index
    %10 = vector.load %arg15[%c0_7, %c0_8] : memref<16x96xf32, #tpu.memory_space<vmem>>, vector<16x32xf32>
    tpu.vector_store %arg15[%c0_7, %c0_8], %9 {strides = array<i32>} : memref<16x96xf32, #tpu.memory_space<vmem>>, vector<16x32xf32>,
    %11 = vector.extract_strided_slice %6 {offsets = [0, 32], sizes = [16, 64], strides = [1, 1]} : vector<16x96xf32> to vector<16x64xf32>
    %c0_9 = arith.constant 0 : index
    %c32 = arith.constant 32 : index
    %12 = vector.load %arg15[%c0_9, %c32] : memref<16x96xf32, #tpu.memory_space<vmem>>, vector<16x64xf32>
    tpu.vector_store %arg15[%c0_9, %c32], %11 {strides = array<i32>} : memref<16x96xf32, #tpu.memory_space<vmem>>, vector<16x64xf32>,
    %c0_i32 = arith.constant 0 : i32
    %c8_i32 = arith.constant 8 : i32
    %13 = arith.muli %c0_i32, %c8_i32 : i32
    %14 = tpu.assume_multiple %13, 8 : i32
    %15 = arith.index_cast %14 : i32 to index
    %c0_10 = arith.constant 0 : index
    %16 = vector.load %arg15[%15, %c0_10] : memref<16x96xf32, #tpu.memory_space<vmem>>, vector<8x8xf32>
    %17 = arith.index_cast %14 : i32 to index
    %c32_11 = arith.constant 32 : index
    %18 = vector.load %arg15[%17, %c32_11] : memref<16x96xf32, #tpu.memory_space<vmem>>, vector<8x8xf32>
    %19 = arith.index_cast %14 : i32 to index
    %c64 = arith.constant 64 : index
    %20 = vector.load %arg15[%19, %c64] : memref<16x96xf32, #tpu.memory_space<vmem>>, vector<8x8xf32>
    %cst_12 = arith.constant dense<0.000000e+00> : vector<8x8xf32>
    %21 = tpu.matmul %16, %18, %cst_12 {dimension_numbers = #tpu.dot_dimension_numbers<[1], [1], [0], [0], [0, 0, 1, 0], [], []>} : vector<8x8xf32>, vector<8x8xf32>, vector<8x8xf32> -> vector<8x8xf32>
    %cst_13 = arith.constant dense<0xFF800000> : vector<8xf32>
    %22 = vector.multi_reduction <maximumf>, %21, %cst_13 [1] : vector<8x8xf32> to vector<8xf32>
    %23 = vector.shape_cast %22 : vector<8xf32> to vector<8x1xf32>
    %24 = vector.broadcast %23 : vector<8x1xf32> to vector<8x8xf32>
    %25 = arith.subf %21, %24 : vector<8x8xf32>
    %26 = math.exp %25 : vector<8x8xf32>
    %cst_14 = arith.constant dense<0.000000e+00> : vector<8xf32>
    %27 = vector.multi_reduction <add>, %26, %cst_14 [1] : vector<8x8xf32> to vector<8xf32>
    %28 = vector.shape_cast %27 : vector<8xf32> to vector<8x1xf32>
    %cst_15 = arith.constant dense<0.000000e+00> : vector<8x8xf32>
    %29 = tpu.matmul %26, %20, %cst_15 {dimension_numbers = #tpu.dot_dimension_numbers<[1], [0], [0], [1], [0, 0, 1, 1], [], []>} : vector<8x8xf32>, vector<8x8xf32>, vector<8x8xf32> -> vector<8x8xf32>
    %30 = tpu.reciprocal %28 : vector<8x1xf32> -> vector<8x1xf32>
    %31 = vector.broadcast %30 : vector<8x1xf32> to vector<8x8xf32>
    %32 = arith.mulf %29, %31 : vector<8x8xf32>
    %33 = arith.index_cast %14 : i32 to index
    %c0_16 = arith.constant 0 : index
    %34 = vector.load %arg16[%33, %c0_16] : memref<16x32xf32, #tpu.memory_space<vmem>>, vector<8x8xf32>
    tpu.vector_store %arg16[%33, %c0_16], %32 {strides = array<i32>} : memref<16x32xf32, #tpu.memory_space<vmem>>, vector<8x8xf32>,
    %35 = arith.index_cast %14 : i32 to index
    %c8 = arith.constant 8 : index
    %36 = vector.load %arg15[%35, %c8] : memref<16x96xf32, #tpu.memory_space<vmem>>, vector<8x8xf32>
    %37 = arith.index_cast %14 : i32 to index
    %c40 = arith.constant 40 : index
    %38 = vector.load %arg15[%37, %c40] : memref<16x96xf32, #tpu.memory_space<vmem>>, vector<8x8xf32>
    %39 = arith.index_cast %14 : i32 to index
    %c72 = arith.constant 72 : index
    %40 = vector.load %arg15[%39, %c72] : memref<16x96xf32, #tpu.memory_space<vmem>>, vector<8x8xf32>
    %cst_17 = arith.constant dense<0.000000e+00> : vector<8x8xf32>
    %41 = tpu.matmul %36, %38, %cst_17 {dimension_numbers = #tpu.dot_dimension_numbers<[1], [1], [0], [0], [0, 0, 1, 0], [], []>} : vector<8x8xf32>, vector<8x8xf32>, vector<8x8xf32> -> vector<8x8xf32>
    %cst_18 = arith.constant dense<0xFF800000> : vector<8xf32>
    %42 = vector.multi_reduction <maximumf>, %41, %cst_18 [1] : vector<8x8xf32> to vector<8xf32>
    %43 = vector.shape_cast %42 : vector<8xf32> to vector<8x1xf32>
    %44 = vector.broadcast %43 : vector<8x1xf32> to vector<8x8xf32>
    %45 = arith.subf %41, %44 : vector<8x8xf32>
    %46 = math.exp %45 : vector<8x8xf32>
    %cst_19 = arith.constant dense<0.000000e+00> : vector<8xf32>
    %47 = vector.multi_reduction <add>, %46, %cst_19 [1] : vector<8x8xf32> to vector<8xf32>
    %48 = vector.shape_cast %47 : vector<8xf32> to vector<8x1xf32>
    %cst_20 = arith.constant dense<0.000000e+00> : vector<8x8xf32>
    %49 = tpu.matmul %46, %40, %cst_20 {dimension_numbers = #tpu.dot_dimension_numbers<[1], [0], [0], [1], [0, 0, 1, 1], [], []>} : vector<8x8xf32>, vector<8x8xf32>, vector<8x8xf32> -> vector<8x8xf32>
    %50 = tpu.reciprocal %48 : vector<8x1xf32> -> vector<8x1xf32>
    %51 = vector.broadcast %50 : vector<8x1xf32> to vector<8x8xf32>
    %52 = arith.mulf %49, %51 : vector<8x8xf32>
    %53 = arith.index_cast %14 : i32 to index
    %c8_21 = arith.constant 8 : index
    %54 = vector.load %arg16[%53, %c8_21] : memref<16x32xf32, #tpu.memory_space<vmem>>, vector<8x8xf32>
    tpu.vector_store %arg16[%53, %c8_21], %52 {strides = array<i32>} : memref<16x32xf32, #tpu.memory_space<vmem>>, vector<8x8xf32>,
    %55 = arith.index_cast %14 : i32 to index
    %c16 = arith.constant 16 : index
    %56 = vector.load %arg15[%55, %c16] : memref<16x96xf32, #tpu.memory_space<vmem>>, vector<8x8xf32>
    %57 = arith.index_cast %14 : i32 to index
    %c48 = arith.constant 48 : index
    %58 = vector.load %arg15[%57, %c48] : memref<16x96xf32, #tpu.memory_space<vmem>>, vector<8x8xf32>
    %59 = arith.index_cast %14 : i32 to index
    %c80 = arith.constant 80 : index
    %60 = vector.load %arg15[%59, %c80] : memref<16x96xf32, #tpu.memory_space<vmem>>, vector<8x8xf32>
    %cst_22 = arith.constant dense<0.000000e+00> : vector<8x8xf32>
    %61 = tpu.matmul %56, %58, %cst_22 {dimension_numbers = #tpu.dot_dimension_numbers<[1], [1], [0], [0], [0, 0, 1, 0], [], []>} : vector<8x8xf32>, vector<8x8xf32>, vector<8x8xf32> -> vector<8x8xf32>
    %cst_23 = arith.constant dense<0xFF800000> : vector<8xf32>
    %62 = vector.multi_reduction <maximumf>, %61, %cst_23 [1] : vector<8x8xf32> to vector<8xf32>
    %63 = vector.shape_cast %62 : vector<8xf32> to vector<8x1xf32>
    %64 = vector.broadcast %63 : vector<8x1xf32> to vector<8x8xf32>
    %65 = arith.subf %61, %64 : vector<8x8xf32>
    %66 = math.exp %65 : vector<8x8xf32>
    %cst_24 = arith.constant dense<0.000000e+00> : vector<8xf32>
    %67 = vector.multi_reduction <add>, %66, %cst_24 [1] : vector<8x8xf32> to vector<8xf32>
    %68 = vector.shape_cast %67 : vector<8xf32> to vector<8x1xf32>
    %cst_25 = arith.constant dense<0.000000e+00> : vector<8x8xf32>
    %69 = tpu.matmul %66, %60, %cst_25 {dimension_numbers = #tpu.dot_dimension_numbers<[1], [0], [0], [1], [0, 0, 1, 1], [], []>} : vector<8x8xf32>, vector<8x8xf32>, vector<8x8xf32> -> vector<8x8xf32>
    %70 = tpu.reciprocal %68 : vector<8x1xf32> -> vector<8x1xf32>
    %71 = vector.broadcast %70 : vector<8x1xf32> to vector<8x8xf32>
    %72 = arith.mulf %69, %71 : vector<8x8xf32>
    %73 = arith.index_cast %14 : i32 to index
    %c16_26 = arith.constant 16 : index
    %74 = vector.load %arg16[%73, %c16_26] : memref<16x32xf32, #tpu.memory_space<vmem>>, vector<8x8xf32>
    tpu.vector_store %arg16[%73, %c16_26], %72 {strides = array<i32>} : memref<16x32xf32, #tpu.memory_space<vmem>>, vector<8x8xf32>,
    %75 = arith.index_cast %14 : i32 to index
    %c24 = arith.constant 24 : index
    %76 = vector.load %arg15[%75, %c24] : memref<16x96xf32, #tpu.memory_space<vmem>>, vector<8x8xf32>
    %77 = arith.index_cast %14 : i32 to index
    %c56 = arith.constant 56 : index
    %78 = vector.load %arg15[%77, %c56] : memref<16x96xf32, #tpu.memory_space<vmem>>, vector<8x8xf32>
    %79 = arith.index_cast %14 : i32 to index
    %c88 = arith.constant 88 : index
    %80 = vector.load %arg15[%79, %c88] : memref<16x96xf32, #tpu.memory_space<vmem>>, vector<8x8xf32>
    %cst_27 = arith.constant dense<0.000000e+00> : vector<8x8xf32>
    %81 = tpu.matmul %76, %78, %cst_27 {dimension_numbers = #tpu.dot_dimension_numbers<[1], [1], [0], [0], [0, 0, 1, 0], [], []>} : vector<8x8xf32>, vector<8x8xf32>, vector<8x8xf32> -> vector<8x8xf32>
    %cst_28 = arith.constant dense<0xFF800000> : vector<8xf32>
    %82 = vector.multi_reduction <maximumf>, %81, %cst_28 [1] : vector<8x8xf32> to vector<8xf32>
    %83 = vector.shape_cast %82 : vector<8xf32> to vector<8x1xf32>
    %84 = vector.broadcast %83 : vector<8x1xf32> to vector<8x8xf32>
    %85 = arith.subf %81, %84 : vector<8x8xf32>
    %86 = math.exp %85 : vector<8x8xf32>
    %cst_29 = arith.constant dense<0.000000e+00> : vector<8xf32>
    %87 = vector.multi_reduction <add>, %86, %cst_29 [1] : vector<8x8xf32> to vector<8xf32>
    %88 = vector.shape_cast %87 : vector<8xf32> to vector<8x1xf32>
    %cst_30 = arith.constant dense<0.000000e+00> : vector<8x8xf32>
    %89 = tpu.matmul %86, %80, %cst_30 {dimension_numbers = #tpu.dot_dimension_numbers<[1], [0], [0], [1], [0, 0, 1, 1], [], []>} : vector<8x8xf32>, vector<8x8xf32>, vector<8x8xf32> -> vector<8x8xf32>
    %90 = tpu.reciprocal %88 : vector<8x1xf32> -> vector<8x1xf32>
    %91 = vector.broadcast %90 : vector<8x1xf32> to vector<8x8xf32>
    %92 = arith.mulf %89, %91 : vector<8x8xf32>
    %93 = arith.index_cast %14 : i32 to index
    %c24_31 = arith.constant 24 : index
    %94 = vector.load %arg16[%93, %c24_31] : memref<16x32xf32, #tpu.memory_space<vmem>>, vector<8x8xf32>
    tpu.vector_store %arg16[%93, %c24_31], %92 {strides = array<i32>} : memref<16x32xf32, #tpu.memory_space<vmem>>, vector<8x8xf32>,
    %c1_i32 = arith.constant 1 : i32
    %c8_i32_32 = arith.constant 8 : i32
    %95 = arith.muli %c1_i32, %c8_i32_32 : i32
    %96 = tpu.assume_multiple %95, 8 : i32
    %97 = arith.index_cast %96 : i32 to index
    %c0_33 = arith.constant 0 : index
    %98 = vector.load %arg15[%97, %c0_33] : memref<16x96xf32, #tpu.memory_space<vmem>>, vector<8x8xf32>
    %99 = arith.index_cast %96 : i32 to index
    %c32_34 = arith.constant 32 : index
    %100 = vector.load %arg15[%99, %c32_34] : memref<16x96xf32, #tpu.memory_space<vmem>>, vector<8x8xf32>
    %101 = arith.index_cast %96 : i32 to index
    %c64_35 = arith.constant 64 : index
    %102 = vector.load %arg15[%101, %c64_35] : memref<16x96xf32, #tpu.memory_space<vmem>>, vector<8x8xf32>
    %cst_36 = arith.constant dense<0.000000e+00> : vector<8x8xf32>
    %103 = tpu.matmul %98, %100, %cst_36 {dimension_numbers = #tpu.dot_dimension_numbers<[1], [1], [0], [0], [0, 0, 1, 0], [], []>} : vector<8x8xf32>, vector<8x8xf32>, vector<8x8xf32> -> vector<8x8xf32>
    %cst_37 = arith.constant dense<0xFF800000> : vector<8xf32>
    %104 = vector.multi_reduction <maximumf>, %103, %cst_37 [1] : vector<8x8xf32> to vector<8xf32>
    %105 = vector.shape_cast %104 : vector<8xf32> to vector<8x1xf32>
    %106 = vector.broadcast %105 : vector<8x1xf32> to vector<8x8xf32>
    %107 = arith.subf %103, %106 : vector<8x8xf32>
    %108 = math.exp %107 : vector<8x8xf32>
    %cst_38 = arith.constant dense<0.000000e+00> : vector<8xf32>
    %109 = vector.multi_reduction <add>, %108, %cst_38 [1] : vector<8x8xf32> to vector<8xf32>
    %110 = vector.shape_cast %109 : vector<8xf32> to vector<8x1xf32>
    %cst_39 = arith.constant dense<0.000000e+00> : vector<8x8xf32>
    %111 = tpu.matmul %108, %102, %cst_39 {dimension_numbers = #tpu.dot_dimension_numbers<[1], [0], [0], [1], [0, 0, 1, 1], [], []>} : vector<8x8xf32>, vector<8x8xf32>, vector<8x8xf32> -> vector<8x8xf32>
    %112 = tpu.reciprocal %110 : vector<8x1xf32> -> vector<8x1xf32>
    %113 = vector.broadcast %112 : vector<8x1xf32> to vector<8x8xf32>
    %114 = arith.mulf %111, %113 : vector<8x8xf32>
    %115 = arith.index_cast %96 : i32 to index
    %c0_40 = arith.constant 0 : index
    %116 = vector.load %arg16[%115, %c0_40] : memref<16x32xf32, #tpu.memory_space<vmem>>, vector<8x8xf32>
    tpu.vector_store %arg16[%115, %c0_40], %114 {strides = array<i32>} : memref<16x32xf32, #tpu.memory_space<vmem>>, vector<8x8xf32>,
    %117 = arith.index_cast %96 : i32 to index
    %c8_41 = arith.constant 8 : index
    %118 = vector.load %arg15[%117, %c8_41] : memref<16x96xf32, #tpu.memory_space<vmem>>, vector<8x8xf32>
    %119 = arith.index_cast %96 : i32 to index
    %c40_42 = arith.constant 40 : index
    %120 = vector.load %arg15[%119, %c40_42] : memref<16x96xf32, #tpu.memory_space<vmem>>, vector<8x8xf32>
    %121 = arith.index_cast %96 : i32 to index
    %c72_43 = arith.constant 72 : index
    %122 = vector.load %arg15[%121, %c72_43] : memref<16x96xf32, #tpu.memory_space<vmem>>, vector<8x8xf32>
    %cst_44 = arith.constant dense<0.000000e+00> : vector<8x8xf32>
    %123 = tpu.matmul %118, %120, %cst_44 {dimension_numbers = #tpu.dot_dimension_numbers<[1], [1], [0], [0], [0, 0, 1, 0], [], []>} : vector<8x8xf32>, vector<8x8xf32>, vector<8x8xf32> -> vector<8x8xf32>
    %cst_45 = arith.constant dense<0xFF800000> : vector<8xf32>
    %124 = vector.multi_reduction <maximumf>, %123, %cst_45 [1] : vector<8x8xf32> to vector<8xf32>
    %125 = vector.shape_cast %124 : vector<8xf32> to vector<8x1xf32>
    %126 = vector.broadcast %125 : vector<8x1xf32> to vector<8x8xf32>
    %127 = arith.subf %123, %126 : vector<8x8xf32>
    %128 = math.exp %127 : vector<8x8xf32>
    %cst_46 = arith.constant dense<0.000000e+00> : vector<8xf32>
    %129 = vector.multi_reduction <add>, %128, %cst_46 [1] : vector<8x8xf32> to vector<8xf32>
    %130 = vector.shape_cast %129 : vector<8xf32> to vector<8x1xf32>
    %cst_47 = arith.constant dense<0.000000e+00> : vector<8x8xf32>
    %131 = tpu.matmul %128, %122, %cst_47 {dimension_numbers = #tpu.dot_dimension_numbers<[1], [0], [0], [1], [0, 0, 1, 1], [], []>} : vector<8x8xf32>, vector<8x8xf32>, vector<8x8xf32> -> vector<8x8xf32>
    %132 = tpu.reciprocal %130 : vector<8x1xf32> -> vector<8x1xf32>
    %133 = vector.broadcast %132 : vector<8x1xf32> to vector<8x8xf32>
    %134 = arith.mulf %131, %133 : vector<8x8xf32>
    %135 = arith.index_cast %96 : i32 to index
    %c8_48 = arith.constant 8 : index
    %136 = vector.load %arg16[%135, %c8_48] : memref<16x32xf32, #tpu.memory_space<vmem>>, vector<8x8xf32>
    tpu.vector_store %arg16[%135, %c8_48], %134 {strides = array<i32>} : memref<16x32xf32, #tpu.memory_space<vmem>>, vector<8x8xf32>,
    %137 = arith.index_cast %96 : i32 to index
    %c16_49 = arith.constant 16 : index
    %138 = vector.load %arg15[%137, %c16_49] : memref<16x96xf32, #tpu.memory_space<vmem>>, vector<8x8xf32>
    %139 = arith.index_cast %96 : i32 to index
    %c48_50 = arith.constant 48 : index
    %140 = vector.load %arg15[%139, %c48_50] : memref<16x96xf32, #tpu.memory_space<vmem>>, vector<8x8xf32>
    %141 = arith.index_cast %96 : i32 to index
    %c80_51 = arith.constant 80 : index
    %142 = vector.load %arg15[%141, %c80_51] : memref<16x96xf32, #tpu.memory_space<vmem>>, vector<8x8xf32>
    %cst_52 = arith.constant dense<0.000000e+00> : vector<8x8xf32>
    %143 = tpu.matmul %138, %140, %cst_52 {dimension_numbers = #tpu.dot_dimension_numbers<[1], [1], [0], [0], [0, 0, 1, 0], [], []>} : vector<8x8xf32>, vector<8x8xf32>, vector<8x8xf32> -> vector<8x8xf32>
    %cst_53 = arith.constant dense<0xFF800000> : vector<8xf32>
    %144 = vector.multi_reduction <maximumf>, %143, %cst_53 [1] : vector<8x8xf32> to vector<8xf32>
    %145 = vector.shape_cast %144 : vector<8xf32> to vector<8x1xf32>
    %146 = vector.broadcast %145 : vector<8x1xf32> to vector<8x8xf32>
    %147 = arith.subf %143, %146 : vector<8x8xf32>
    %148 = math.exp %147 : vector<8x8xf32>
    %cst_54 = arith.constant dense<0.000000e+00> : vector<8xf32>
    %149 = vector.multi_reduction <add>, %148, %cst_54 [1] : vector<8x8xf32> to vector<8xf32>
    %150 = vector.shape_cast %149 : vector<8xf32> to vector<8x1xf32>
    %cst_55 = arith.constant dense<0.000000e+00> : vector<8x8xf32>
    %151 = tpu.matmul %148, %142, %cst_55 {dimension_numbers = #tpu.dot_dimension_numbers<[1], [0], [0], [1], [0, 0, 1, 1], [], []>} : vector<8x8xf32>, vector<8x8xf32>, vector<8x8xf32> -> vector<8x8xf32>
    %152 = tpu.reciprocal %150 : vector<8x1xf32> -> vector<8x1xf32>
    %153 = vector.broadcast %152 : vector<8x1xf32> to vector<8x8xf32>
    %154 = arith.mulf %151, %153 : vector<8x8xf32>
    %155 = arith.index_cast %96 : i32 to index
    %c16_56 = arith.constant 16 : index
    %156 = vector.load %arg16[%155, %c16_56] : memref<16x32xf32, #tpu.memory_space<vmem>>, vector<8x8xf32>
    tpu.vector_store %arg16[%155, %c16_56], %154 {strides = array<i32>} : memref<16x32xf32, #tpu.memory_space<vmem>>, vector<8x8xf32>,
    %157 = arith.index_cast %96 : i32 to index
    %c24_57 = arith.constant 24 : index
    %158 = vector.load %arg15[%157, %c24_57] : memref<16x96xf32, #tpu.memory_space<vmem>>, vector<8x8xf32>
    %159 = arith.index_cast %96 : i32 to index
    %c56_58 = arith.constant 56 : index
    %160 = vector.load %arg15[%159, %c56_58] : memref<16x96xf32, #tpu.memory_space<vmem>>, vector<8x8xf32>
    %161 = arith.index_cast %96 : i32 to index
    %c88_59 = arith.constant 88 : index
    %162 = vector.load %arg15[%161, %c88_59] : memref<16x96xf32, #tpu.memory_space<vmem>>, vector<8x8xf32>
    %cst_60 = arith.constant dense<0.000000e+00> : vector<8x8xf32>
    %163 = tpu.matmul %158, %160, %cst_60 {dimension_numbers = #tpu.dot_dimension_numbers<[1], [1], [0], [0], [0, 0, 1, 0], [], []>} : vector<8x8xf32>, vector<8x8xf32>, vector<8x8xf32> -> vector<8x8xf32>
    %cst_61 = arith.constant dense<0xFF800000> : vector<8xf32>
    %164 = vector.multi_reduction <maximumf>, %163, %cst_61 [1] : vector<8x8xf32> to vector<8xf32>
    %165 = vector.shape_cast %164 : vector<8xf32> to vector<8x1xf32>
    %166 = vector.broadcast %165 : vector<8x1xf32> to vector<8x8xf32>
    %167 = arith.subf %163, %166 : vector<8x8xf32>
    %168 = math.exp %167 : vector<8x8xf32>
    %cst_62 = arith.constant dense<0.000000e+00> : vector<8xf32>
    %169 = vector.multi_reduction <add>, %168, %cst_62 [1] : vector<8x8xf32> to vector<8xf32>
    %170 = vector.shape_cast %169 : vector<8xf32> to vector<8x1xf32>
    %cst_63 = arith.constant dense<0.000000e+00> : vector<8x8xf32>
    %171 = tpu.matmul %168, %162, %cst_63 {dimension_numbers = #tpu.dot_dimension_numbers<[1], [0], [0], [1], [0, 0, 1, 1], [], []>} : vector<8x8xf32>, vector<8x8xf32>, vector<8x8xf32> -> vector<8x8xf32>
    %172 = tpu.reciprocal %170 : vector<8x1xf32> -> vector<8x1xf32>
    %173 = vector.broadcast %172 : vector<8x1xf32> to vector<8x8xf32>
    %174 = arith.mulf %171, %173 : vector<8x8xf32>
    %175 = arith.index_cast %96 : i32 to index
    %c24_64 = arith.constant 24 : index
    %176 = vector.load %arg16[%175, %c24_64] : memref<16x32xf32, #tpu.memory_space<vmem>>, vector<8x8xf32>
    tpu.vector_store %arg16[%175, %c24_64], %174 {strides = array<i32>} : memref<16x32xf32, #tpu.memory_space<vmem>>, vector<8x8xf32>,
    %c2_i32 = arith.constant 2 : i32
    %c0_65 = arith.constant 0 : index
    %c0_66 = arith.constant 0 : index
    %177 = vector.load %arg16[%c0_65, %c0_66] : memref<16x32xf32, #tpu.memory_space<vmem>>, vector<16x32xf32>
    %c0_67 = arith.constant 0 : index
    %c0_68 = arith.constant 0 : index
    %178 = vector.load %arg4[%c0_67, %c0_68] : memref<32x32xf32, #tpu.memory_space<vmem>>, vector<32x32xf32>
    %cst_69 = arith.constant dense<0.000000e+00> : vector<16x32xf32>
    %179 = tpu.matmul %177, %178, %cst_69 {dimension_numbers = #tpu.dot_dimension_numbers<[1], [0], [0], [1], [0, 0, 1, 1], [], []>} : vector<16x32xf32>, vector<32x32xf32>, vector<16x32xf32> -> vector<16x32xf32>
    %c0_70 = arith.constant 0 : index
    %c0_71 = arith.constant 0 : index
    %180 = vector.load %arg5[%c0_70, %c0_71] : memref<1x32xf32, #tpu.memory_space<vmem>>, vector<1x32xf32>
    %181 = vector.broadcast %180 : vector<1x32xf32> to vector<16x32xf32>
    %182 = arith.addf %179, %181 : vector<16x32xf32>
    %183 = arith.addf %1, %182 : vector<16x32xf32>
    %c0_72 = arith.constant 0 : index
    %c0_73 = arith.constant 0 : index
    %184 = vector.load %arg10[%c0_72, %c0_73] : memref<1x32xf32, #tpu.memory_space<vmem>>, vector<1x32xf32>
    %c0_74 = arith.constant 0 : index
    %c0_75 = arith.constant 0 : index
    %185 = vector.load %arg11[%c0_74, %c0_75] : memref<1x32xf32, #tpu.memory_space<vmem>>, vector<1x32xf32>
    %cst_76 = arith.constant dense<0.000000e+00> : vector<16xf32>
    %186 = vector.multi_reduction <add>, %183, %cst_76 [1] : vector<16x32xf32> to vector<16xf32>
    %187 = vector.shape_cast %186 : vector<16xf32> to vector<16x1xf32>
    %cst_77 = arith.constant 3.200000e+01 : f32
    %188 = vector.broadcast %cst_77 : f32 to vector<16x1xf32>
    %189 = arith.divf %187, %188 : vector<16x1xf32>
    %190 = vector.broadcast %189 : vector<16x1xf32> to vector<16x32xf32>
    %191 = arith.subf %183, %190 : vector<16x32xf32>
    %192 = arith.mulf %191, %191 : vector<16x32xf32>
    %cst_78 = arith.constant dense<0.000000e+00> : vector<16xf32>
    %193 = vector.multi_reduction <add>, %192, %cst_78 [1] : vector<16x32xf32> to vector<16xf32>
    %194 = vector.shape_cast %193 : vector<16xf32> to vector<16x1xf32>
    %cst_79 = arith.constant 3.200000e+01 : f32
    %195 = vector.broadcast %cst_79 : f32 to vector<16x1xf32>
    %196 = arith.divf %194, %195 : vector<16x1xf32>
    %197 = vector.broadcast %189 : vector<16x1xf32> to vector<16x32xf32>
    %198 = arith.subf %183, %197 : vector<16x32xf32>
    %cst_80 = arith.constant 9.99999974E-6 : f32
    %199 = vector.broadcast %cst_80 : f32 to vector<16x1xf32>
    %200 = arith.addf %196, %199 : vector<16x1xf32>
    %201 = math.rsqrt %200 : vector<16x1xf32>
    %202 = vector.broadcast %201 : vector<16x1xf32> to vector<16x32xf32>
    %203 = arith.mulf %198, %202 : vector<16x32xf32>
    %204 = vector.broadcast %184 : vector<1x32xf32> to vector<16x32xf32>
    %205 = arith.mulf %203, %204 : vector<16x32xf32>
    %206 = vector.broadcast %185 : vector<1x32xf32> to vector<16x32xf32>
    %207 = arith.addf %205, %206 : vector<16x32xf32>
    %cst_81 = arith.constant 0.000000e+00 : f32
    %208 = vector.broadcast %cst_81 : f32 to vector<16x32xf32>
    %c0_82 = arith.constant 0 : index
    %c0_83 = arith.constant 0 : index
    %209 = vector.load %arg6[%c0_82, %c0_83] : memref<32x64xf32, #tpu.memory_space<vmem>>, vector<32x64xf32>
    %cst_84 = arith.constant dense<0.000000e+00> : vector<16x64xf32>
    %210 = tpu.matmul %207, %209, %cst_84 {dimension_numbers = #tpu.dot_dimension_numbers<[1], [0], [0], [1], [0, 0, 1, 1], [], []>} : vector<16x32xf32>, vector<32x64xf32>, vector<16x64xf32> -> vector<16x64xf32>
    %c0_85 = arith.constant 0 : index
    %c0_86 = arith.constant 0 : index
    %211 = vector.load %arg7[%c0_85, %c0_86] : memref<1x64xf32, #tpu.memory_space<vmem>>, vector<1x64xf32>
    %212 = vector.broadcast %211 : vector<1x64xf32> to vector<16x64xf32>
    %213 = arith.addf %210, %212 : vector<16x64xf32>
    %cst_87 = arith.constant 0.000000e+00 : f32
    %214 = vector.broadcast %cst_87 : f32 to vector<16x64xf32>
    %215 = arith.maximumf %213, %214 : vector<16x64xf32>
    %c0_88 = arith.constant 0 : index
    %c0_89 = arith.constant 0 : index
    %216 = vector.load %arg8[%c0_88, %c0_89] : memref<64x32xf32, #tpu.memory_space<vmem>>, vector<64x32xf32>
    %cst_90 = arith.constant dense<0.000000e+00> : vector<16x32xf32>
    %217 = tpu.matmul %215, %216, %cst_90 {dimension_numbers = #tpu.dot_dimension_numbers<[1], [0], [0], [1], [0, 0, 1, 1], [], []>} : vector<16x64xf32>, vector<64x32xf32>, vector<16x32xf32> -> vector<16x32xf32>
    %218 = arith.addf %208, %217 : vector<16x32xf32>
    %c0_91 = arith.constant 0 : index
    %c0_92 = arith.constant 0 : index
    %219 = vector.load %arg9[%c0_91, %c0_92] : memref<1x32xf32, #tpu.memory_space<vmem>>, vector<1x32xf32>
    %220 = vector.broadcast %219 : vector<1x32xf32> to vector<16x32xf32>
    %221 = arith.addf %218, %220 : vector<16x32xf32>
    %222 = arith.addf %207, %221 : vector<16x32xf32>
    %c0_93 = arith.constant 0 : index
    %c0_94 = arith.constant 0 : index
    %223 = vector.load %arg12[%c0_93, %c0_94] : memref<1x32xf32, #tpu.memory_space<vmem>>, vector<1x32xf32>
    %c0_95 = arith.constant 0 : index
    %c0_96 = arith.constant 0 : index
    %224 = vector.load %arg13[%c0_95, %c0_96] : memref<1x32xf32, #tpu.memory_space<vmem>>, vector<1x32xf32>
    %cst_97 = arith.constant dense<0.000000e+00> : vector<16xf32>
    %225 = vector.multi_reduction <add>, %222, %cst_97 [1] : vector<16x32xf32> to vector<16xf32>
    %226 = vector.shape_cast %225 : vector<16xf32> to vector<16x1xf32>
    %cst_98 = arith.constant 3.200000e+01 : f32
    %227 = vector.broadcast %cst_98 : f32 to vector<16x1xf32>
    %228 = arith.divf %226, %227 : vector<16x1xf32>
    %229 = vector.broadcast %228 : vector<16x1xf32> to vector<16x32xf32>
    %230 = arith.subf %222, %229 : vector<16x32xf32>
    %231 = arith.mulf %230, %230 : vector<16x32xf32>
    %cst_99 = arith.constant dense<0.000000e+00> : vector<16xf32>
    %232 = vector.multi_reduction <add>, %231, %cst_99 [1] : vector<16x32xf32> to vector<16xf32>
    %233 = vector.shape_cast %232 : vector<16xf32> to vector<16x1xf32>
    %cst_100 = arith.constant 3.200000e+01 : f32
    %234 = vector.broadcast %cst_100 : f32 to vector<16x1xf32>
    %235 = arith.divf %233, %234 : vector<16x1xf32>
    %236 = vector.broadcast %228 : vector<16x1xf32> to vector<16x32xf32>
    %237 = arith.subf %222, %236 : vector<16x32xf32>
    %cst_101 = arith.constant 9.99999974E-6 : f32
    %238 = vector.broadcast %cst_101 : f32 to vector<16x1xf32>
    %239 = arith.addf %235, %238 : vector<16x1xf32>
    %240 = math.rsqrt %239 : vector<16x1xf32>
    %241 = vector.broadcast %240 : vector<16x1xf32> to vector<16x32xf32>
    %242 = arith.mulf %237, %241 : vector<16x32xf32>
    %243 = vector.broadcast %223 : vector<1x32xf32> to vector<16x32xf32>
    %244 = arith.mulf %242, %243 : vector<16x32xf32>
    %245 = vector.broadcast %224 : vector<1x32xf32> to vector<16x32xf32>
    %246 = arith.addf %244, %245 : vector<16x32xf32>
    %247 = vector.shape_cast %246 : vector<16x32xf32> to vector<2x8x32xf32>
    %c0_102 = arith.constant 0 : index
    %c0_103 = arith.constant 0 : index
    %c0_104 = arith.constant 0 : index
    %248 = vector.load %arg14[%c0_102, %c0_103, %c0_104] : memref<2x8x32xf32, #tpu.memory_space<vmem>>, vector<2x8x32xf32>
    tpu.vector_store %arg14[%c0_102, %c0_103, %c0_104], %247 {strides = array<i32>} : memref<2x8x32xf32, #tpu.memory_space<vmem>>, vector<2x8x32xf32>,
    return
  }
  func.func @transform_0(%arg0: i32) -> (i32, i32, i32) {
    %c0_i32 = arith.constant 0 : i32
    %c0_i32_0 = arith.constant 0 : i32
    %c0_i32_1 = arith.constant 0 : i32
    return %arg0, %c0_i32, %c0_i32_0 : i32, i32, i32
  }
  func.func @transform_1(%arg0: i32) -> (i32, i32) {
    %c0_i32 = arith.constant 0 : i32
    %c0_i32_0 = arith.constant 0 : i32
    %c0_i32_1 = arith.constant 0 : i32
    return %c0_i32, %c0_i32_0 : i32, i32
  }
  func.func @transform_2(%arg0: i32) -> (i32, i32) {
    %c0_i32 = arith.constant 0 : i32
    %c0_i32_0 = arith.constant 0 : i32
    %c0_i32_1 = arith.constant 0 : i32
    return %c0_i32, %c0_i32_0 : i32, i32
  }
  func.func @transform_3(%arg0: i32) -> (i32, i32) {
    %c0_i32 = arith.constant 0 : i32
    %c0_i32_0 = arith.constant 0 : i32
    %c0_i32_1 = arith.constant 0 : i32
    return %c0_i32, %c0_i32_0 : i32, i32
  }
  func.func @transform_4(%arg0: i32) -> (i32, i32) {
    %c0_i32 = arith.constant 0 : i32
    %c0_i32_0 = arith.constant 0 : i32
    %c0_i32_1 = arith.constant 0 : i32
    return %c0_i32, %c0_i32_0 : i32, i32
  }
  func.func @transform_5(%arg0: i32) -> (i32, i32) {
    %c0_i32 = arith.constant 0 : i32
    %c0_i32_0 = arith.constant 0 : i32
    %c0_i32_1 = arith.constant 0 : i32
    return %c0_i32, %c0_i32_0 : i32, i32
  }
  func.func @transform_6(%arg0: i32) -> (i32, i32) {
    %c0_i32 = arith.constant 0 : i32
    %c0_i32_0 = arith.constant 0 : i32
    %c0_i32_1 = arith.constant 0 : i32
    return %c0_i32, %c0_i32_0 : i32, i32
  }
  func.func @transform_7(%arg0: i32) -> (i32, i32) {
    %c0_i32 = arith.constant 0 : i32
    %c0_i32_0 = arith.constant 0 : i32
    %c0_i32_1 = arith.constant 0 : i32
    return %c0_i32, %c0_i32_0 : i32, i32
  }
  func.func @transform_8(%arg0: i32) -> (i32, i32) {
    %c0_i32 = arith.constant 0 : i32
    %c0_i32_0 = arith.constant 0 : i32
    %c0_i32_1 = arith.constant 0 : i32
    return %c0_i32, %c0_i32_0 : i32, i32
  }
  func.func @transform_9(%arg0: i32) -> (i32, i32) {
    %c0_i32 = arith.constant 0 : i32
    %c0_i32_0 = arith.constant 0 : i32
    %c0_i32_1 = arith.constant 0 : i32
    return %c0_i32, %c0_i32_0 : i32, i32
  }
  func.func @transform_10(%arg0: i32) -> (i32, i32) {
    %c0_i32 = arith.constant 0 : i32
    %c0_i32_0 = arith.constant 0 : i32
    %c0_i32_1 = arith.constant 0 : i32
    return %c0_i32, %c0_i32_0 : i32, i32
  }
  func.func @transform_11(%arg0: i32) -> (i32, i32) {
    %c0_i32 = arith.constant 0 : i32
    %c0_i32_0 = arith.constant 0 : i32
    %c0_i32_1 = arith.constant 0 : i32
    return %c0_i32, %c0_i32_0 : i32, i32
  }
  func.func @transform_12(%arg0: i32) -> (i32, i32) {
    %c0_i32 = arith.constant 0 : i32
    %c0_i32_0 = arith.constant 0 : i32
    %c0_i32_1 = arith.constant 0 : i32
    return %c0_i32, %c0_i32_0 : i32, i32
  }
  func.func @transform_13(%arg0: i32) -> (i32, i32, i32) {
    %c0_i32 = arith.constant 0 : i32
    %c0_i32_0 = arith.constant 0 : i32
    %c0_i32_1 = arith.constant 0 : i32
    return %arg0, %c0_i32, %c0_i32_0 : i32, i32, i32
  }
}

module attributes {stable_mosaic.version = 11 : i64} {
  func.func @transformer_block_kernel(%arg0: i32, %arg1: memref<2x8x32xf32, #tpu.memory_space<vmem>>, %arg2: memref<32x96xf32, #tpu.memory_space<vmem>>, %arg3: memref<1x96xf32, #tpu.memory_space<vmem>>, %arg4: memref<32x32xf32, #tpu.memory_space<vmem>>, %arg5: memref<1x32xf32, #tpu.memory_space<vmem>>, %arg6: memref<32x64xf32, #tpu.memory_space<vmem>>, %arg7: memref<1x64xf32, #tpu.memory_space<vmem>>, %arg8: memref<64x32xf32, #tpu.memory_space<vmem>>, %arg9: memref<1x32xf32, #tpu.memory_space<vmem>>, %arg10: memref<1x32xf32, #tpu.memory_space<vmem>>, %arg11: memref<1x32xf32, #tpu.memory_space<vmem>>, %arg12: memref<1x32xf32, #tpu.memory_space<vmem>>, %arg13: memref<1x32xf32, #tpu.memory_space<vmem>>, %arg14: memref<2x8x32xf32, #tpu.memory_space<vmem>>, %arg15: memref<16x96xf32, #tpu.memory_space<vmem>>, %arg16: memref<16x32xf32, #tpu.memory_space<vmem>>) attributes {dimension_semantics = [#tpu.dimension_semantics<parallel>], iteration_bounds = array<i64: 2>, scalar_prefetch = 0 : i64, scratch_operands = 2 : i64, tpu.core_type = #tpu.core_type<tc>, window_params = [{transform_indices = @transform_0, window_bounds = array<i64: 2, 8, 32>}, {pipeline_mode = #tpu.pipeline_mode<synchronous>, transform_indices = @transform_1, window_bounds = array<i64: 32, 96>}, {pipeline_mode = #tpu.pipeline_mode<synchronous>, transform_indices = @transform_2, window_bounds = array<i64: 1, 96>}, {pipeline_mode = #tpu.pipeline_mode<synchronous>, transform_indices = @transform_3, window_bounds = array<i64: 32, 32>}, {pipeline_mode = #tpu.pipeline_mode<synchronous>, transform_indices = @transform_4, window_bounds = array<i64: 1, 32>}, {pipeline_mode = #tpu.pipeline_mode<synchronous>, transform_indices = @transform_5, window_bounds = array<i64: 32, 64>}, {pipeline_mode = #tpu.pipeline_mode<synchronous>, transform_indices = @transform_6, window_bounds = array<i64: 1, 64>}, {pipeline_mode = #tpu.pipeline_mode<synchronous>, transform_indices = @transform_7, window_bounds = array<i64: 64, 32>}, {pipeline_mode = #tpu.pipeline_mode<synchronous>, transform_indices = @transform_8, window_bounds = array<i64: 1, 32>}, {pipeline_mode = #tpu.pipeline_mode<synchronous>, transform_indices = @transform_9, window_bounds = array<i64: 1, 32>}, {pipeline_mode = #tpu.pipeline_mode<synchronous>, transform_indices = @transform_10, window_bounds = array<i64: 1, 32>}, {pipeline_mode = #tpu.pipeline_mode<synchronous>, transform_indices = @transform_11, window_bounds = array<i64: 1, 32>}, {pipeline_mode = #tpu.pipeline_mode<synchronous>, transform_indices = @transform_12, window_bounds = array<i64: 1, 32>}, {transform_indices = @transform_13, window_bounds = array<i64: 2, 8, 32>}]} {
    %c0 = arith.constant 0 : index
    %c0_0 = arith.constant 0 : index
    %c0_1 = arith.constant 0 : index
    %0 = vector.load %arg1[%c0, %c0_0, %c0_1] : memref<2x8x32xf32, #tpu.memory_space<vmem>>, vector<2x8x32xf32>
    %1 = vector.shape_cast %0 : vector<2x8x32xf32> to vector<16x32xf32>
    %c0_2 = arith.constant 0 : index
    %c0_3 = arith.constant 0 : index
    %2 = vector.load %arg2[%c0_2, %c0_3] : memref<32x96xf32, #tpu.memory_space<vmem>>, vector<32x96xf32>
    %cst = arith.constant dense<0.000000e+00> : vector<16x96xf32>
    %3 = tpu.matmul %1, %2, %cst {dimension_numbers = #tpu.dot_dimension_numbers<[1], [0], [0], [1], [0, 0, 1, 1], [], []>} : vector<16x32xf32>, vector<32x96xf32>, vector<16x96xf32> -> vector<16x96xf32>
    %c0_4 = arith.constant 0 : index
    %c0_5 = arith.constant 0 : index
    %4 = vector.load %arg3[%c0_4, %c0_5] : memref<1x96xf32, #tpu.memory_space<vmem>>, vector<1x96xf32>
    %5 = vector.broadcast %4 : vector<1x96xf32> to vector<16x96xf32>
    %6 = arith.addf %3, %5 : vector<16x96xf32>
    %7 = vector.extract_strided_slice %6 {offsets = [0, 0], sizes = [16, 32], strides = [1, 1]} : vector<16x96xf32> to vector<16x32xf32>
    %cst_6 = arith.constant 0.353553385 : f32
    %8 = vector.broadcast %cst_6 : f32 to vector<16x32xf32>
    %9 = arith.mulf %7, %8 : vector<16x32xf32>
    %c0_7 = arith.constant 0 : index
    %c0_8 = arith.constant 0 : index
    %10 = vector.load %arg15[%c0_7, %c0_8] : memref<16x96xf32, #tpu.memory_space<vmem>>, vector<16x32xf32>
    tpu.vector_store %arg15[%c0_7, %c0_8], %9 {strides = array<i32>} : memref<16x96xf32, #tpu.memory_space<vmem>>, vector<16x32xf32>,
    %11 = vector.extract_strided_slice %6 {offsets = [0, 32], sizes = [16, 64], strides = [1, 1]} : vector<16x96xf32> to vector<16x64xf32>
    %c0_9 = arith.constant 0 : index
    %c32 = arith.constant 32 : index
    %12 = vector.load %arg15[%c0_9, %c32] : memref<16x96xf32, #tpu.memory_space<vmem>>, vector<16x64xf32>
    tpu.vector_store %arg15[%c0_9, %c32], %11 {strides = array<i32>} : memref<16x96xf32, #tpu.memory_space<vmem>>, vector<16x64xf32>,
    %c0_i32 = arith.constant 0 : i32
    %c8_i32 = arith.constant 8 : i32
    %13 = arith.muli %c0_i32, %c8_i32 : i32
    %14 = tpu.assume_multiple %13, 8 : i32
    %15 = arith.index_cast %14 : i32 to index
    %c0_10 = arith.constant 0 : index
    %16 = vector.load %arg15[%15, %c0_10] : memref<16x96xf32, #tpu.memory_space<vmem>>, vector<8x8xf32>
    %17 = arith.index_cast %14 : i32 to index
    %c32_11 = arith.constant 32 : index
    %18 = vector.load %arg15[%17, %c32_11] : memref<16x96xf32, #tpu.memory_space<vmem>>, vector<8x8xf32>
    %19 = arith.index_cast %14 : i32 to index
    %c64 = arith.constant 64 : index
    %20 = vector.load %arg15[%19, %c64] : memref<16x96xf32, #tpu.memory_space<vmem>>, vector<8x8xf32>
    %cst_12 = arith.constant dense<0.000000e+00> : vector<8x8xf32>
    %21 = tpu.matmul %16, %18, %cst_12 {dimension_numbers = #tpu.dot_dimension_numbers<[1], [1], [0], [0], [0, 0, 1, 0], [], []>} : vector<8x8xf32>, vector<8x8xf32>, vector<8x8xf32> -> vector<8x8xf32>
    %cst_13 = arith.constant dense<0xFF800000> : vector<8xf32>
    %22 = vector.multi_reduction <maximumf>, %21, %cst_13 [1] : vector<8x8xf32> to vector<8xf32>
    %23 = vector.shape_cast %22 : vector<8xf32> to vector<8x1xf32>
    %24 = vector.broadcast %23 : vector<8x1xf32> to vector<8x8xf32>
    %25 = arith.subf %21, %24 : vector<8x8xf32>
    %26 = math.exp %25 : vector<8x8xf32>
    %cst_14 = arith.constant dense<0.000000e+00> : vector<8xf32>
    %27 = vector.multi_reduction <add>, %26, %cst_14 [1] : vector<8x8xf32> to vector<8xf32>
    %28 = vector.shape_cast %27 : vector<8xf32> to vector<8x1xf32>
    %cst_15 = arith.constant dense<0.000000e+00> : vector<8x8xf32>
    %29 = tpu.matmul %26, %20, %cst_15 {dimension_numbers = #tpu.dot_dimension_numbers<[1], [0], [0], [1], [0, 0, 1, 1], [], []>} : vector<8x8xf32>, vector<8x8xf32>, vector<8x8xf32> -> vector<8x8xf32>
    %30 = tpu.reciprocal %28 : vector<8x1xf32> -> vector<8x1xf32>
    %31 = vector.broadcast %30 : vector<8x1xf32> to vector<8x8xf32>
    %32 = arith.mulf %29, %31 : vector<8x8xf32>
    %33 = arith.index_cast %14 : i32 to index
    %c0_16 = arith.constant 0 : index
    %34 = vector.load %arg16[%33, %c0_16] : memref<16x32xf32, #tpu.memory_space<vmem>>, vector<8x8xf32>
    tpu.vector_store %arg16[%33, %c0_16], %32 {strides = array<i32>} : memref<16x32xf32, #tpu.memory_space<vmem>>, vector<8x8xf32>,
    %35 = arith.index_cast %14 : i32 to index
    %c8 = arith.constant 8 : index
    %36 = vector.load %arg15[%35, %c8] : memref<16x96xf32, #tpu.memory_space<vmem>>, vector<8x8xf32>
    %37 = arith.index_cast %14 : i32 to index
    %c40 = arith.constant 40 : index
    %38 = vector.load %arg15[%37, %c40] : memref<16x96xf32, #tpu.memory_space<vmem>>, vector<8x8xf32>
    %39 = arith.index_cast %14 : i32 to index
    %c72 = arith.constant 72 : index
    %40 = vector.load %arg15[%39, %c72] : memref<16x96xf32, #tpu.memory_space<vmem>>, vector<8x8xf32>
    %cst_17 = arith.constant dense<0.000000e+00> : vector<8x8xf32>
    %41 = tpu.matmul %36, %38, %cst_17 {dimension_numbers = #tpu.dot_dimension_numbers<[1], [1], [0], [0], [0, 0, 1, 0], [], []>} : vector<8x8xf32>, vector<8x8xf32>, vector<8x8xf32> -> vector<8x8xf32>
    %cst_18 = arith.constant dense<0xFF800000> : vector<8xf32>
    %42 = vector.multi_reduction <maximumf>, %41, %cst_18 [1] : vector<8x8xf32> to vector<8xf32>
    %43 = vector.shape_cast %42 : vector<8xf32> to vector<8x1xf32>
    %44 = vector.broadcast %43 : vector<8x1xf32> to vector<8x8xf32>
    %45 = arith.subf %41, %44 : vector<8x8xf32>
    %46 = math.exp %45 : vector<8x8xf32>
    %cst_19 = arith.constant dense<0.000000e+00> : vector<8xf32>
    %47 = vector.multi_reduction <add>, %46, %cst_19 [1] : vector<8x8xf32> to vector<8xf32>
    %48 = vector.shape_cast %47 : vector<8xf32> to vector<8x1xf32>
    %cst_20 = arith.constant dense<0.000000e+00> : vector<8x8xf32>
    %49 = tpu.matmul %46, %40, %cst_20 {dimension_numbers = #tpu.dot_dimension_numbers<[1], [0], [0], [1], [0, 0, 1, 1], [], []>} : vector<8x8xf32>, vector<8x8xf32>, vector<8x8xf32> -> vector<8x8xf32>
    %50 = tpu.reciprocal %48 : vector<8x1xf32> -> vector<8x1xf32>
    %51 = vector.broadcast %50 : vector<8x1xf32> to vector<8x8xf32>
    %52 = arith.mulf %49, %51 : vector<8x8xf32>
    %53 = arith.index_cast %14 : i32 to index
    %c8_21 = arith.constant 8 : index
    %54 = vector.load %arg16[%53, %c8_21] : memref<16x32xf32, #tpu.memory_space<vmem>>, vector<8x8xf32>
    tpu.vector_store %arg16[%53, %c8_21], %52 {strides = array<i32>} : memref<16x32xf32, #tpu.memory_space<vmem>>, vector<8x8xf32>,
    %55 = arith.index_cast %14 : i32 to index
    %c16 = arith.constant 16 : index
    %56 = vector.load %arg15[%55, %c16] : memref<16x96xf32, #tpu.memory_space<vmem>>, vector<8x8xf32>
    %57 = arith.index_cast %14 : i32 to index
    %c48 = arith.constant 48 : index
    %58 = vector.load %arg15[%57, %c48] : memref<16x96xf32, #tpu.memory_space<vmem>>, vector<8x8xf32>
    %59 = arith.index_cast %14 : i32 to index
    %c80 = arith.constant 80 : index
    %60 = vector.load %arg15[%59, %c80] : memref<16x96xf32, #tpu.memory_space<vmem>>, vector<8x8xf32>
    %cst_22 = arith.constant dense<0.000000e+00> : vector<8x8xf32>
    %61 = tpu.matmul %56, %58, %cst_22 {dimension_numbers = #tpu.dot_dimension_numbers<[1], [1], [0], [0], [0, 0, 1, 0], [], []>} : vector<8x8xf32>, vector<8x8xf32>, vector<8x8xf32> -> vector<8x8xf32>
    %cst_23 = arith.constant dense<0xFF800000> : vector<8xf32>
    %62 = vector.multi_reduction <maximumf>, %61, %cst_23 [1] : vector<8x8xf32> to vector<8xf32>
    %63 = vector.shape_cast %62 : vector<8xf32> to vector<8x1xf32>
    %64 = vector.broadcast %63 : vector<8x1xf32> to vector<8x8xf32>
    %65 = arith.subf %61, %64 : vector<8x8xf32>
    %66 = math.exp %65 : vector<8x8xf32>
    %cst_24 = arith.constant dense<0.000000e+00> : vector<8xf32>
    %67 = vector.multi_reduction <add>, %66, %cst_24 [1] : vector<8x8xf32> to vector<8xf32>
    %68 = vector.shape_cast %67 : vector<8xf32> to vector<8x1xf32>
    %cst_25 = arith.constant dense<0.000000e+00> : vector<8x8xf32>
    %69 = tpu.matmul %66, %60, %cst_25 {dimension_numbers = #tpu.dot_dimension_numbers<[1], [0], [0], [1], [0, 0, 1, 1], [], []>} : vector<8x8xf32>, vector<8x8xf32>, vector<8x8xf32> -> vector<8x8xf32>
    %70 = tpu.reciprocal %68 : vector<8x1xf32> -> vector<8x1xf32>
    %71 = vector.broadcast %70 : vector<8x1xf32> to vector<8x8xf32>
    %72 = arith.mulf %69, %71 : vector<8x8xf32>
    %73 = arith.index_cast %14 : i32 to index
    %c16_26 = arith.constant 16 : index
    %74 = vector.load %arg16[%73, %c16_26] : memref<16x32xf32, #tpu.memory_space<vmem>>, vector<8x8xf32>
    tpu.vector_store %arg16[%73, %c16_26], %72 {strides = array<i32>} : memref<16x32xf32, #tpu.memory_space<vmem>>, vector<8x8xf32>,
    %75 = arith.index_cast %14 : i32 to index
    %c24 = arith.constant 24 : index
    %76 = vector.load %arg15[%75, %c24] : memref<16x96xf32, #tpu.memory_space<vmem>>, vector<8x8xf32>
    %77 = arith.index_cast %14 : i32 to index
    %c56 = arith.constant 56 : index
    %78 = vector.load %arg15[%77, %c56] : memref<16x96xf32, #tpu.memory_space<vmem>>, vector<8x8xf32>
    %79 = arith.index_cast %14 : i32 to index
    %c88 = arith.constant 88 : index
    %80 = vector.load %arg15[%79, %c88] : memref<16x96xf32, #tpu.memory_space<vmem>>, vector<8x8xf32>
    %cst_27 = arith.constant dense<0.000000e+00> : vector<8x8xf32>
    %81 = tpu.matmul %76, %78, %cst_27 {dimension_numbers = #tpu.dot_dimension_numbers<[1], [1], [0], [0], [0, 0, 1, 0], [], []>} : vector<8x8xf32>, vector<8x8xf32>, vector<8x8xf32> -> vector<8x8xf32>
    %cst_28 = arith.constant dense<0xFF800000> : vector<8xf32>
    %82 = vector.multi_reduction <maximumf>, %81, %cst_28 [1] : vector<8x8xf32> to vector<8xf32>
    %83 = vector.shape_cast %82 : vector<8xf32> to vector<8x1xf32>
    %84 = vector.broadcast %83 : vector<8x1xf32> to vector<8x8xf32>
    %85 = arith.subf %81, %84 : vector<8x8xf32>
    %86 = math.exp %85 : vector<8x8xf32>
    %cst_29 = arith.constant dense<0.000000e+00> : vector<8xf32>
    %87 = vector.multi_reduction <add>, %86, %cst_29 [1] : vector<8x8xf32> to vector<8xf32>
    %88 = vector.shape_cast %87 : vector<8xf32> to vector<8x1xf32>
    %cst_30 = arith.constant dense<0.000000e+00> : vector<8x8xf32>
    %89 = tpu.matmul %86, %80, %cst_30 {dimension_numbers = #tpu.dot_dimension_numbers<[1], [0], [0], [1], [0, 0, 1, 1], [], []>} : vector<8x8xf32>, vector<8x8xf32>, vector<8x8xf32> -> vector<8x8xf32>
    %90 = tpu.reciprocal %88 : vector<8x1xf32> -> vector<8x1xf32>
    %91 = vector.broadcast %90 : vector<8x1xf32> to vector<8x8xf32>
    %92 = arith.mulf %89, %91 : vector<8x8xf32>
    %93 = arith.index_cast %14 : i32 to index
    %c24_31 = arith.constant 24 : index
    %94 = vector.load %arg16[%93, %c24_31] : memref<16x32xf32, #tpu.memory_space<vmem>>, vector<8x8xf32>
    tpu.vector_store %arg16[%93, %c24_31], %92 {strides = array<i32>} : memref<16x32xf32, #tpu.memory_space<vmem>>, vector<8x8xf32>,
    %c1_i32 = arith.constant 1 : i32
    %c8_i32_32 = arith.constant 8 : i32
    %95 = arith.muli %c1_i32, %c8_i32_32 : i32
    %96 = tpu.assume_multiple %95, 8 : i32
    %97 = arith.index_cast %96 : i32 to index
    %c0_33 = arith.constant 0 : index
    %98 = vector.load %arg15[%97, %c0_33] : memref<16x96xf32, #tpu.memory_space<vmem>>, vector<8x8xf32>
    %99 = arith.index_cast %96 : i32 to index
    %c32_34 = arith.constant 32 : index
    %100 = vector.load %arg15[%99, %c32_34] : memref<16x96xf32, #tpu.memory_space<vmem>>, vector<8x8xf32>
    %101 = arith.index_cast %96 : i32 to index
    %c64_35 = arith.constant 64 : index
    %102 = vector.load %arg15[%101, %c64_35] : memref<16x96xf32, #tpu.memory_space<vmem>>, vector<8x8xf32>
    %cst_36 = arith.constant dense<0.000000e+00> : vector<8x8xf32>
    %103 = tpu.matmul %98, %100, %cst_36 {dimension_numbers = #tpu.dot_dimension_numbers<[1], [1], [0], [0], [0, 0, 1, 0], [], []>} : vector<8x8xf32>, vector<8x8xf32>, vector<8x8xf32> -> vector<8x8xf32>
    %cst_37 = arith.constant dense<0xFF800000> : vector<8xf32>
    %104 = vector.multi_reduction <maximumf>, %103, %cst_37 [1] : vector<8x8xf32> to vector<8xf32>
    %105 = vector.shape_cast %104 : vector<8xf32> to vector<8x1xf32>
    %106 = vector.broadcast %105 : vector<8x1xf32> to vector<8x8xf32>
    %107 = arith.subf %103, %106 : vector<8x8xf32>
    %108 = math.exp %107 : vector<8x8xf32>
    %cst_38 = arith.constant dense<0.000000e+00> : vector<8xf32>
    %109 = vector.multi_reduction <add>, %108, %cst_38 [1] : vector<8x8xf32> to vector<8xf32>
    %110 = vector.shape_cast %109 : vector<8xf32> to vector<8x1xf32>
    %cst_39 = arith.constant dense<0.000000e+00> : vector<8x8xf32>
    %111 = tpu.matmul %108, %102, %cst_39 {dimension_numbers = #tpu.dot_dimension_numbers<[1], [0], [0], [1], [0, 0, 1, 1], [], []>} : vector<8x8xf32>, vector<8x8xf32>, vector<8x8xf32> -> vector<8x8xf32>
    %112 = tpu.reciprocal %110 : vector<8x1xf32> -> vector<8x1xf32>
    %113 = vector.broadcast %112 : vector<8x1xf32> to vector<8x8xf32>
    %114 = arith.mulf %111, %113 : vector<8x8xf32>
    %115 = arith.index_cast %96 : i32 to index
    %c0_40 = arith.constant 0 : index
    %116 = vector.load %arg16[%115, %c0_40] : memref<16x32xf32, #tpu.memory_space<vmem>>, vector<8x8xf32>
    tpu.vector_store %arg16[%115, %c0_40], %114 {strides = array<i32>} : memref<16x32xf32, #tpu.memory_space<vmem>>, vector<8x8xf32>,
    %117 = arith.index_cast %96 : i32 to index
    %c8_41 = arith.constant 8 : index
    %118 = vector.load %arg15[%117, %c8_41] : memref<16x96xf32, #tpu.memory_space<vmem>>, vector<8x8xf32>
    %119 = arith.index_cast %96 : i32 to index
    %c40_42 = arith.constant 40 : index
    %120 = vector.load %arg15[%119, %c40_42] : memref<16x96xf32, #tpu.memory_space<vmem>>, vector<8x8xf32>
    %121 = arith.index_cast %96 : i32 to index
    %c72_43 = arith.constant 72 : index
    %122 = vector.load %arg15[%121, %c72_43] : memref<16x96xf32, #tpu.memory_space<vmem>>, vector<8x8xf32>
    %cst_44 = arith.constant dense<0.000000e+00> : vector<8x8xf32>
    %123 = tpu.matmul %118, %120, %cst_44 {dimension_numbers = #tpu.dot_dimension_numbers<[1], [1], [0], [0], [0, 0, 1, 0], [], []>} : vector<8x8xf32>, vector<8x8xf32>, vector<8x8xf32> -> vector<8x8xf32>
    %cst_45 = arith.constant dense<0xFF800000> : vector<8xf32>
    %124 = vector.multi_reduction <maximumf>, %123, %cst_45 [1] : vector<8x8xf32> to vector<8xf32>
    %125 = vector.shape_cast %124 : vector<8xf32> to vector<8x1xf32>
    %126 = vector.broadcast %125 : vector<8x1xf32> to vector<8x8xf32>
    %127 = arith.subf %123, %126 : vector<8x8xf32>
    %128 = math.exp %127 : vector<8x8xf32>
    %cst_46 = arith.constant dense<0.000000e+00> : vector<8xf32>
    %129 = vector.multi_reduction <add>, %128, %cst_46 [1] : vector<8x8xf32> to vector<8xf32>
    %130 = vector.shape_cast %129 : vector<8xf32> to vector<8x1xf32>
    %cst_47 = arith.constant dense<0.000000e+00> : vector<8x8xf32>
    %131 = tpu.matmul %128, %122, %cst_47 {dimension_numbers = #tpu.dot_dimension_numbers<[1], [0], [0], [1], [0, 0, 1, 1], [], []>} : vector<8x8xf32>, vector<8x8xf32>, vector<8x8xf32> -> vector<8x8xf32>
    %132 = tpu.reciprocal %130 : vector<8x1xf32> -> vector<8x1xf32>
    %133 = vector.broadcast %132 : vector<8x1xf32> to vector<8x8xf32>
    %134 = arith.mulf %131, %133 : vector<8x8xf32>
    %135 = arith.index_cast %96 : i32 to index
    %c8_48 = arith.constant 8 : index
    %136 = vector.load %arg16[%135, %c8_48] : memref<16x32xf32, #tpu.memory_space<vmem>>, vector<8x8xf32>
    tpu.vector_store %arg16[%135, %c8_48], %134 {strides = array<i32>} : memref<16x32xf32, #tpu.memory_space<vmem>>, vector<8x8xf32>,
    %137 = arith.index_cast %96 : i32 to index
    %c16_49 = arith.constant 16 : index
    %138 = vector.load %arg15[%137, %c16_49] : memref<16x96xf32, #tpu.memory_space<vmem>>, vector<8x8xf32>
    %139 = arith.index_cast %96 : i32 to index
    %c48_50 = arith.constant 48 : index
    %140 = vector.load %arg15[%139, %c48_50] : memref<16x96xf32, #tpu.memory_space<vmem>>, vector<8x8xf32>
    %141 = arith.index_cast %96 : i32 to index
    %c80_51 = arith.constant 80 : index
    %142 = vector.load %arg15[%141, %c80_51] : memref<16x96xf32, #tpu.memory_space<vmem>>, vector<8x8xf32>
    %cst_52 = arith.constant dense<0.000000e+00> : vector<8x8xf32>
    %143 = tpu.matmul %138, %140, %cst_52 {dimension_numbers = #tpu.dot_dimension_numbers<[1], [1], [0], [0], [0, 0, 1, 0], [], []>} : vector<8x8xf32>, vector<8x8xf32>, vector<8x8xf32> -> vector<8x8xf32>
    %cst_53 = arith.constant dense<0xFF800000> : vector<8xf32>
    %144 = vector.multi_reduction <maximumf>, %143, %cst_53 [1] : vector<8x8xf32> to vector<8xf32>
    %145 = vector.shape_cast %144 : vector<8xf32> to vector<8x1xf32>
    %146 = vector.broadcast %145 : vector<8x1xf32> to vector<8x8xf32>
    %147 = arith.subf %143, %146 : vector<8x8xf32>
    %148 = math.exp %147 : vector<8x8xf32>
    %cst_54 = arith.constant dense<0.000000e+00> : vector<8xf32>
    %149 = vector.multi_reduction <add>, %148, %cst_54 [1] : vector<8x8xf32> to vector<8xf32>
    %150 = vector.shape_cast %149 : vector<8xf32> to vector<8x1xf32>
    %cst_55 = arith.constant dense<0.000000e+00> : vector<8x8xf32>
    %151 = tpu.matmul %148, %142, %cst_55 {dimension_numbers = #tpu.dot_dimension_numbers<[1], [0], [0], [1], [0, 0, 1, 1], [], []>} : vector<8x8xf32>, vector<8x8xf32>, vector<8x8xf32> -> vector<8x8xf32>
    %152 = tpu.reciprocal %150 : vector<8x1xf32> -> vector<8x1xf32>
    %153 = vector.broadcast %152 : vector<8x1xf32> to vector<8x8xf32>
    %154 = arith.mulf %151, %153 : vector<8x8xf32>
    %155 = arith.index_cast %96 : i32 to index
    %c16_56 = arith.constant 16 : index
    %156 = vector.load %arg16[%155, %c16_56] : memref<16x32xf32, #tpu.memory_space<vmem>>, vector<8x8xf32>
    tpu.vector_store %arg16[%155, %c16_56], %154 {strides = array<i32>} : memref<16x32xf32, #tpu.memory_space<vmem>>, vector<8x8xf32>,
    %157 = arith.index_cast %96 : i32 to index
    %c24_57 = arith.constant 24 : index
    %158 = vector.load %arg15[%157, %c24_57] : memref<16x96xf32, #tpu.memory_space<vmem>>, vector<8x8xf32>
    %159 = arith.index_cast %96 : i32 to index
    %c56_58 = arith.constant 56 : index
    %160 = vector.load %arg15[%159, %c56_58] : memref<16x96xf32, #tpu.memory_space<vmem>>, vector<8x8xf32>
    %161 = arith.index_cast %96 : i32 to index
    %c88_59 = arith.constant 88 : index
    %162 = vector.load %arg15[%161, %c88_59] : memref<16x96xf32, #tpu.memory_space<vmem>>, vector<8x8xf32>
    %cst_60 = arith.constant dense<0.000000e+00> : vector<8x8xf32>
    %163 = tpu.matmul %158, %160, %cst_60 {dimension_numbers = #tpu.dot_dimension_numbers<[1], [1], [0], [0], [0, 0, 1, 0], [], []>} : vector<8x8xf32>, vector<8x8xf32>, vector<8x8xf32> -> vector<8x8xf32>
    %cst_61 = arith.constant dense<0xFF800000> : vector<8xf32>
    %164 = vector.multi_reduction <maximumf>, %163, %cst_61 [1] : vector<8x8xf32> to vector<8xf32>
    %165 = vector.shape_cast %164 : vector<8xf32> to vector<8x1xf32>
    %166 = vector.broadcast %165 : vector<8x1xf32> to vector<8x8xf32>
    %167 = arith.subf %163, %166 : vector<8x8xf32>
    %168 = math.exp %167 : vector<8x8xf32>
    %cst_62 = arith.constant dense<0.000000e+00> : vector<8xf32>
    %169 = vector.multi_reduction <add>, %168, %cst_62 [1] : vector<8x8xf32> to vector<8xf32>
    %170 = vector.shape_cast %169 : vector<8xf32> to vector<8x1xf32>
    %cst_63 = arith.constant dense<0.000000e+00> : vector<8x8xf32>
    %171 = tpu.matmul %168, %162, %cst_63 {dimension_numbers = #tpu.dot_dimension_numbers<[1], [0], [0], [1], [0, 0, 1, 1], [], []>} : vector<8x8xf32>, vector<8x8xf32>, vector<8x8xf32> -> vector<8x8xf32>
    %172 = tpu.reciprocal %170 : vector<8x1xf32> -> vector<8x1xf32>
    %173 = vector.broadcast %172 : vector<8x1xf32> to vector<8x8xf32>
    %174 = arith.mulf %171, %173 : vector<8x8xf32>
    %175 = arith.index_cast %96 : i32 to index
    %c24_64 = arith.constant 24 : index
    %176 = vector.load %arg16[%175, %c24_64] : memref<16x32xf32, #tpu.memory_space<vmem>>, vector<8x8xf32>
    tpu.vector_store %arg16[%175, %c24_64], %174 {strides = array<i32>} : memref<16x32xf32, #tpu.memory_space<vmem>>, vector<8x8xf32>,
    %c2_i32 = arith.constant 2 : i32
    %c0_65 = arith.constant 0 : index
    %c0_66 = arith.constant 0 : index
    %177 = vector.load %arg16[%c0_65, %c0_66] : memref<16x32xf32, #tpu.memory_space<vmem>>, vector<16x32xf32>
    %c0_67 = arith.constant 0 : index
    %c0_68 = arith.constant 0 : index
    %178 = vector.load %arg4[%c0_67, %c0_68] : memref<32x32xf32, #tpu.memory_space<vmem>>, vector<32x32xf32>
    %cst_69 = arith.constant dense<0.000000e+00> : vector<16x32xf32>
    %179 = tpu.matmul %177, %178, %cst_69 {dimension_numbers = #tpu.dot_dimension_numbers<[1], [0], [0], [1], [0, 0, 1, 1], [], []>} : vector<16x32xf32>, vector<32x32xf32>, vector<16x32xf32> -> vector<16x32xf32>
    %c0_70 = arith.constant 0 : index
    %c0_71 = arith.constant 0 : index
    %180 = vector.load %arg5[%c0_70, %c0_71] : memref<1x32xf32, #tpu.memory_space<vmem>>, vector<1x32xf32>
    %181 = vector.broadcast %180 : vector<1x32xf32> to vector<16x32xf32>
    %182 = arith.addf %179, %181 : vector<16x32xf32>
    %183 = arith.addf %1, %182 : vector<16x32xf32>
    %c0_72 = arith.constant 0 : index
    %c0_73 = arith.constant 0 : index
    %184 = vector.load %arg10[%c0_72, %c0_73] : memref<1x32xf32, #tpu.memory_space<vmem>>, vector<1x32xf32>
    %c0_74 = arith.constant 0 : index
    %c0_75 = arith.constant 0 : index
    %185 = vector.load %arg11[%c0_74, %c0_75] : memref<1x32xf32, #tpu.memory_space<vmem>>, vector<1x32xf32>
    %cst_76 = arith.constant dense<0.000000e+00> : vector<16xf32>
    %186 = vector.multi_reduction <add>, %183, %cst_76 [1] : vector<16x32xf32> to vector<16xf32>
    %187 = vector.shape_cast %186 : vector<16xf32> to vector<16x1xf32>
    %cst_77 = arith.constant 3.200000e+01 : f32
    %188 = vector.broadcast %cst_77 : f32 to vector<16x1xf32>
    %189 = arith.divf %187, %188 : vector<16x1xf32>
    %190 = vector.broadcast %189 : vector<16x1xf32> to vector<16x32xf32>
    %191 = arith.subf %183, %190 : vector<16x32xf32>
    %192 = arith.mulf %191, %191 : vector<16x32xf32>
    %cst_78 = arith.constant dense<0.000000e+00> : vector<16xf32>
    %193 = vector.multi_reduction <add>, %192, %cst_78 [1] : vector<16x32xf32> to vector<16xf32>
    %194 = vector.shape_cast %193 : vector<16xf32> to vector<16x1xf32>
    %cst_79 = arith.constant 3.200000e+01 : f32
    %195 = vector.broadcast %cst_79 : f32 to vector<16x1xf32>
    %196 = arith.divf %194, %195 : vector<16x1xf32>
    %197 = vector.broadcast %189 : vector<16x1xf32> to vector<16x32xf32>
    %198 = arith.subf %183, %197 : vector<16x32xf32>
    %cst_80 = arith.constant 9.99999974E-6 : f32
    %199 = vector.broadcast %cst_80 : f32 to vector<16x1xf32>
    %200 = arith.addf %196, %199 : vector<16x1xf32>
    %201 = math.rsqrt %200 : vector<16x1xf32>
    %202 = vector.broadcast %201 : vector<16x1xf32> to vector<16x32xf32>
    %203 = arith.mulf %198, %202 : vector<16x32xf32>
    %204 = vector.broadcast %184 : vector<1x32xf32> to vector<16x32xf32>
    %205 = arith.mulf %203, %204 : vector<16x32xf32>
    %206 = vector.broadcast %185 : vector<1x32xf32> to vector<16x32xf32>
    %207 = arith.addf %205, %206 : vector<16x32xf32>
    %cst_81 = arith.constant 0.000000e+00 : f32
    %208 = vector.broadcast %cst_81 : f32 to vector<16x32xf32>
    %c0_82 = arith.constant 0 : index
    %c0_83 = arith.constant 0 : index
    %209 = vector.load %arg6[%c0_82, %c0_83] : memref<32x64xf32, #tpu.memory_space<vmem>>, vector<32x64xf32>
    %cst_84 = arith.constant dense<0.000000e+00> : vector<16x64xf32>
    %210 = tpu.matmul %207, %209, %cst_84 {dimension_numbers = #tpu.dot_dimension_numbers<[1], [0], [0], [1], [0, 0, 1, 1], [], []>} : vector<16x32xf32>, vector<32x64xf32>, vector<16x64xf32> -> vector<16x64xf32>
    %c0_85 = arith.constant 0 : index
    %c0_86 = arith.constant 0 : index
    %211 = vector.load %arg7[%c0_85, %c0_86] : memref<1x64xf32, #tpu.memory_space<vmem>>, vector<1x64xf32>
    %212 = vector.broadcast %211 : vector<1x64xf32> to vector<16x64xf32>
    %213 = arith.addf %210, %212 : vector<16x64xf32>
    %cst_87 = arith.constant 0.000000e+00 : f32
    %214 = vector.broadcast %cst_87 : f32 to vector<16x64xf32>
    %215 = arith.maximumf %213, %214 : vector<16x64xf32>
    %c0_88 = arith.constant 0 : index
    %c0_89 = arith.constant 0 : index
    %216 = vector.load %arg8[%c0_88, %c0_89] : memref<64x32xf32, #tpu.memory_space<vmem>>, vector<64x32xf32>
    %cst_90 = arith.constant dense<0.000000e+00> : vector<16x32xf32>
    %217 = tpu.matmul %215, %216, %cst_90 {dimension_numbers = #tpu.dot_dimension_numbers<[1], [0], [0], [1], [0, 0, 1, 1], [], []>} : vector<16x64xf32>, vector<64x32xf32>, vector<16x32xf32> -> vector<16x32xf32>
    %218 = arith.addf %208, %217 : vector<16x32xf32>
    %c0_91 = arith.constant 0 : index
    %c0_92 = arith.constant 0 : index
    %219 = vector.load %arg9[%c0_91, %c0_92] : memref<1x32xf32, #tpu.memory_space<vmem>>, vector<1x32xf32>
    %220 = vector.broadcast %219 : vector<1x32xf32> to vector<16x32xf32>
    %221 = arith.addf %218, %220 : vector<16x32xf32>
    %222 = arith.addf %207, %221 : vector<16x32xf32>
    %c0_93 = arith.constant 0 : index
    %c0_94 = arith.constant 0 : index
    %223 = vector.load %arg12[%c0_93, %c0_94] : memref<1x32xf32, #tpu.memory_space<vmem>>, vector<1x32xf32>
    %c0_95 = arith.constant 0 : index
    %c0_96 = arith.constant 0 : index
    %224 = vector.load %arg13[%c0_95, %c0_96] : memref<1x32xf32, #tpu.memory_space<vmem>>, vector<1x32xf32>
    %cst_97 = arith.constant dense<0.000000e+00> : vector<16xf32>
    %225 = vector.multi_reduction <add>, %222, %cst_97 [1] : vector<16x32xf32> to vector<16xf32>
    %226 = vector.shape_cast %225 : vector<16xf32> to vector<16x1xf32>
    %cst_98 = arith.constant 3.200000e+01 : f32
    %227 = vector.broadcast %cst_98 : f32 to vector<16x1xf32>
    %228 = arith.divf %226, %227 : vector<16x1xf32>
    %229 = vector.broadcast %228 : vector<16x1xf32> to vector<16x32xf32>
    %230 = arith.subf %222, %229 : vector<16x32xf32>
    %231 = arith.mulf %230, %230 : vector<16x32xf32>
    %cst_99 = arith.constant dense<0.000000e+00> : vector<16xf32>
    %232 = vector.multi_reduction <add>, %231, %cst_99 [1] : vector<16x32xf32> to vector<16xf32>
    %233 = vector.shape_cast %232 : vector<16xf32> to vector<16x1xf32>
    %cst_100 = arith.constant 3.200000e+01 : f32
    %234 = vector.broadcast %cst_100 : f32 to vector<16x1xf32>
    %235 = arith.divf %233, %234 : vector<16x1xf32>
    %236 = vector.broadcast %228 : vector<16x1xf32> to vector<16x32xf32>
    %237 = arith.subf %222, %236 : vector<16x32xf32>
    %cst_101 = arith.constant 9.99999974E-6 : f32
    %238 = vector.broadcast %cst_101 : f32 to vector<16x1xf32>
    %239 = arith.addf %235, %238 : vector<16x1xf32>
    %240 = math.rsqrt %239 : vector<16x1xf32>
    %241 = vector.broadcast %240 : vector<16x1xf32> to vector<16x32xf32>
    %242 = arith.mulf %237, %241 : vector<16x32xf32>
    %243 = vector.broadcast %223 : vector<1x32xf32> to vector<16x32xf32>
    %244 = arith.mulf %242, %243 : vector<16x32xf32>
    %245 = vector.broadcast %224 : vector<1x32xf32> to vector<16x32xf32>
    %246 = arith.addf %244, %245 : vector<16x32xf32>
    %247 = vector.shape_cast %246 : vector<16x32xf32> to vector<2x8x32xf32>
    %c0_102 = arith.constant 0 : index
    %c0_103 = arith.constant 0 : index
    %c0_104 = arith.constant 0 : index
    %248 = vector.load %arg14[%c0_102, %c0_103, %c0_104] : memref<2x8x32xf32, #tpu.memory_space<vmem>>, vector<2x8x32xf32>
    tpu.vector_store %arg14[%c0_102, %c0_103, %c0_104], %247 {strides = array<i32>} : memref<2x8x32xf32, #tpu.memory_space<vmem>>, vector<2x8x32xf32>,
    return
  }
  func.func @transform_0(%arg0: i32) -> (i32, i32, i32) {
    %c0_i32 = arith.constant 0 : i32
    %c0_i32_0 = arith.constant 0 : i32
    %c0_i32_1 = arith.constant 0 : i32
    return %arg0, %c0_i32, %c0_i32_0 : i32, i32, i32
  }
  func.func @transform_1(%arg0: i32) -> (i32, i32) {
    %c0_i32 = arith.constant 0 : i32
    %c0_i32_0 = arith.constant 0 : i32
    %c0_i32_1 = arith.constant 0 : i32
    return %c0_i32, %c0_i32_0 : i32, i32
  }
  func.func @transform_2(%arg0: i32) -> (i32, i32) {
    %c0_i32 = arith.constant 0 : i32
    %c0_i32_0 = arith.constant 0 : i32
    %c0_i32_1 = arith.constant 0 : i32
    return %c0_i32, %c0_i32_0 : i32, i32
  }
  func.func @transform_3(%arg0: i32) -> (i32, i32) {
    %c0_i32 = arith.constant 0 : i32
    %c0_i32_0 = arith.constant 0 : i32
    %c0_i32_1 = arith.constant 0 : i32
    return %c0_i32, %c0_i32_0 : i32, i32
  }
  func.func @transform_4(%arg0: i32) -> (i32, i32) {
    %c0_i32 = arith.constant 0 : i32
    %c0_i32_0 = arith.constant 0 : i32
    %c0_i32_1 = arith.constant 0 : i32
    return %c0_i32, %c0_i32_0 : i32, i32
  }
  func.func @transform_5(%arg0: i32) -> (i32, i32) {
    %c0_i32 = arith.constant 0 : i32
    %c0_i32_0 = arith.constant 0 : i32
    %c0_i32_1 = arith.constant 0 : i32
    return %c0_i32, %c0_i32_0 : i32, i32
  }
  func.func @transform_6(%arg0: i32) -> (i32, i32) {
    %c0_i32 = arith.constant 0 : i32
    %c0_i32_0 = arith.constant 0 : i32
    %c0_i32_1 = arith.constant 0 : i32
    return %c0_i32, %c0_i32_0 : i32, i32
  }
  func.func @transform_7(%arg0: i32) -> (i32, i32) {
    %c0_i32 = arith.constant 0 : i32
    %c0_i32_0 = arith.constant 0 : i32
    %c0_i32_1 = arith.constant 0 : i32
    return %c0_i32, %c0_i32_0 : i32, i32
  }
  func.func @transform_8(%arg0: i32) -> (i32, i32) {
    %c0_i32 = arith.constant 0 : i32
    %c0_i32_0 = arith.constant 0 : i32
    %c0_i32_1 = arith.constant 0 : i32
    return %c0_i32, %c0_i32_0 : i32, i32
  }
  func.func @transform_9(%arg0: i32) -> (i32, i32) {
    %c0_i32 = arith.constant 0 : i32
    %c0_i32_0 = arith.constant 0 : i32
    %c0_i32_1 = arith.constant 0 : i32
    return %c0_i32, %c0_i32_0 : i32, i32
  }
  func.func @transform_10(%arg0: i32) -> (i32, i32) {
    %c0_i32 = arith.constant 0 : i32
    %c0_i32_0 = arith.constant 0 : i32
    %c0_i32_1 = arith.constant 0 : i32
    return %c0_i32, %c0_i32_0 : i32, i32
  }
  func.func @transform_11(%arg0: i32) -> (i32, i32) {
    %c0_i32 = arith.constant 0 : i32
    %c0_i32_0 = arith.constant 0 : i32
    %c0_i32_1 = arith.constant 0 : i32
    return %c0_i32, %c0_i32_0 : i32, i32
  }
  func.func @transform_12(%arg0: i32) -> (i32, i32) {
    %c0_i32 = arith.constant 0 : i32
    %c0_i32_0 = arith.constant 0 : i32
    %c0_i32_1 = arith.constant 0 : i32
    return %c0_i32, %c0_i32_0 : i32, i32
  }
  func.func @transform_13(%arg0: i32) -> (i32, i32, i32) {
    %c0_i32 = arith.constant 0 : i32
    %c0_i32_0 = arith.constant 0 : i32
    %c0_i32_1 = arith.constant 0 : i32
    return %arg0, %c0_i32, %c0_i32_0 : i32, i32, i32
  }
}

</mosaic_0001>

<llo_original>
// kernel: tpu_custom_call.1
$region0: #{tpu_custom_call.1}
  #allocation0 [shape = 'u32[]', space=smem, size = 0x4, offset = 0x4, fixed_abs, tag = 'smem constant byte address 0x4 - core index']
  #allocation1 [shape = 'u32[144,128]{1,0:T(1,128)}', space=vmem, size = 0x12000, scoped, tag = 'internal scratch']
  #allocation2 [shape = 'f32[16,96]{1,0:T(8,128)}', space=vmem, size = 0x2000, scoped, tag = 'scratch operand']
  #allocation3 [shape = 'f32[16,32]{1,0:T(8,128)}', space=vmem, size = 0x2000, scoped, tag = 'scratch operand']
  %s0 = inlined_call_operand.vmem [shape: f32[4,8,32], index: 0, kind: input, shape index: {}]
  %s1 = inlined_call_operand.vmem [shape: f32[32,96], index: 1, kind: input, shape index: {}]
  %s2 = inlined_call_operand.vmem [shape: f32[1,96], index: 2, kind: input, shape index: {}]
  %s3 = inlined_call_operand.vmem [shape: f32[32,32], index: 3, kind: input, shape index: {}]
  %s4 = inlined_call_operand.vmem [shape: f32[1,32], index: 4, kind: input, shape index: {}]
  %s5 = inlined_call_operand.hbm [shape: f32[32,64], index: 5, kind: input, shape index: {}]
  %s6 = inlined_call_operand.vmem [shape: f32[1,64], index: 6, kind: input, shape index: {}]
  %s7 = inlined_call_operand.vmem [shape: f32[64,32], index: 7, kind: input, shape index: {}]
  %s8 = inlined_call_operand.vmem [shape: f32[1,32], index: 8, kind: input, shape index: {}]
  %s9 = inlined_call_operand.vmem [shape: f32[1,32], index: 9, kind: input, shape index: {}]
  %s10 = inlined_call_operand.vmem [shape: f32[1,32], index: 10, kind: input, shape index: {}]
  %s11 = inlined_call_operand.vmem [shape: f32[1,32], index: 11, kind: input, shape index: {}]
  %s12 = inlined_call_operand.vmem [shape: f32[1,32], index: 12, kind: input, shape index: {}]
  %s13 = inlined_call_operand.hbm [shape: f32[4,8,32], index: 13, kind: output, shape index: {}]
  %s14 = sld [smem:[#allocation0]]
  $region89: #{tpu_custom_call.1} parent=0
    _
  %s16 = ssub.s32 1, %s14
  %s17 = scalar_select 0, %s16, %s14
  $region1: #{tpu_custom_call.1} parent=0
    #allocation4 [shape = 'u8[16384]{0}', space=vmem, size = 0x4000, scoped, tag = 'input window, operand 5, single buffered']
    #allocation5 [shape = 's32[2]{0}', space=sflag, size = 0x8, scoped, tag = 'scoped memory for tpu_custom_call.1']
    #allocation6 [shape = 's32[2]{0}', space=sflag, size = 0x8, scoped, tag = 'scoped memory for tpu_custom_call.1']
    #allocation7 [shape = 'u8[16384]{0}', space=vmem, size = 0x4000, scoped, tag = 'output window, operand 0']
    %18 = vsyncpa [#allocation5], 0
    %19 = vsyncpa [#allocation6], 0
    %s20 = scalar_lea.sflag [#allocation6], 1
    %21 = vsyncpa %s20, 0
    loop: start=0, step=1, limit=4
    $region2: #{tpu_custom_call.1} parent=1 // loop_pre_header
      _
    $region3: #{tpu_custom_call.1} parent=1 // loop_header
      %s23 = sphi 0, %s27
      %p24 = scmp.ge.s32.totalorder %s23, 4
      %s33 = sphi 0, %s35
      %s36 = sphi 0, %s33
      %s37 = sphi 0, %s36
      %s53 = sphi 0, %s37
      %s57 = sphi 0, %s57
      %s59 = sphi 0, %s57
      %s60 = sphi 0, %s59
      %s74 = sphi 0, %s60
      %s78 = sphi 0, %s78
      %s80 = sphi 0, %s78
      %s81 = sphi 0, %s80
      %s95 = sphi 0, %s81
      %s99 = sphi 0, %s99
      %s101 = sphi 0, %s99
      %s102 = sphi 0, %s101
      %s116 = sphi 0, %s102
      %s120 = sphi 0, %s120
      %s122 = sphi 0, %s120
      %s123 = sphi 0, %s122
      %s137 = sphi 0, %s123
      %s141 = sphi 0, %s141
      %s143 = sphi 0, %s141
      %s144 = sphi 0, %s143
      %s158 = sphi 0, %s144
      %s162 = sphi 0, %s162
      %s164 = sphi 0, %s162
      %s165 = sphi 0, %s164
      %s179 = sphi 0, %s165
      %s183 = sphi 0, %s183
      %s185 = sphi 0, %s183
      %s186 = sphi 0, %s185
      %s200 = sphi 0, %s186
      %s204 = sphi 0, %s204
      %s206 = sphi 0, %s204
      %s207 = sphi 0, %s206
      %s221 = sphi 0, %s207
      %s225 = sphi 0, %s225
      %s227 = sphi 0, %s225
      %s228 = sphi 0, %s227
      %s242 = sphi 0, %s228
      %s246 = sphi 0, %s246
      %s248 = sphi 0, %s246
      %s249 = sphi 0, %s248
      %s263 = sphi 0, %s249
      %s267 = sphi 0, %s267
      %s269 = sphi 0, %s267
      %s270 = sphi 0, %s269
      %s284 = sphi 0, %s270
      %s288 = sphi 0, %s288
      %s290 = sphi 0, %s288
      %s291 = sphi 0, %s290
      %s305 = sphi 0, %s291
      %s311 = sphi 0, %s313
      %s314 = sphi 0, %s311
      %s315 = sphi 0, %s314
      %s331 = sphi 0, %s315
    $region4: #{tpu_custom_call.1} parent=1 // loop_header_branch
      %26 = sbr.rel (%p24) target = $region8
    $region5: #{tpu_custom_call.1} parent=1 // loop_body
      %s28 = ssub.s32 %s23, 1
      %s29 = ssub.s32 %s23, 2
      %s30 = sadd.s32 %s23, 1
      %s31 = ssub.s32 %s23, %s30
      %p32 = scmp.eq.s32.totalorder %s31, 0
      %s34 = sadd.s32 %s33, 1
      %s35 = scalar_select %p32, %s33, %s34
      %p38 = pneg %p32
      %p39 = scmp.eq.s32.totalorder %s23, 1
      %p40 = por %p38, %p39
      %p41 = scmp.ne.s32.totalorder %s33, %s36
      %p42 = scmp.eq.s32.totalorder %s23, 0
      %p43 = por %p41, %p42
      %p44 = scmp.ne.s32.totalorder %s33, %s36
      %p45 = scmp.eq.s32.totalorder %s28, 1
      %p46 = por %p44, %p45
      %p47 = scmp.ne.s32.totalorder %s36, %s37
      %p48 = scmp.eq.s32.totalorder %s28, 0
      %p49 = por %p47, %p48
      %p50 = scmp.ne.s32.totalorder %s36, %s37
      %p51 = scmp.eq.s32.totalorder %s29, 1
      %p52 = por %p50, %p51
      %p54 = scmp.ne.s32.totalorder %s37, %s53
      %p55 = scmp.eq.s32.totalorder %s29, 0
      %p56 = por %p54, %p55
      %s58 = sadd.s32 %s57, 1
      %p61 = scmp.eq.s32.totalorder %s23, 1
      %p62 = scmp.ne.s32.totalorder %s57, %s59
      %p63 = scmp.eq.s32.totalorder %s23, 0
      %p64 = por %p62, %p63
      %p65 = scmp.ne.s32.totalorder %s57, %s59
      %p66 = scmp.eq.s32.totalorder %s28, 1
      %p67 = por %p65, %p66
      %p68 = scmp.ne.s32.totalorder %s59, %s60
      %p69 = scmp.eq.s32.totalorder %s28, 0
      %p70 = por %p68, %p69
      %p71 = scmp.ne.s32.totalorder %s59, %s60
      %p72 = scmp.eq.s32.totalorder %s29, 1
      %p73 = por %p71, %p72
      %p75 = scmp.ne.s32.totalorder %s60, %s74
      %p76 = scmp.eq.s32.totalorder %s29, 0
      %p77 = por %p75, %p76
      %s79 = sadd.s32 %s78, 1
      %p82 = scmp.eq.s32.totalorder %s23, 1
      %p83 = scmp.ne.s32.totalorder %s78, %s80
      %p84 = scmp.eq.s32.totalorder %s23, 0
      %p85 = por %p83, %p84
      %p86 = scmp.ne.s32.totalorder %s78, %s80
      %p87 = scmp.eq.s32.totalorder %s28, 1
      %p88 = por %p86, %p87
      %p89 = scmp.ne.s32.totalorder %s80, %s81
      %p90 = scmp.eq.s32.totalorder %s28, 0
      %p91 = por %p89, %p90
      %p92 = scmp.ne.s32.totalorder %s80, %s81
      %p93 = scmp.eq.s32.totalorder %s29, 1
      %p94 = por %p92, %p93
      %p96 = scmp.ne.s32.totalorder %s81, %s95
      %p97 = scmp.eq.s32.totalorder %s29, 0
      %p98 = por %p96, %p97
      %s100 = sadd.s32 %s99, 1
      %p103 = scmp.eq.s32.totalorder %s23, 1
      %p104 = scmp.ne.s32.totalorder %s99, %s101
      %p105 = scmp.eq.s32.totalorder %s23, 0
      %p106 = por %p104, %p105
      %p107 = scmp.ne.s32.totalorder %s99, %s101
      %p108 = scmp.eq.s32.totalorder %s28, 1
      %p109 = por %p107, %p108
      %p110 = scmp.ne.s32.totalorder %s101, %s102
      %p111 = scmp.eq.s32.totalorder %s28, 0
      %p112 = por %p110, %p111
      %p113 = scmp.ne.s32.totalorder %s101, %s102
      %p114 = scmp.eq.s32.totalorder %s29, 1
      %p115 = por %p113, %p114
      %p117 = scmp.ne.s32.totalorder %s102, %s116
      %p118 = scmp.eq.s32.totalorder %s29, 0
      %p119 = por %p117, %p118
      %s121 = sadd.s32 %s120, 1
      %p124 = scmp.eq.s32.totalorder %s23, 1
      %p125 = scmp.ne.s32.totalorder %s120, %s122
      %p126 = scmp.eq.s32.totalorder %s23, 0
      %p127 = por %p125, %p126
      %p128 = scmp.ne.s32.totalorder %s120, %s122
      %p129 = scmp.eq.s32.totalorder %s28, 1
      %p130 = por %p128, %p129
      %p131 = scmp.ne.s32.totalorder %s122, %s123
      %p132 = scmp.eq.s32.totalorder %s28, 0
      %p133 = por %p131, %p132
      %p134 = scmp.ne.s32.totalorder %s122, %s123
      %p135 = scmp.eq.s32.totalorder %s29, 1
      %p136 = por %p134, %p135
      %p138 = scmp.ne.s32.totalorder %s123, %s137
      %p139 = scmp.eq.s32.totalorder %s29, 0
      %p140 = por %p138, %p139
      %s142 = sadd.s32 %s141, 1
      %p145 = scmp.eq.s32.totalorder %s23, 1
      %p146 = scmp.ne.s32.totalorder %s141, %s143
      %p147 = scmp.eq.s32.totalorder %s23, 0
      %p148 = por %p146, %p147
      %p149 = scmp.ne.s32.totalorder %s141, %s143
      %p150 = scmp.eq.s32.totalorder %s28, 1
      %p151 = por %p149, %p150
      %p152 = scmp.ne.s32.totalorder %s143, %s144
      %p153 = scmp.eq.s32.totalorder %s28, 0
      %p154 = por %p152, %p153
      %p155 = scmp.ne.s32.totalorder %s143, %s144
      %p156 = scmp.eq.s32.totalorder %s29, 1
      %p157 = por %p155, %p156
      %p159 = scmp.ne.s32.totalorder %s144, %s158
      %p160 = scmp.eq.s32.totalorder %s29, 0
      %p161 = por %p159, %p160
      %s163 = sadd.s32 %s162, 1
      %p166 = scmp.eq.s32.totalorder %s23, 1
      %p167 = scmp.ne.s32.totalorder %s162, %s164
      %p168 = scmp.eq.s32.totalorder %s23, 0
      %p169 = por %p167, %p168
      %p170 = scmp.ne.s32.totalorder %s162, %s164
      %p171 = scmp.eq.s32.totalorder %s28, 1
      %p172 = por %p170, %p171
      %p173 = scmp.ne.s32.totalorder %s164, %s165
      %p174 = scmp.eq.s32.totalorder %s28, 0
      %p175 = por %p173, %p174
      %p176 = scmp.ne.s32.totalorder %s164, %s165
      %p177 = scmp.eq.s32.totalorder %s29, 1
      %p178 = por %p176, %p177
      %p180 = scmp.ne.s32.totalorder %s165, %s179
      %p181 = scmp.eq.s32.totalorder %s29, 0
      %p182 = por %p180, %p181
      %s184 = sadd.s32 %s183, 1
      %p187 = scmp.eq.s32.totalorder %s23, 1
      %p188 = scmp.ne.s32.totalorder %s183, %s185
      %p189 = scmp.eq.s32.totalorder %s23, 0
      %p190 = por %p188, %p189
      %p191 = scmp.ne.s32.totalorder %s183, %s185
      %p192 = scmp.eq.s32.totalorder %s28, 1
      %p193 = por %p191, %p192
      %p194 = scmp.ne.s32.totalorder %s185, %s186
      %p195 = scmp.eq.s32.totalorder %s28, 0
      %p196 = por %p194, %p195
      %p197 = scmp.ne.s32.totalorder %s185, %s186
      %p198 = scmp.eq.s32.totalorder %s29, 1
      %p199 = por %p197, %p198
      %p201 = scmp.ne.s32.totalorder %s186, %s200
      %p202 = scmp.eq.s32.totalorder %s29, 0
      %p203 = por %p201, %p202
      %s205 = sadd.s32 %s204, 1
      %p208 = scmp.eq.s32.totalorder %s23, 1
      %p209 = scmp.ne.s32.totalorder %s204, %s206
      %p210 = scmp.eq.s32.totalorder %s23, 0
      %p211 = por %p209, %p210
      %p212 = scmp.ne.s32.totalorder %s204, %s206
      %p213 = scmp.eq.s32.totalorder %s28, 1
      %p214 = por %p212, %p213
      %p215 = scmp.ne.s32.totalorder %s206, %s207
      %p216 = scmp.eq.s32.totalorder %s28, 0
      %p217 = por %p215, %p216
      %p218 = scmp.ne.s32.totalorder %s206, %s207
      %p219 = scmp.eq.s32.totalorder %s29, 1
      %p220 = por %p218, %p219
      %p222 = scmp.ne.s32.totalorder %s207, %s221
      %p223 = scmp.eq.s32.totalorder %s29, 0
      %p224 = por %p222, %p223
      %s226 = sadd.s32 %s225, 1
      %p229 = scmp.eq.s32.totalorder %s23, 1
      %p230 = scmp.ne.s32.totalorder %s225, %s227
      %p231 = scmp.eq.s32.totalorder %s23, 0
      %p232 = por %p230, %p231
      %p233 = scmp.ne.s32.totalorder %s225, %s227
      %p234 = scmp.eq.s32.totalorder %s28, 1
      %p235 = por %p233, %p234
      %p236 = scmp.ne.s32.totalorder %s227, %s228
      %p237 = scmp.eq.s32.totalorder %s28, 0
      %p238 = por %p236, %p237
      %p239 = scmp.ne.s32.totalorder %s227, %s228
      %p240 = scmp.eq.s32.totalorder %s29, 1
      %p241 = por %p239, %p240
      %p243 = scmp.ne.s32.totalorder %s228, %s242
      %p244 = scmp.eq.s32.totalorder %s29, 0
      %p245 = por %p243, %p244
      %s247 = sadd.s32 %s246, 1
      %p250 = scmp.eq.s32.totalorder %s23, 1
      %p251 = scmp.ne.s32.totalorder %s246, %s248
      %p252 = scmp.eq.s32.totalorder %s23, 0
      %p253 = por %p251, %p252
      %p254 = scmp.ne.s32.totalorder %s246, %s248
      %p255 = scmp.eq.s32.totalorder %s28, 1
      %p256 = por %p254, %p255
      %p257 = scmp.ne.s32.totalorder %s248, %s249
      %p258 = scmp.eq.s32.totalorder %s28, 0
      %p259 = por %p257, %p258
      %p260 = scmp.ne.s32.totalorder %s248, %s249
      %p261 = scmp.eq.s32.totalorder %s29, 1
      %p262 = por %p260, %p261
      %p264 = scmp.ne.s32.totalorder %s249, %s263
      %p265 = scmp.eq.s32.totalorder %s29, 0
      %p266 = por %p264, %p265
      %s268 = sadd.s32 %s267, 1
      %p271 = scmp.eq.s32.totalorder %s23, 1
      %p272 = scmp.ne.s32.totalorder %s267, %s269
      %p273 = scmp.eq.s32.totalorder %s23, 0
      %p274 = por %p272, %p273
      %p275 = scmp.ne.s32.totalorder %s267, %s269
      %p276 = scmp.eq.s32.totalorder %s28, 1
      %p277 = por %p275, %p276
      %p278 = scmp.ne.s32.totalorder %s269, %s270
      %p279 = scmp.eq.s32.totalorder %s28, 0
      %p280 = por %p278, %p279
      %p281 = scmp.ne.s32.totalorder %s269, %s270
      %p282 = scmp.eq.s32.totalorder %s29, 1
      %p283 = por %p281, %p282
      %p285 = scmp.ne.s32.totalorder %s270, %s284
      %p286 = scmp.eq.s32.totalorder %s29, 0
      %p287 = por %p285, %p286
      %s289 = sadd.s32 %s288, 1
      %p292 = scmp.eq.s32.totalorder %s23, 1
      %p293 = scmp.ne.s32.totalorder %s288, %s290
      %p294 = scmp.eq.s32.totalorder %s23, 0
      %p295 = por %p293, %p294
      %p296 = scmp.ne.s32.totalorder %s288, %s290
      %p297 = scmp.eq.s32.totalorder %s28, 1
      %p298 = por %p296, %p297
      %p299 = scmp.ne.s32.totalorder %s290, %s291
      %p300 = scmp.eq.s32.totalorder %s28, 0
      %p301 = por %p299, %p300
      %p302 = scmp.ne.s32.totalorder %s290, %s291
      %p303 = scmp.eq.s32.totalorder %s29, 1
      %p304 = por %p302, %p303
      %p306 = scmp.ne.s32.totalorder %s291, %s305
      %p307 = scmp.eq.s32.totalorder %s29, 0
      %p308 = por %p306, %p307
      %s309 = ssub.s32 %s23, %s30
      %p310 = scmp.eq.s32.totalorder %s309, 0
      %s312 = sadd.s32 %s311, 1
      %s313 = scalar_select %p310, %s311, %s312
      %p316 = pneg %p310
      %p317 = scmp.eq.s32.totalorder %s23, 1
      %p318 = por %p316, %p317
      %p319 = scmp.ne.s32.totalorder %s311, %s314
      %p320 = scmp.eq.s32.totalorder %s23, 0
      %p321 = por %p319, %p320
      %p322 = scmp.ne.s32.totalorder %s311, %s314
      %p323 = scmp.eq.s32.totalorder %s28, 1
      %p324 = por %p322, %p323
      %p325 = scmp.ne.s32.totalorder %s314, %s315
      %p326 = scmp.eq.s32.totalorder %s28, 0
      %p327 = por %p325, %p326
      %p328 = scmp.ne.s32.totalorder %s314, %s315
      %p329 = scmp.eq.s32.totalorder %s29, 1
      %p330 = por %p328, %p329
      %p332 = scmp.ne.s32.totalorder %s315, %s331
      %p333 = scmp.eq.s32.totalorder %s29, 0
      %p334 = por %p332, %p333
      %p335 = scmp.le.s32.totalorder 1, %s23
      %p336 = scmp.lt.s32.totalorder %s23, 3
      %p337 = pnand %p335, %p336
      %p338 = pneg %p337
      // Predicated region
      $region9: #{tpu_custom_call.1} parent=5 // pred_check
        _
      $region10: #{tpu_custom_call.1} parent=5 // pred_check_branch
        %340 = sbr.rel (%p337) target = $region12
      $region11: #{tpu_custom_call.1} parent=5 // pred_region
        %s341 = ssub.s32 %s23, 1
        // Predicated region
        $region13: #{tpu_custom_call.1} parent=11 // pred_check
          %p342 = pneg %p70
        $region14: #{tpu_custom_call.1} parent=11 // pred_check_branch
          %344 = sbr.rel (%p342) target = $region16
        $region15: #{tpu_custom_call.1} parent=11 // pred_region
          _
        $region16: #{tpu_custom_call.1} parent=11 // pred_fallthru
          _
        // Predicated region
        $region17: #{tpu_custom_call.1} parent=11 // pred_check
          %p345 = pneg %p91
        $region18: #{tpu_custom_call.1} parent=11 // pred_check_branch
          %347 = sbr.rel (%p345) target = $region20
        $region19: #{tpu_custom_call.1} parent=11 // pred_region
          _
        $region20: #{tpu_custom_call.1} parent=11 // pred_fallthru
          _
        // Predicated region
        $region21: #{tpu_custom_call.1} parent=11 // pred_check
          %p348 = pneg %p112
        $region22: #{tpu_custom_call.1} parent=11 // pred_check_branch
          %350 = sbr.rel (%p348) target = $region24
        $region23: #{tpu_custom_call.1} parent=11 // pred_region
          _
        $region24: #{tpu_custom_call.1} parent=11 // pred_fallthru
          _
        // Predicated region
        $region25: #{tpu_custom_call.1} parent=11 // pred_check
          %p351 = pneg %p133
        $region26: #{tpu_custom_call.1} parent=11 // pred_check_branch
          %353 = sbr.rel (%p351) target = $region28
        $region27: #{tpu_custom_call.1} parent=11 // pred_region
          _
        $region28: #{tpu_custom_call.1} parent=11 // pred_fallthru
          _
        // Predicated region
        $region29: #{tpu_custom_call.1} parent=11 // pred_check
          %p354 = pneg %p154
        $region30: #{tpu_custom_call.1} parent=11 // pred_check_branch
          %356 = sbr.rel (%p354) target = $region32
        $region31: #{tpu_custom_call.1} parent=11 // pred_region
          %s358 = ssub.s32 512, 512
          %359 = vsyncadd [#allocation5], %s358
          %s360 = sshll.u32 [#allocation4], 4
          %s361 = int_to_ptr.vmem [resolvable:$true] %s360
          %366 = dma.hbm_to_vmem [thread:$0]  %s5, 512, %s361, [#allocation5], 128, 128, 8
        $region32: #{tpu_custom_call.1} parent=11 // pred_fallthru
          _
        // Predicated region
        $region33: #{tpu_custom_call.1} parent=11 // pred_check
          %p367 = pneg %p175
        $region34: #{tpu_custom_call.1} parent=11 // pred_check_branch
          %369 = sbr.rel (%p367) target = $region36
        $region35: #{tpu_custom_call.1} parent=11 // pred_region
          _
        $region36: #{tpu_custom_call.1} parent=11 // pred_fallthru
          _
        // Predicated region
        $region37: #{tpu_custom_call.1} parent=11 // pred_check
          %p370 = pneg %p196
        $region38: #{tpu_custom_call.1} parent=11 // pred_check_branch
          %372 = sbr.rel (%p370) target = $region40
        $region39: #{tpu_custom_call.1} parent=11 // pred_region
          _
        $region40: #{tpu_custom_call.1} parent=11 // pred_fallthru
          _
        // Predicated region
        $region41: #{tpu_custom_call.1} parent=11 // pred_check
          %p373 = pneg %p217
        $region42: #{tpu_custom_call.1} parent=11 // pred_check_branch
          %375 = sbr.rel (%p373) target = $region44
        $region43: #{tpu_custom_call.1} parent=11 // pred_region
          _
        $region44: #{tpu_custom_call.1} parent=11 // pred_fallthru
          _
        // Predicated region
        $region45: #{tpu_custom_call.1} parent=11 // pred_check
          %p376 = pneg %p238
        $region46: #{tpu_custom_call.1} parent=11 // pred_check_branch
          %378 = sbr.rel (%p376) target = $region48
        $region47: #{tpu_custom_call.1} parent=11 // pred_region
          _
        $region48: #{tpu_custom_call.1} parent=11 // pred_fallthru
          _
        // Predicated region
        $region49: #{tpu_custom_call.1} parent=11 // pred_check
          %p379 = pneg %p259
        $region50: #{tpu_custom_call.1} parent=11 // pred_check_branch
          %381 = sbr.rel (%p379) target = $region52
        $region51: #{tpu_custom_call.1} parent=11 // pred_region
          _
        $region52: #{tpu_custom_call.1} parent=11 // pred_fallthru
          _
        // Predicated region
        $region53: #{tpu_custom_call.1} parent=11 // pred_check
          %p382 = pneg %p280
        $region54: #{tpu_custom_call.1} parent=11 // pred_check_branch
          %384 = sbr.rel (%p382) target = $region56
        $region55: #{tpu_custom_call.1} parent=11 // pred_region
          _
        $region56: #{tpu_custom_call.1} parent=11 // pred_fallthru
          _
        // Predicated region
        $region57: #{tpu_custom_call.1} parent=11 // pred_check
          %p385 = pneg %p301
        $region58: #{tpu_custom_call.1} parent=11 // pred_check_branch
          %387 = sbr.rel (%p385) target = $region60
        $region59: #{tpu_custom_call.1} parent=11 // pred_region
          _
        $region60: #{tpu_custom_call.1} parent=11 // pred_fallthru
          _
      $region12: #{tpu_custom_call.1} parent=5 // pred_fallthru
        _
      %p388 = scmp.lt.s32.totalorder %s23, 2
      // Predicated region
      $region61: #{tpu_custom_call.1} parent=5 // pred_check
        %p389 = pneg %p388
      $region62: #{tpu_custom_call.1} parent=5 // pred_check_branch
        %391 = sbr.rel (%p389) target = $region64
      $region63: #{tpu_custom_call.1} parent=5 // pred_region
        // Predicated region
        $region65: #{tpu_custom_call.1} parent=63 // pred_check
          %p392 = pneg %p43
        $region66: #{tpu_custom_call.1} parent=63 // pred_check_branch
          %394 = sbr.rel (%p392) target = $region68
        $region67: #{tpu_custom_call.1} parent=63 // pred_region
          %s395 = smul.u32 2, %s23
          %p396 = scmp.lt.s32.totalorder %s395, 3
          %s397 = scalar_select %p396, %s395, 3
          %s398 = smul.addr %s397, 8
          %s399 = scalar_lea.vmem %s0, %s398
          %s400 = smul.u32 2, %s23
        $region68: #{tpu_custom_call.1} parent=63 // pred_fallthru
          _
      $region64: #{tpu_custom_call.1} parent=5 // pred_fallthru
        _
      %p401 = scmp.le.s32.totalorder 1, %s23
      %p402 = scmp.lt.s32.totalorder %s23, 3
      %p403 = pnand %p401, %p402
      %p404 = pneg %p403
      // Predicated region
      $region69: #{tpu_custom_call.1} parent=5 // pred_check
        _
      $region70: #{tpu_custom_call.1} parent=5 // pred_check_branch
        %406 = sbr.rel (%p403) target = $region72
      $region71: #{tpu_custom_call.1} parent=5 // pred_region
        %s407 = ssub.s32 %s23, 1
        // Predicated region
        $region73: #{tpu_custom_call.1} parent=71 // pred_check
          %p408 = pneg %p154
        $region74: #{tpu_custom_call.1} parent=71 // pred_check_branch
          %410 = sbr.rel (%p408) target = $region76
        $region75: #{tpu_custom_call.1} parent=71 // pred_region
          %411 = dma.done [#allocation5], 512
        $region76: #{tpu_custom_call.1} parent=71 // pred_fallthru
          _
        %s412 = smul.u32 2, %s28
        %p413 = scmp.lt.s32.totalorder %s412, 3
        %s414 = scalar_select %p413, %s412, 3
        %s415 = smul.addr %s414, 8
        %s416 = scalar_lea.vmem %s0, %s415
        %p417 = pneg %p49
        %p418 = pneg %p46
        %p419 = pneg %p70
        %p420 = pneg %p67
        %p421 = pneg %p91
        %p422 = pneg %p88
        %p423 = pneg %p112
        %p424 = pneg %p109
        %p425 = pneg %p133
        %p426 = pneg %p130
        %p427 = pneg %p154
        %p428 = pneg %p151
        %p429 = pneg %p175
        %p430 = pneg %p172
        %p431 = pneg %p196
        %p432 = pneg %p193
        %p433 = pneg %p217
        %p434 = pneg %p214
        %p435 = pneg %p238
        %p436 = pneg %p235
        %p437 = pneg %p259
        %p438 = pneg %p256
        %p439 = pneg %p280
        %p440 = pneg %p277
        %p441 = pneg %p301
        %p442 = pneg %p298
        %p443 = pneg %p327
        %p444 = pneg %p324
        %s445 = sand.u32 %s314, 1
        %s446 = scalar_lea.sflag [#allocation6], %s445
        %s447 = sand.u32 %s314, 1
        %s448 = smul.addr %s447, 16
        %s449 = scalar_lea.vmem [#allocation7], %s448
        %s450 = smul.u32 2, %s28
        %p451 = scmp.lt.s32.totalorder %s450, 3
        %s452 = scalar_select %p451, %s450, 3
        %s453 = smul.addr %s452, 8
        %s454 = scalar_lea.vmem %s0, %s453
        %s455 = smul.u32 2, %s28
        %s456 = smul.u32 2, %s28
        %v457 = vld [vmem:[%s454] sm:$0xff]
        %v458 = vld [vmem:[%s454 + $0x8] sm:$0xff]
        %v459 = vld [vmem:[%s1] sm:$0xff]
        %v460 = vld [vmem:[%s1 + $0x8] sm:$0xff]
        %v461 = vld [vmem:[%s1 + $0x10] sm:$0xff]
        %v462 = vld [vmem:[%s1 + $0x18] sm:$0xff]
        %v463 = vld [vmem:[%s2] sm:$0x1]
        %v465 = vlaneseq
        %v466 = vshrl.u32 %v465, 7
        %v467 = vsub.s32 0, %v466
        %v468 = vrot.slane %v463, %v467
        %vm470 = vcmask 261120
        %v472 = vsel %vm470, %v457, 0
        %v475 = vsel %vm470, %v458, 0
        %477 = vmatprep.subr.mxu0 0.0
        %478 = vmatpush1.msra.mxu0 0.0
        %479 = vmatprep.subr.mxu0 0.0
        %480 = vmatpush1.msra.mxu0 0.0
        %481 = vmatprep.subr.mxu0 0.0
        %482 = vmatpush1.msra.mxu0 0.0
        %483 = vmatprep.subr.mxu0 0.0
        %484 = vmatpush1.msra.mxu0 0.0
        %485 = vmatprep.subr.mxu0 0.0
        %486 = vmatpush1.msra.mxu0 0.0
        %487 = vmatprep.subr.mxu0 0.0
        %488 = vmatpush1.msra.mxu0 0.0
        %489 = vmatprep.subr.mxu0 0.0
        %490 = vmatpush1.msra.mxu0 0.0
        %491 = vmatprep.subr.mxu0 0.0
        %492 = vmatpush1.msra.mxu0 0.0
        %493 = vmatprep.subr.mxu0 0.0
        %494 = vmatpush1.msra.mxu0 0.0
        %495 = vmatprep.subr.mxu0 0.0
        %496 = vmatpush1.msra.mxu0 0.0
        %497 = vmatprep.subr.mxu0 0.0
        %498 = vmatpush1.msra.mxu0 0.0
        %499 = vmatprep.subr.mxu0 0.0
        %500 = vmatpush1.msra.mxu0 0.0
        %501 = vmatprep.subr.mxu0 0.0
        %502 = vmatpush1.msra.mxu0 %v462
        %503 = vmatprep.subr.mxu0 0.0
        %504 = vmatpush1.msra.mxu0 %v461
        %505 = vmatprep.subr.mxu0 0.0
        %506 = vmatpush1.msra.mxu0 %v460
        %507 = vmatprep.subr.mxu0 0.0
        %508 = vmatpush1.msra.mxu0 %v459
        %509 = vmatprep.subr.mxu0 0.0
        %510 = vmatpush2.msra.mxu0 0.0
        %511 = vmatprep.subr.mxu0 0.0
        %512 = vmatpush2.msra.mxu0 0.0
        %513 = vmatprep.subr.mxu0 0.0
        %514 = vmatpush2.msra.mxu0 0.0
        %515 = vmatprep.subr.mxu0 0.0
        %516 = vmatpush2.msra.mxu0 0.0
        %517 = vmatprep.subr.mxu0 0.0
        %518 = vmatpush2.msra.mxu0 0.0
        %519 = vmatprep.subr.mxu0 0.0
        %520 = vmatpush2.msra.mxu0 0.0
        %521 = vmatprep.subr.mxu0 0.0
        %522 = vmatpush2.msra.mxu0 0.0
        %523 = vmatprep.subr.mxu0 0.0
        %524 = vmatpush2.msra.mxu0 0.0
        %525 = vmatprep.subr.mxu0 0.0
        %526 = vmatpush2.msra.mxu0 0.0
        %527 = vmatprep.subr.mxu0 0.0
        %528 = vmatpush2.msra.mxu0 0.0
        %529 = vmatprep.subr.mxu0 0.0
        %530 = vmatpush2.msra.mxu0 0.0
        %531 = vmatprep.subr.mxu0 0.0
        %532 = vmatpush2.msra.mxu0 0.0
        %533 = vmatprep.subr.mxu0 0.0
        %534 = vmatpush2.msra.mxu0 0.0
        %535 = vmatprep.subr.mxu0 0.0
        %536 = vmatpush2.msra.mxu0 0.0
        %537 = vmatprep.subr.mxu0 0.0
        %538 = vmatpush2.msra.mxu0 0.0
        %539 = vmatprep.subr.mxu0 0.0
        %540 = vmatpush2.msra.mxu0 0.0
        %541 = vmatprep.mubr.f32.mxu0 0.0
        %542 = vmatmul.mubr.f32.gmra.mxu0 %v472
        %v543 = vpop.f32.mrf.mxu0
        %v544 = vadd.f32 %v468, %v543
        %v545 = vpop.f32.mrf.mxu0
        %546 = vmatprep.mubr.f32.mxu0 0.0
        %547 = vmatmul.mubr.f32.gmra.mxu0 %v475
        %v548 = vpop.f32.mrf.mxu0
        %v549 = vadd.f32 %v468, %v548
        %v550 = vpop.f32.mrf.mxu0
        %551 = vdwg.mxu0
        %v552 = vmul.f32 %v544, 0.35355338
        %v553 = vmul.f32 %v549, 0.35355338
        %554 = vst.msk [vmem:[#allocation2] sm:$0xff] %vm470, %v552
        %555 = vst.msk [vmem:[#allocation2 + $0x8] sm:$0xff] %vm470, %v553
        %vm556 = vcmask 785664
        %557 = vst.msk [vmem:[#allocation2] sm:$0xff] %vm556, %v544
        %558 = vst.msk [vmem:[#allocation2 + $0x8] sm:$0xff] %vm556, %v549
        %v559 = vld [vmem:[#allocation2] sm:$0xff]
        %561 = vrot.lane.b32.xlu0 %v559, 96
        %v562 = vpop.permute.xlu0 %561
        %vm563 = vcmask 64512
        %v564 = vsel %vm563, %v559, 0
        %v566 = vsel %vm563, %v562, 0
        %568 = vmatprep.subr.mxu0 0.0
        %569 = vmatpush1.xpose.msra.mxu0 0.0
        %570 = vmatprep.subr.mxu0 0.0
        %571 = vmatpush1.xpose.msra.mxu0 0.0
        %572 = vmatprep.subr.mxu0 0.0
        %573 = vmatpush1.xpose.msra.mxu0 0.0
        %574 = vmatprep.subr.mxu0 0.0
        %575 = vmatpush1.xpose.msra.mxu0 0.0
        %576 = vmatprep.subr.mxu0 0.0
        %577 = vmatpush1.xpose.msra.mxu0 0.0
        %578 = vmatprep.subr.mxu0 0.0
        %579 = vmatpush1.xpose.msra.mxu0 0.0
        %580 = vmatprep.subr.mxu0 0.0
        %581 = vmatpush1.xpose.msra.mxu0 0.0
        %582 = vmatprep.subr.mxu0 0.0
        %583 = vmatpush1.xpose.msra.mxu0 0.0
        %584 = vmatprep.subr.mxu0 0.0
        %585 = vmatpush1.xpose.msra.mxu0 0.0
        %586 = vmatprep.subr.mxu0 0.0
        %587 = vmatpush1.xpose.msra.mxu0 0.0
        %588 = vmatprep.subr.mxu0 0.0
        %589 = vmatpush1.xpose.msra.mxu0 0.0
        %590 = vmatprep.subr.mxu0 0.0
        %591 = vmatpush1.xpose.msra.mxu0 0.0
        %592 = vmatprep.subr.mxu0 0.0
        %593 = vmatpush1.xpose.msra.mxu0 0.0
        %594 = vmatprep.subr.mxu0 0.0
        %595 = vmatpush1.xpose.msra.mxu0 0.0
        %596 = vmatprep.subr.mxu0 0.0
        %597 = vmatpush1.xpose.msra.mxu0 0.0
        %598 = vmatprep.subr.mxu0 0.0
        %599 = vmatpush1.xpose.msra.mxu0 %v566
        %600 = vmatprep.subr.mxu0 0.0
        %601 = vmatpush2.xpose.msra.mxu0 0.0
        %602 = vmatprep.subr.mxu0 0.0
        %603 = vmatpush2.xpose.msra.mxu0 0.0
        %604 = vmatprep.subr.mxu0 0.0
        %605 = vmatpush2.xpose.msra.mxu0 0.0
        %606 = vmatprep.subr.mxu0 0.0
        %607 = vmatpush2.xpose.msra.mxu0 0.0
        %608 = vmatprep.subr.mxu0 0.0
        %609 = vmatpush2.xpose.msra.mxu0 0.0
        %610 = vmatprep.subr.mxu0 0.0
        %611 = vmatpush2.xpose.msra.mxu0 0.0
        %612 = vmatprep.subr.mxu0 0.0
        %613 = vmatpush2.xpose.msra.mxu0 0.0
        %614 = vmatprep.subr.mxu0 0.0
        %615 = vmatpush2.xpose.msra.mxu0 0.0
        %616 = vmatprep.subr.mxu0 0.0
        %617 = vmatpush2.xpose.msra.mxu0 0.0
        %618 = vmatprep.subr.mxu0 0.0
        %619 = vmatpush2.xpose.msra.mxu0 0.0
        %620 = vmatprep.subr.mxu0 0.0
        %621 = vmatpush2.xpose.msra.mxu0 0.0
        %622 = vmatprep.subr.mxu0 0.0
        %623 = vmatpush2.xpose.msra.mxu0 0.0
        %624 = vmatprep.subr.mxu0 0.0
        %625 = vmatpush2.xpose.msra.mxu0 0.0
        %626 = vmatprep.subr.mxu0 0.0
        %627 = vmatpush2.xpose.msra.mxu0 0.0
        %628 = vmatprep.subr.mxu0 0.0
        %629 = vmatpush2.xpose.msra.mxu0 0.0
        %630 = vmatprep.subr.mxu0 0.0
        %631 = vmatpush2.xpose.msra.mxu0 0.0
        %632 = vmatprep.mubr.f32.mxu0 0.0
        %633 = vmatmul.mubr.f32.gmra.mxu0 %v564
        %v634 = vpop.f32.mrf.mxu0
        %v635 = vadd.f32 0.0, %v634
        %v636 = vpop.f32.mrf.mxu0
        %637 = vdwg.mxu0
        %v638 = vsel %vm563, %v635, -inf
        %639 = vmax.xlane.f32.xlu0 %v638
        %v640 = vpop.xlane.xlu0 %639
        %v641 = vsub.f32 %v635, %v640
        %v642 = vmul.f32 %v641, 1.442695
        %v643 = vpow.pop %v642
        %v644 = vsel %vm563, %v643, 0.0
        %645 = vadd.xlane.f32.xlu0 %v644
        %v646 = vpop.xlane.xlu0 %645
        %647 = vrot.lane.b32.xlu0 %v559, 64
        %v648 = vpop.permute.xlu0 %647
        %v651 = vsel %vm563, %v643, 0
        %653 = vmatprep.subr.mxu0 0.0
        %654 = vmatpush1.msra.mxu0 0.0
        %655 = vmatprep.subr.mxu0 0.0
        %656 = vmatpush1.msra.mxu0 0.0
        %657 = vmatprep.subr.mxu0 0.0
        %658 = vmatpush1.msra.mxu0 0.0
        %659 = vmatprep.subr.mxu0 0.0
        %660 = vmatpush1.msra.mxu0 0.0
        %661 = vmatprep.subr.mxu0 0.0
        %662 = vmatpush1.msra.mxu0 0.0
        %663 = vmatprep.subr.mxu0 0.0
        %664 = vmatpush1.msra.mxu0 0.0
        %665 = vmatprep.subr.mxu0 0.0
        %666 = vmatpush1.msra.mxu0 0.0
        %667 = vmatprep.subr.mxu0 0.0
        %668 = vmatpush1.msra.mxu0 0.0
        %669 = vmatprep.subr.mxu0 0.0
        %670 = vmatpush1.msra.mxu0 0.0
        %671 = vmatprep.subr.mxu0 0.0
        %672 = vmatpush1.msra.mxu0 0.0
        %673 = vmatprep.subr.mxu0 0.0
        %674 = vmatpush1.msra.mxu0 0.0
        %675 = vmatprep.subr.mxu0 0.0
        %676 = vmatpush1.msra.mxu0 0.0
        %677 = vmatprep.subr.mxu0 0.0
        %678 = vmatpush1.msra.mxu0 0.0
        %679 = vmatprep.subr.mxu0 0.0
        %680 = vmatpush1.msra.mxu0 0.0
        %681 = vmatprep.subr.mxu0 0.0
        %682 = vmatpush1.msra.mxu0 0.0
        %683 = vmatprep.subr.mxu0 0.0
        %684 = vmatpush1.msra.mxu0 %v648
        %685 = vmatprep.subr.mxu0 0.0
        %686 = vmatpush2.msra.mxu0 0.0
        %687 = vmatprep.subr.mxu0 0.0
        %688 = vmatpush2.msra.mxu0 0.0
        %689 = vmatprep.subr.mxu0 0.0
        %690 = vmatpush2.msra.mxu0 0.0
        %691 = vmatprep.subr.mxu0 0.0
        %692 = vmatpush2.msra.mxu0 0.0
        %693 = vmatprep.subr.mxu0 0.0
        %694 = vmatpush2.msra.mxu0 0.0
        %695 = vmatprep.subr.mxu0 0.0
        %696 = vmatpush2.msra.mxu0 0.0
        %697 = vmatprep.subr.mxu0 0.0
        %698 = vmatpush2.msra.mxu0 0.0
        %699 = vmatprep.subr.mxu0 0.0
        %700 = vmatpush2.msra.mxu0 0.0
        %701 = vmatprep.subr.mxu0 0.0
        %702 = vmatpush2.msra.mxu0 0.0
        %703 = vmatprep.subr.mxu0 0.0
        %704 = vmatpush2.msra.mxu0 0.0
        %705 = vmatprep.subr.mxu0 0.0
        %706 = vmatpush2.msra.mxu0 0.0
        %707 = vmatprep.subr.mxu0 0.0
        %708 = vmatpush2.msra.mxu0 0.0
        %709 = vmatprep.subr.mxu0 0.0
        %710 = vmatpush2.msra.mxu0 0.0
        %711 = vmatprep.subr.mxu0 0.0
        %712 = vmatpush2.msra.mxu0 0.0
        %713 = vmatprep.subr.mxu0 0.0
        %714 = vmatpush2.msra.mxu0 0.0
        %715 = vmatprep.subr.mxu0 0.0
        %716 = vmatpush2.msra.mxu0 0.0
        %717 = vmatprep.mubr.f32.mxu0 0.0
        %718 = vmatmul.mubr.f32.gmra.mxu0 %v651
        %v719 = vpop.f32.mrf.mxu0
        %v720 = vadd.f32 0.0, %v719
        %v721 = vpop.f32.mrf.mxu0
        %722 = vdwg.mxu0
        %v723 = vrcp.pop %v646
        %v724 = vmul.f32 %v720, %v723
        %725 = vst.msk [vmem:[#allocation3] sm:$0xff] %vm563, %v724
        %v726 = vld [vmem:[#allocation2] sm:$0xff]
        %728 = vrot.lane.b32.xlu0 %v726, 120
        %v729 = vpop.permute.xlu0 %728
        %730 = vrot.lane.b32.xlu0 %v726, 88
        %v731 = vpop.permute.xlu0 %730
        %v732 = vsel %vm563, %v729, 0
        %v734 = vsel %vm563, %v731, 0
        %736 = vmatprep.subr.mxu0 0.0
        %737 = vmatpush1.xpose.msra.mxu0 0.0
        %738 = vmatprep.subr.mxu0 0.0
        %739 = vmatpush1.xpose.msra.mxu0 0.0
        %740 = vmatprep.subr.mxu0 0.0
        %741 = vmatpush1.xpose.msra.mxu0 0.0
        %742 = vmatprep.subr.mxu0 0.0
        %743 = vmatpush1.xpose.msra.mxu0 0.0
        %744 = vmatprep.subr.mxu0 0.0
        %745 = vmatpush1.xpose.msra.mxu0 0.0
        %746 = vmatprep.subr.mxu0 0.0
        %747 = vmatpush1.xpose.msra.mxu0 0.0
        %748 = vmatprep.subr.mxu0 0.0
        %749 = vmatpush1.xpose.msra.mxu0 0.0
        %750 = vmatprep.subr.mxu0 0.0
        %751 = vmatpush1.xpose.msra.mxu0 0.0
        %752 = vmatprep.subr.mxu0 0.0
        %753 = vmatpush1.xpose.msra.mxu0 0.0
        %754 = vmatprep.subr.mxu0 0.0
        %755 = vmatpush1.xpose.msra.mxu0 0.0
        %756 = vmatprep.subr.mxu0 0.0
        %757 = vmatpush1.xpose.msra.mxu0 0.0
        %758 = vmatprep.subr.mxu0 0.0
        %759 = vmatpush1.xpose.msra.mxu0 0.0
        %760 = vmatprep.subr.mxu0 0.0
        %761 = vmatpush1.xpose.msra.mxu0 0.0
        %762 = vmatprep.subr.mxu0 0.0
        %763 = vmatpush1.xpose.msra.mxu0 0.0
        %764 = vmatprep.subr.mxu0 0.0
        %765 = vmatpush1.xpose.msra.mxu0 0.0
        %766 = vmatprep.subr.mxu0 0.0
        %767 = vmatpush1.xpose.msra.mxu0 %v734
        %768 = vmatprep.subr.mxu0 0.0
        %769 = vmatpush2.xpose.msra.mxu0 0.0
        %770 = vmatprep.subr.mxu0 0.0
        %771 = vmatpush2.xpose.msra.mxu0 0.0
        %772 = vmatprep.subr.mxu0 0.0
        %773 = vmatpush2.xpose.msra.mxu0 0.0
        %774 = vmatprep.subr.mxu0 0.0
        %775 = vmatpush2.xpose.msra.mxu0 0.0
        %776 = vmatprep.subr.mxu0 0.0
        %777 = vmatpush2.xpose.msra.mxu0 0.0
        %778 = vmatprep.subr.mxu0 0.0
        %779 = vmatpush2.xpose.msra.mxu0 0.0
        %780 = vmatprep.subr.mxu0 0.0
        %781 = vmatpush2.xpose.msra.mxu0 0.0
        %782 = vmatprep.subr.mxu0 0.0
        %783 = vmatpush2.xpose.msra.mxu0 0.0
        %784 = vmatprep.subr.mxu0 0.0
        %785 = vmatpush2.xpose.msra.mxu0 0.0
        %786 = vmatprep.subr.mxu0 0.0
        %787 = vmatpush2.xpose.msra.mxu0 0.0
        %788 = vmatprep.subr.mxu0 0.0
        %789 = vmatpush2.xpose.msra.mxu0 0.0
        %790 = vmatprep.subr.mxu0 0.0
        %791 = vmatpush2.xpose.msra.mxu0 0.0
        %792 = vmatprep.subr.mxu0 0.0
        %793 = vmatpush2.xpose.msra.mxu0 0.0
        %794 = vmatprep.subr.mxu0 0.0
        %795 = vmatpush2.xpose.msra.mxu0 0.0
        %796 = vmatprep.subr.mxu0 0.0
        %797 = vmatpush2.xpose.msra.mxu0 0.0
        %798 = vmatprep.subr.mxu0 0.0
        %799 = vmatpush2.xpose.msra.mxu0 0.0
        %800 = vmatprep.mubr.f32.mxu0 0.0
        %801 = vmatmul.mubr.f32.gmra.mxu0 %v732
        %v802 = vpop.f32.mrf.mxu0
        %v803 = vadd.f32 0.0, %v802
        %v804 = vpop.f32.mrf.mxu0
        %805 = vdwg.mxu0
        %v806 = vsel %vm563, %v803, -inf
        %807 = vmax.xlane.f32.xlu0 %v806
        %v808 = vpop.xlane.xlu0 %807
        %v809 = vsub.f32 %v803, %v808
        %v810 = vmul.f32 %v809, 1.442695
        %v811 = vpow.pop %v810
        %v812 = vsel %vm563, %v811, 0.0
        %813 = vadd.xlane.f32.xlu0 %v812
        %v814 = vpop.xlane.xlu0 %813
        %815 = vrot.lane.b32.xlu0 %v726, 56
        %v816 = vpop.permute.xlu0 %815
        %v819 = vsel %vm563, %v811, 0
        %821 = vmatprep.subr.mxu0 0.0
        %822 = vmatpush1.msra.mxu0 0.0
        %823 = vmatprep.subr.mxu0 0.0
        %824 = vmatpush1.msra.mxu0 0.0
        %825 = vmatprep.subr.mxu0 0.0
        %826 = vmatpush1.msra.mxu0 0.0
        %827 = vmatprep.subr.mxu0 0.0
        %828 = vmatpush1.msra.mxu0 0.0
        %829 = vmatprep.subr.mxu0 0.0
        %830 = vmatpush1.msra.mxu0 0.0
        %831 = vmatprep.subr.mxu0 0.0
        %832 = vmatpush1.msra.mxu0 0.0
        %833 = vmatprep.subr.mxu0 0.0
        %834 = vmatpush1.msra.mxu0 0.0
        %835 = vmatprep.subr.mxu0 0.0
        %836 = vmatpush1.msra.mxu0 0.0
        %837 = vmatprep.subr.mxu0 0.0
        %838 = vmatpush1.msra.mxu0 0.0
        %839 = vmatprep.subr.mxu0 0.0
        %840 = vmatpush1.msra.mxu0 0.0
        %841 = vmatprep.subr.mxu0 0.0
        %842 = vmatpush1.msra.mxu0 0.0
        %843 = vmatprep.subr.mxu0 0.0
        %844 = vmatpush1.msra.mxu0 0.0
        %845 = vmatprep.subr.mxu0 0.0
        %846 = vmatpush1.msra.mxu0 0.0
        %847 = vmatprep.subr.mxu0 0.0
        %848 = vmatpush1.msra.mxu0 0.0
        %849 = vmatprep.subr.mxu0 0.0
        %850 = vmatpush1.msra.mxu0 0.0
        %851 = vmatprep.subr.mxu0 0.0
        %852 = vmatpush1.msra.mxu0 %v816
        %853 = vmatprep.subr.mxu0 0.0
        %854 = vmatpush2.msra.mxu0 0.0
        %855 = vmatprep.subr.mxu0 0.0
        %856 = vmatpush2.msra.mxu0 0.0
        %857 = vmatprep.subr.mxu0 0.0
        %858 = vmatpush2.msra.mxu0 0.0
        %859 = vmatprep.subr.mxu0 0.0
        %860 = vmatpush2.msra.mxu0 0.0
        %861 = vmatprep.subr.mxu0 0.0
        %862 = vmatpush2.msra.mxu0 0.0
        %863 = vmatprep.subr.mxu0 0.0
        %864 = vmatpush2.msra.mxu0 0.0
        %865 = vmatprep.subr.mxu0 0.0
        %866 = vmatpush2.msra.mxu0 0.0
        %867 = vmatprep.subr.mxu0 0.0
        %868 = vmatpush2.msra.mxu0 0.0
        %869 = vmatprep.subr.mxu0 0.0
        %870 = vmatpush2.msra.mxu0 0.0
        %871 = vmatprep.subr.mxu0 0.0
        %872 = vmatpush2.msra.mxu0 0.0
        %873 = vmatprep.subr.mxu0 0.0
        %874 = vmatpush2.msra.mxu0 0.0
        %875 = vmatprep.subr.mxu0 0.0
        %876 = vmatpush2.msra.mxu0 0.0
        %877 = vmatprep.subr.mxu0 0.0
        %878 = vmatpush2.msra.mxu0 0.0
        %879 = vmatprep.subr.mxu0 0.0
        %880 = vmatpush2.msra.mxu0 0.0
        %881 = vmatprep.subr.mxu0 0.0
        %882 = vmatpush2.msra.mxu0 0.0
        %883 = vmatprep.subr.mxu0 0.0
        %884 = vmatpush2.msra.mxu0 0.0
        %885 = vmatprep.mubr.f32.mxu0 0.0
        %886 = vmatmul.mubr.f32.gmra.mxu0 %v819
        %v887 = vpop.f32.mrf.mxu0
        %v888 = vadd.f32 0.0, %v887
        %v889 = vpop.f32.mrf.mxu0
        %890 = vdwg.mxu0
        %v891 = vrcp.pop %v814
        %v892 = vmul.f32 %v888, %v891
        %894 = vrot.lane.b32.xlu0 %v892, 8
        %v895 = vpop.permute.xlu0 %894
        %vm897 = vcmask 130112
        %898 = vst.msk [vmem:[#allocation3] sm:$0xff] %vm897, %v895
        %v899 = vld [vmem:[#allocation2] sm:$0xff]
        %901 = vrot.lane.b32.xlu0 %v899, 112
        %v902 = vpop.permute.xlu0 %901
        %903 = vrot.lane.b32.xlu0 %v899, 80
        %v904 = vpop.permute.xlu0 %903
        %v905 = vsel %vm563, %v902, 0
        %v907 = vsel %vm563, %v904, 0
        %909 = vmatprep.subr.mxu0 0.0
        %910 = vmatpush1.xpose.msra.mxu0 0.0
        %911 = vmatprep.subr.mxu0 0.0
        %912 = vmatpush1.xpose.msra.mxu0 0.0
        %913 = vmatprep.subr.mxu0 0.0
        %914 = vmatpush1.xpose.msra.mxu0 0.0
        %915 = vmatprep.subr.mxu0 0.0
        %916 = vmatpush1.xpose.msra.mxu0 0.0
        %917 = vmatprep.subr.mxu0 0.0
        %918 = vmatpush1.xpose.msra.mxu0 0.0
        %919 = vmatprep.subr.mxu0 0.0
        %920 = vmatpush1.xpose.msra.mxu0 0.0
        %921 = vmatprep.subr.mxu0 0.0
        %922 = vmatpush1.xpose.msra.mxu0 0.0
        %923 = vmatprep.subr.mxu0 0.0
        %924 = vmatpush1.xpose.msra.mxu0 0.0
        %925 = vmatprep.subr.mxu0 0.0
        %926 = vmatpush1.xpose.msra.mxu0 0.0
        %927 = vmatprep.subr.mxu0 0.0
        %928 = vmatpush1.xpose.msra.mxu0 0.0
        %929 = vmatprep.subr.mxu0 0.0
        %930 = vmatpush1.xpose.msra.mxu0 0.0
        %931 = vmatprep.subr.mxu0 0.0
        %932 = vmatpush1.xpose.msra.mxu0 0.0
        %933 = vmatprep.subr.mxu0 0.0
        %934 = vmatpush1.xpose.msra.mxu0 0.0
        %935 = vmatprep.subr.mxu0 0.0
        %936 = vmatpush1.xpose.msra.mxu0 0.0
        %937 = vmatprep.subr.mxu0 0.0
        %938 = vmatpush1.xpose.msra.mxu0 0.0
        %939 = vmatprep.subr.mxu0 0.0
        %940 = vmatpush1.xpose.msra.mxu0 %v907
        %941 = vmatprep.subr.mxu0 0.0
        %942 = vmatpush2.xpose.msra.mxu0 0.0
        %943 = vmatprep.subr.mxu0 0.0
        %944 = vmatpush2.xpose.msra.mxu0 0.0
        %945 = vmatprep.subr.mxu0 0.0
        %946 = vmatpush2.xpose.msra.mxu0 0.0
        %947 = vmatprep.subr.mxu0 0.0
        %948 = vmatpush2.xpose.msra.mxu0 0.0
        %949 = vmatprep.subr.mxu0 0.0
        %950 = vmatpush2.xpose.msra.mxu0 0.0
        %951 = vmatprep.subr.mxu0 0.0
        %952 = vmatpush2.xpose.msra.mxu0 0.0
        %953 = vmatprep.subr.mxu0 0.0
        %954 = vmatpush2.xpose.msra.mxu0 0.0
        %955 = vmatprep.subr.mxu0 0.0
        %956 = vmatpush2.xpose.msra.mxu0 0.0
        %957 = vmatprep.subr.mxu0 0.0
        %958 = vmatpush2.xpose.msra.mxu0 0.0
        %959 = vmatprep.subr.mxu0 0.0
        %960 = vmatpush2.xpose.msra.mxu0 0.0
        %961 = vmatprep.subr.mxu0 0.0
        %962 = vmatpush2.xpose.msra.mxu0 0.0
        %963 = vmatprep.subr.mxu0 0.0
        %964 = vmatpush2.xpose.msra.mxu0 0.0
        %965 = vmatprep.subr.mxu0 0.0
        %966 = vmatpush2.xpose.msra.mxu0 0.0
        %967 = vmatprep.subr.mxu0 0.0
        %968 = vmatpush2.xpose.msra.mxu0 0.0
        %969 = vmatprep.subr.mxu0 0.0
        %970 = vmatpush2.xpose.msra.mxu0 0.0
        %971 = vmatprep.subr.mxu0 0.0
        %972 = vmatpush2.xpose.msra.mxu0 0.0
        %973 = vmatprep.mubr.f32.mxu0 0.0
        %974 = vmatmul.mubr.f32.gmra.mxu0 %v905
        %v975 = vpop.f32.mrf.mxu0
        %v976 = vadd.f32 0.0, %v975
        %v977 = vpop.f32.mrf.mxu0
        %978 = vdwg.mxu0
        %v979 = vsel %vm563, %v976, -inf
        %980 = vmax.xlane.f32.xlu0 %v979
        %v981 = vpop.xlane.xlu0 %980
        %v982 = vsub.f32 %v976, %v981
        %v983 = vmul.f32 %v982, 1.442695
        %v984 = vpow.pop %v983
        %v985 = vsel %vm563, %v984, 0.0
        %986 = vadd.xlane.f32.xlu0 %v985
        %v987 = vpop.xlane.xlu0 %986
        %988 = vrot.lane.b32.xlu0 %v899, 48
        %v989 = vpop.permute.xlu0 %988
        %v992 = vsel %vm563, %v984, 0
        %994 = vmatprep.subr.mxu0 0.0
        %995 = vmatpush1.msra.mxu0 0.0
        %996 = vmatprep.subr.mxu0 0.0
        %997 = vmatpush1.msra.mxu0 0.0
        %998 = vmatprep.subr.mxu0 0.0
        %999 = vmatpush1.msra.mxu0 0.0
        %1000 = vmatprep.subr.mxu0 0.0
        %1001 = vmatpush1.msra.mxu0 0.0
        %1002 = vmatprep.subr.mxu0 0.0
        %1003 = vmatpush1.msra.mxu0 0.0
        %1004 = vmatprep.subr.mxu0 0.0
        %1005 = vmatpush1.msra.mxu0 0.0
        %1006 = vmatprep.subr.mxu0 0.0
        %1007 = vmatpush1.msra.mxu0 0.0
        %1008 = vmatprep.subr.mxu0 0.0
        %1009 = vmatpush1.msra.mxu0 0.0
        %1010 = vmatprep.subr.mxu0 0.0
        %1011 = vmatpush1.msra.mxu0 0.0
        %1012 = vmatprep.subr.mxu0 0.0
        %1013 = vmatpush1.msra.mxu0 0.0
        %1014 = vmatprep.subr.mxu0 0.0
        %1015 = vmatpush1.msra.mxu0 0.0
        %1016 = vmatprep.subr.mxu0 0.0
        %1017 = vmatpush1.msra.mxu0 0.0
        %1018 = vmatprep.subr.mxu0 0.0
        %1019 = vmatpush1.msra.mxu0 0.0
        %1020 = vmatprep.subr.mxu0 0.0
        %1021 = vmatpush1.msra.mxu0 0.0
        %1022 = vmatprep.subr.mxu0 0.0
        %1023 = vmatpush1.msra.mxu0 0.0
        %1024 = vmatprep.subr.mxu0 0.0
        %1025 = vmatpush1.msra.mxu0 %v989
        %1026 = vmatprep.subr.mxu0 0.0
        %1027 = vmatpush2.msra.mxu0 0.0
        %1028 = vmatprep.subr.mxu0 0.0
        %1029 = vmatpush2.msra.mxu0 0.0
        %1030 = vmatprep.subr.mxu0 0.0
        %1031 = vmatpush2.msra.mxu0 0.0
        %1032 = vmatprep.subr.mxu0 0.0
        %1033 = vmatpush2.msra.mxu0 0.0
        %1034 = vmatprep.subr.mxu0 0.0
        %1035 = vmatpush2.msra.mxu0 0.0
        %1036 = vmatprep.subr.mxu0 0.0
        %1037 = vmatpush2.msra.mxu0 0.0
        %1038 = vmatprep.subr.mxu0 0.0
        %1039 = vmatpush2.msra.mxu0 0.0
        %1040 = vmatprep.subr.mxu0 0.0
        %1041 = vmatpush2.msra.mxu0 0.0
        %1042 = vmatprep.subr.mxu0 0.0
        %1043 = vmatpush2.msra.mxu0 0.0
        %1044 = vmatprep.subr.mxu0 0.0
        %1045 = vmatpush2.msra.mxu0 0.0
        %1046 = vmatprep.subr.mxu0 0.0
        %1047 = vmatpush2.msra.mxu0 0.0
        %1048 = vmatprep.subr.mxu0 0.0
        %1049 = vmatpush2.msra.mxu0 0.0
        %1050 = vmatprep.subr.mxu0 0.0
        %1051 = vmatpush2.msra.mxu0 0.0
        %1052 = vmatprep.subr.mxu0 0.0
        %1053 = vmatpush2.msra.mxu0 0.0
        %1054 = vmatprep.subr.mxu0 0.0
        %1055 = vmatpush2.msra.mxu0 0.0
        %1056 = vmatprep.subr.mxu0 0.0
        %1057 = vmatpush2.msra.mxu0 0.0
        %1058 = vmatprep.mubr.f32.mxu0 0.0
        %1059 = vmatmul.mubr.f32.gmra.mxu0 %v992
        %v1060 = vpop.f32.mrf.mxu0
        %v1061 = vadd.f32 0.0, %v1060
        %v1062 = vpop.f32.mrf.mxu0
        %1063 = vdwg.mxu0
        %v1064 = vrcp.pop %v987
        %v1065 = vmul.f32 %v1061, %v1064
        %1067 = vrot.lane.b32.xlu0 %v1065, 16
        %v1068 = vpop.permute.xlu0 %1067
        %vm1070 = vcmask 195712
        %1071 = vst.msk [vmem:[#allocation3] sm:$0xff] %vm1070, %v1068
        %v1072 = vld [vmem:[#allocation2] sm:$0xff]
        %1074 = vrot.lane.b32.xlu0 %v1072, 104
        %v1075 = vpop.permute.xlu0 %1074
        %1076 = vrot.lane.b32.xlu0 %v1072, 72
        %v1077 = vpop.permute.xlu0 %1076
        %v1078 = vsel %vm563, %v1075, 0
        %v1080 = vsel %vm563, %v1077, 0
        %1082 = vmatprep.subr.mxu0 0.0
        %1083 = vmatpush1.xpose.msra.mxu0 0.0
        %1084 = vmatprep.subr.mxu0 0.0
        %1085 = vmatpush1.xpose.msra.mxu0 0.0
        %1086 = vmatprep.subr.mxu0 0.0
        %1087 = vmatpush1.xpose.msra.mxu0 0.0
        %1088 = vmatprep.subr.mxu0 0.0
        %1089 = vmatpush1.xpose.msra.mxu0 0.0
        %1090 = vmatprep.subr.mxu0 0.0
        %1091 = vmatpush1.xpose.msra.mxu0 0.0
        %1092 = vmatprep.subr.mxu0 0.0
        %1093 = vmatpush1.xpose.msra.mxu0 0.0
        %1094 = vmatprep.subr.mxu0 0.0
        %1095 = vmatpush1.xpose.msra.mxu0 0.0
        %1096 = vmatprep.subr.mxu0 0.0
        %1097 = vmatpush1.xpose.msra.mxu0 0.0
        %1098 = vmatprep.subr.mxu0 0.0
        %1099 = vmatpush1.xpose.msra.mxu0 0.0
        %1100 = vmatprep.subr.mxu0 0.0
        %1101 = vmatpush1.xpose.msra.mxu0 0.0
        %1102 = vmatprep.subr.mxu0 0.0
        %1103 = vmatpush1.xpose.msra.mxu0 0.0
        %1104 = vmatprep.subr.mxu0 0.0
        %1105 = vmatpush1.xpose.msra.mxu0 0.0
        %1106 = vmatprep.subr.mxu0 0.0
        %1107 = vmatpush1.xpose.msra.mxu0 0.0
        %1108 = vmatprep.subr.mxu0 0.0
        %1109 = vmatpush1.xpose.msra.mxu0 0.0
        %1110 = vmatprep.subr.mxu0 0.0
        %1111 = vmatpush1.xpose.msra.mxu0 0.0
        %1112 = vmatprep.subr.mxu0 0.0
        %1113 = vmatpush1.xpose.msra.mxu0 %v1080
        %1114 = vmatprep.subr.mxu0 0.0
        %1115 = vmatpush2.xpose.msra.mxu0 0.0
        %1116 = vmatprep.subr.mxu0 0.0
        %1117 = vmatpush2.xpose.msra.mxu0 0.0
        %1118 = vmatprep.subr.mxu0 0.0
        %1119 = vmatpush2.xpose.msra.mxu0 0.0
        %1120 = vmatprep.subr.mxu0 0.0
        %1121 = vmatpush2.xpose.msra.mxu0 0.0
        %1122 = vmatprep.subr.mxu0 0.0
        %1123 = vmatpush2.xpose.msra.mxu0 0.0
        %1124 = vmatprep.subr.mxu0 0.0
        %1125 = vmatpush2.xpose.msra.mxu0 0.0
        %1126 = vmatprep.subr.mxu0 0.0
        %1127 = vmatpush2.xpose.msra.mxu0 0.0
        %1128 = vmatprep.subr.mxu0 0.0
        %1129 = vmatpush2.xpose.msra.mxu0 0.0
        %1130 = vmatprep.subr.mxu0 0.0
        %1131 = vmatpush2.xpose.msra.mxu0 0.0
        %1132 = vmatprep.subr.mxu0 0.0
        %1133 = vmatpush2.xpose.msra.mxu0 0.0
        %1134 = vmatprep.subr.mxu0 0.0
        %1135 = vmatpush2.xpose.msra.mxu0 0.0
        %1136 = vmatprep.subr.mxu0 0.0
        %1137 = vmatpush2.xpose.msra.mxu0 0.0
        %1138 = vmatprep.subr.mxu0 0.0
        %1139 = vmatpush2.xpose.msra.mxu0 0.0
        %1140 = vmatprep.subr.mxu0 0.0
        %1141 = vmatpush2.xpose.msra.mxu0 0.0
        %1142 = vmatprep.subr.mxu0 0.0
        %1143 = vmatpush2.xpose.msra.mxu0 0.0
        %1144 = vmatprep.subr.mxu0 0.0
        %1145 = vmatpush2.xpose.msra.mxu0 0.0
        %1146 = vmatprep.mubr.f32.mxu0 0.0
        %1147 = vmatmul.mubr.f32.gmra.mxu0 %v1078
        %v1148 = vpop.f32.mrf.mxu0
        %v1149 = vadd.f32 0.0, %v1148
        %v1150 = vpop.f32.mrf.mxu0
        %1151 = vdwg.mxu0
        %v1152 = vsel %vm563, %v1149, -inf
        %1153 = vmax.xlane.f32.xlu0 %v1152
        %v1154 = vpop.xlane.xlu0 %1153
        %v1155 = vsub.f32 %v1149, %v1154
        %v1156 = vmul.f32 %v1155, 1.442695
        %v1157 = vpow.pop %v1156
        %v1158 = vsel %vm563, %v1157, 0.0
        %1159 = vadd.xlane.f32.xlu0 %v1158
        %v1160 = vpop.xlane.xlu0 %1159
        %1161 = vrot.lane.b32.xlu0 %v1072, 40
        %v1162 = vpop.permute.xlu0 %1161
        %v1165 = vsel %vm563, %v1157, 0
        %1167 = vmatprep.subr.mxu0 0.0
        %1168 = vmatpush1.msra.mxu0 0.0
        %1169 = vmatprep.subr.mxu0 0.0
        %1170 = vmatpush1.msra.mxu0 0.0
        %1171 = vmatprep.subr.mxu0 0.0
        %1172 = vmatpush1.msra.mxu0 0.0
        %1173 = vmatprep.subr.mxu0 0.0
        %1174 = vmatpush1.msra.mxu0 0.0
        %1175 = vmatprep.subr.mxu0 0.0
        %1176 = vmatpush1.msra.mxu0 0.0
        %1177 = vmatprep.subr.mxu0 0.0
        %1178 = vmatpush1.msra.mxu0 0.0
        %1179 = vmatprep.subr.mxu0 0.0
        %1180 = vmatpush1.msra.mxu0 0.0
        %1181 = vmatprep.subr.mxu0 0.0
        %1182 = vmatpush1.msra.mxu0 0.0
        %1183 = vmatprep.subr.mxu0 0.0
        %1184 = vmatpush1.msra.mxu0 0.0
        %1185 = vmatprep.subr.mxu0 0.0
        %1186 = vmatpush1.msra.mxu0 0.0
        %1187 = vmatprep.subr.mxu0 0.0
        %1188 = vmatpush1.msra.mxu0 0.0
        %1189 = vmatprep.subr.mxu0 0.0
        %1190 = vmatpush1.msra.mxu0 0.0
        %1191 = vmatprep.subr.mxu0 0.0
        %1192 = vmatpush1.msra.mxu0 0.0
        %1193 = vmatprep.subr.mxu0 0.0
        %1194 = vmatpush1.msra.mxu0 0.0
        %1195 = vmatprep.subr.mxu0 0.0
        %1196 = vmatpush1.msra.mxu0 0.0
        %1197 = vmatprep.subr.mxu0 0.0
        %1198 = vmatpush1.msra.mxu0 %v1162
        %1199 = vmatprep.subr.mxu0 0.0
        %1200 = vmatpush2.msra.mxu0 0.0
        %1201 = vmatprep.subr.mxu0 0.0
        %1202 = vmatpush2.msra.mxu0 0.0
        %1203 = vmatprep.subr.mxu0 0.0
        %1204 = vmatpush2.msra.mxu0 0.0
        %1205 = vmatprep.subr.mxu0 0.0
        %1206 = vmatpush2.msra.mxu0 0.0
        %1207 = vmatprep.subr.mxu0 0.0
        %1208 = vmatpush2.msra.mxu0 0.0
        %1209 = vmatprep.subr.mxu0 0.0
        %1210 = vmatpush2.msra.mxu0 0.0
        %1211 = vmatprep.subr.mxu0 0.0
        %1212 = vmatpush2.msra.mxu0 0.0
        %1213 = vmatprep.subr.mxu0 0.0
        %1214 = vmatpush2.msra.mxu0 0.0
        %1215 = vmatprep.subr.mxu0 0.0
        %1216 = vmatpush2.msra.mxu0 0.0
        %1217 = vmatprep.subr.mxu0 0.0
        %1218 = vmatpush2.msra.mxu0 0.0
        %1219 = vmatprep.subr.mxu0 0.0
        %1220 = vmatpush2.msra.mxu0 0.0
        %1221 = vmatprep.subr.mxu0 0.0
        %1222 = vmatpush2.msra.mxu0 0.0
        %1223 = vmatprep.subr.mxu0 0.0
        %1224 = vmatpush2.msra.mxu0 0.0
        %1225 = vmatprep.subr.mxu0 0.0
        %1226 = vmatpush2.msra.mxu0 0.0
        %1227 = vmatprep.subr.mxu0 0.0
        %1228 = vmatpush2.msra.mxu0 0.0
        %1229 = vmatprep.subr.mxu0 0.0
        %1230 = vmatpush2.msra.mxu0 0.0
        %1231 = vmatprep.mubr.f32.mxu0 0.0
        %1232 = vmatmul.mubr.f32.gmra.mxu0 %v1165
        %v1233 = vpop.f32.mrf.mxu0
        %v1234 = vadd.f32 0.0, %v1233
        %v1235 = vpop.f32.mrf.mxu0
        %1236 = vdwg.mxu0
        %v1237 = vrcp.pop %v1160
        %v1238 = vmul.f32 %v1234, %v1237
        %1240 = vrot.lane.b32.xlu0 %v1238, 24
        %v1241 = vpop.permute.xlu0 %1240
        %vm1243 = vcmask 261312
        %1244 = vst.msk [vmem:[#allocation3] sm:$0xff] %vm1243, %v1241
        %s1245 = scalar_lea.vmem [#allocation2], 8
        %v1246 = vld [vmem:[%s1245] sm:$0xff]
        %1248 = vrot.lane.b32.xlu0 %v1246, 96
        %v1249 = vpop.permute.xlu0 %1248
        %v1250 = vsel %vm563, %v1246, 0
        %v1252 = vsel %vm563, %v1249, 0
        %1254 = vmatprep.subr.mxu0 0.0
        %1255 = vmatpush1.xpose.msra.mxu0 0.0
        %1256 = vmatprep.subr.mxu0 0.0
        %1257 = vmatpush1.xpose.msra.mxu0 0.0
        %1258 = vmatprep.subr.mxu0 0.0
        %1259 = vmatpush1.xpose.msra.mxu0 0.0
        %1260 = vmatprep.subr.mxu0 0.0
        %1261 = vmatpush1.xpose.msra.mxu0 0.0
        %1262 = vmatprep.subr.mxu0 0.0
        %1263 = vmatpush1.xpose.msra.mxu0 0.0
        %1264 = vmatprep.subr.mxu0 0.0
        %1265 = vmatpush1.xpose.msra.mxu0 0.0
        %1266 = vmatprep.subr.mxu0 0.0
        %1267 = vmatpush1.xpose.msra.mxu0 0.0
        %1268 = vmatprep.subr.mxu0 0.0
        %1269 = vmatpush1.xpose.msra.mxu0 0.0
        %1270 = vmatprep.subr.mxu0 0.0
        %1271 = vmatpush1.xpose.msra.mxu0 0.0
        %1272 = vmatprep.subr.mxu0 0.0
        %1273 = vmatpush1.xpose.msra.mxu0 0.0
        %1274 = vmatprep.subr.mxu0 0.0
        %1275 = vmatpush1.xpose.msra.mxu0 0.0
        %1276 = vmatprep.subr.mxu0 0.0
        %1277 = vmatpush1.xpose.msra.mxu0 0.0
        %1278 = vmatprep.subr.mxu0 0.0
        %1279 = vmatpush1.xpose.msra.mxu0 0.0
        %1280 = vmatprep.subr.mxu0 0.0
        %1281 = vmatpush1.xpose.msra.mxu0 0.0
        %1282 = vmatprep.subr.mxu0 0.0
        %1283 = vmatpush1.xpose.msra.mxu0 0.0
        %1284 = vmatprep.subr.mxu0 0.0
        %1285 = vmatpush1.xpose.msra.mxu0 %v1252
        %1286 = vmatprep.subr.mxu0 0.0
        %1287 = vmatpush2.xpose.msra.mxu0 0.0
        %1288 = vmatprep.subr.mxu0 0.0
        %1289 = vmatpush2.xpose.msra.mxu0 0.0
        %1290 = vmatprep.subr.mxu0 0.0
        %1291 = vmatpush2.xpose.msra.mxu0 0.0
        %1292 = vmatprep.subr.mxu0 0.0
        %1293 = vmatpush2.xpose.msra.mxu0 0.0
        %1294 = vmatprep.subr.mxu0 0.0
        %1295 = vmatpush2.xpose.msra.mxu0 0.0
        %1296 = vmatprep.subr.mxu0 0.0
        %1297 = vmatpush2.xpose.msra.mxu0 0.0
        %1298 = vmatprep.subr.mxu0 0.0
        %1299 = vmatpush2.xpose.msra.mxu0 0.0
        %1300 = vmatprep.subr.mxu0 0.0
        %1301 = vmatpush2.xpose.msra.mxu0 0.0
        %1302 = vmatprep.subr.mxu0 0.0
        %1303 = vmatpush2.xpose.msra.mxu0 0.0
        %1304 = vmatprep.subr.mxu0 0.0
        %1305 = vmatpush2.xpose.msra.mxu0 0.0
        %1306 = vmatprep.subr.mxu0 0.0
        %1307 = vmatpush2.xpose.msra.mxu0 0.0
        %1308 = vmatprep.subr.mxu0 0.0
        %1309 = vmatpush2.xpose.msra.mxu0 0.0
        %1310 = vmatprep.subr.mxu0 0.0
        %1311 = vmatpush2.xpose.msra.mxu0 0.0
        %1312 = vmatprep.subr.mxu0 0.0
        %1313 = vmatpush2.xpose.msra.mxu0 0.0
        %1314 = vmatprep.subr.mxu0 0.0
        %1315 = vmatpush2.xpose.msra.mxu0 0.0
        %1316 = vmatprep.subr.mxu0 0.0
        %1317 = vmatpush2.xpose.msra.mxu0 0.0
        %1318 = vmatprep.mubr.f32.mxu0 0.0
        %1319 = vmatmul.mubr.f32.gmra.mxu0 %v1250
        %v1320 = vpop.f32.mrf.mxu0
        %v1321 = vadd.f32 0.0, %v1320
        %v1322 = vpop.f32.mrf.mxu0
        %1323 = vdwg.mxu0
        %v1324 = vsel %vm563, %v1321, -inf
        %1325 = vmax.xlane.f32.xlu0 %v1324
        %v1326 = vpop.xlane.xlu0 %1325
        %v1327 = vsub.f32 %v1321, %v1326
        %v1328 = vmul.f32 %v1327, 1.442695
        %v1329 = vpow.pop %v1328
        %v1330 = vsel %vm563, %v1329, 0.0
        %1331 = vadd.xlane.f32.xlu0 %v1330
        %v1332 = vpop.xlane.xlu0 %1331
        %1333 = vrot.lane.b32.xlu0 %v1246, 64
        %v1334 = vpop.permute.xlu0 %1333
        %v1337 = vsel %vm563, %v1329, 0
        %1339 = vmatprep.subr.mxu0 0.0
        %1340 = vmatpush1.msra.mxu0 0.0
        %1341 = vmatprep.subr.mxu0 0.0
        %1342 = vmatpush1.msra.mxu0 0.0
        %1343 = vmatprep.subr.mxu0 0.0
        %1344 = vmatpush1.msra.mxu0 0.0
        %1345 = vmatprep.subr.mxu0 0.0
        %1346 = vmatpush1.msra.mxu0 0.0
        %1347 = vmatprep.subr.mxu0 0.0
        %1348 = vmatpush1.msra.mxu0 0.0
        %1349 = vmatprep.subr.mxu0 0.0
        %1350 = vmatpush1.msra.mxu0 0.0
        %1351 = vmatprep.subr.mxu0 0.0
        %1352 = vmatpush1.msra.mxu0 0.0
        %1353 = vmatprep.subr.mxu0 0.0
        %1354 = vmatpush1.msra.mxu0 0.0
        %1355 = vmatprep.subr.mxu0 0.0
        %1356 = vmatpush1.msra.mxu0 0.0
        %1357 = vmatprep.subr.mxu0 0.0
        %1358 = vmatpush1.msra.mxu0 0.0
        %1359 = vmatprep.subr.mxu0 0.0
        %1360 = vmatpush1.msra.mxu0 0.0
        %1361 = vmatprep.subr.mxu0 0.0
        %1362 = vmatpush1.msra.mxu0 0.0
        %1363 = vmatprep.subr.mxu0 0.0
        %1364 = vmatpush1.msra.mxu0 0.0
        %1365 = vmatprep.subr.mxu0 0.0
        %1366 = vmatpush1.msra.mxu0 0.0
        %1367 = vmatprep.subr.mxu0 0.0
        %1368 = vmatpush1.msra.mxu0 0.0
        %1369 = vmatprep.subr.mxu0 0.0
        %1370 = vmatpush1.msra.mxu0 %v1334
        %1371 = vmatprep.subr.mxu0 0.0
        %1372 = vmatpush2.msra.mxu0 0.0
        %1373 = vmatprep.subr.mxu0 0.0
        %1374 = vmatpush2.msra.mxu0 0.0
        %1375 = vmatprep.subr.mxu0 0.0
        %1376 = vmatpush2.msra.mxu0 0.0
        %1377 = vmatprep.subr.mxu0 0.0
        %1378 = vmatpush2.msra.mxu0 0.0
        %1379 = vmatprep.subr.mxu0 0.0
        %1380 = vmatpush2.msra.mxu0 0.0
        %1381 = vmatprep.subr.mxu0 0.0
        %1382 = vmatpush2.msra.mxu0 0.0
        %1383 = vmatprep.subr.mxu0 0.0
        %1384 = vmatpush2.msra.mxu0 0.0
        %1385 = vmatprep.subr.mxu0 0.0
        %1386 = vmatpush2.msra.mxu0 0.0
        %1387 = vmatprep.subr.mxu0 0.0
        %1388 = vmatpush2.msra.mxu0 0.0
        %1389 = vmatprep.subr.mxu0 0.0
        %1390 = vmatpush2.msra.mxu0 0.0
        %1391 = vmatprep.subr.mxu0 0.0
        %1392 = vmatpush2.msra.mxu0 0.0
        %1393 = vmatprep.subr.mxu0 0.0
        %1394 = vmatpush2.msra.mxu0 0.0
        %1395 = vmatprep.subr.mxu0 0.0
        %1396 = vmatpush2.msra.mxu0 0.0
        %1397 = vmatprep.subr.mxu0 0.0
        %1398 = vmatpush2.msra.mxu0 0.0
        %1399 = vmatprep.subr.mxu0 0.0
        %1400 = vmatpush2.msra.mxu0 0.0
        %1401 = vmatprep.subr.mxu0 0.0
        %1402 = vmatpush2.msra.mxu0 0.0
        %1403 = vmatprep.mubr.f32.mxu0 0.0
        %1404 = vmatmul.mubr.f32.gmra.mxu0 %v1337
        %v1405 = vpop.f32.mrf.mxu0
        %v1406 = vadd.f32 0.0, %v1405
        %v1407 = vpop.f32.mrf.mxu0
        %1408 = vdwg.mxu0
        %v1409 = vrcp.pop %v1332
        %v1410 = vmul.f32 %v1406, %v1409
        %s1411 = scalar_lea.vmem [#allocation3], 8
        %1412 = vst.msk [vmem:[%s1411] sm:$0xff] %vm563, %v1410
        %v1413 = vld [vmem:[%s1245] sm:$0xff]
        %1415 = vrot.lane.b32.xlu0 %v1413, 120
        %v1416 = vpop.permute.xlu0 %1415
        %1417 = vrot.lane.b32.xlu0 %v1413, 88
        %v1418 = vpop.permute.xlu0 %1417
        %v1419 = vsel %vm563, %v1416, 0
        %v1421 = vsel %vm563, %v1418, 0
        %1423 = vmatprep.subr.mxu0 0.0
        %1424 = vmatpush1.xpose.msra.mxu0 0.0
        %1425 = vmatprep.subr.mxu0 0.0
        %1426 = vmatpush1.xpose.msra.mxu0 0.0
        %1427 = vmatprep.subr.mxu0 0.0
        %1428 = vmatpush1.xpose.msra.mxu0 0.0
        %1429 = vmatprep.subr.mxu0 0.0
        %1430 = vmatpush1.xpose.msra.mxu0 0.0
        %1431 = vmatprep.subr.mxu0 0.0
        %1432 = vmatpush1.xpose.msra.mxu0 0.0
        %1433 = vmatprep.subr.mxu0 0.0
        %1434 = vmatpush1.xpose.msra.mxu0 0.0
        %1435 = vmatprep.subr.mxu0 0.0
        %1436 = vmatpush1.xpose.msra.mxu0 0.0
        %1437 = vmatprep.subr.mxu0 0.0
        %1438 = vmatpush1.xpose.msra.mxu0 0.0
        %1439 = vmatprep.subr.mxu0 0.0
        %1440 = vmatpush1.xpose.msra.mxu0 0.0
        %1441 = vmatprep.subr.mxu0 0.0
        %1442 = vmatpush1.xpose.msra.mxu0 0.0
        %1443 = vmatprep.subr.mxu0 0.0
        %1444 = vmatpush1.xpose.msra.mxu0 0.0
        %1445 = vmatprep.subr.mxu0 0.0
        %1446 = vmatpush1.xpose.msra.mxu0 0.0
        %1447 = vmatprep.subr.mxu0 0.0
        %1448 = vmatpush1.xpose.msra.mxu0 0.0
        %1449 = vmatprep.subr.mxu0 0.0
        %1450 = vmatpush1.xpose.msra.mxu0 0.0
        %1451 = vmatprep.subr.mxu0 0.0
        %1452 = vmatpush1.xpose.msra.mxu0 0.0
        %1453 = vmatprep.subr.mxu0 0.0
        %1454 = vmatpush1.xpose.msra.mxu0 %v1421
        %1455 = vmatprep.subr.mxu0 0.0
        %1456 = vmatpush2.xpose.msra.mxu0 0.0
        %1457 = vmatprep.subr.mxu0 0.0
        %1458 = vmatpush2.xpose.msra.mxu0 0.0
        %1459 = vmatprep.subr.mxu0 0.0
        %1460 = vmatpush2.xpose.msra.mxu0 0.0
        %1461 = vmatprep.subr.mxu0 0.0
        %1462 = vmatpush2.xpose.msra.mxu0 0.0
        %1463 = vmatprep.subr.mxu0 0.0
        %1464 = vmatpush2.xpose.msra.mxu0 0.0
        %1465 = vmatprep.subr.mxu0 0.0
        %1466 = vmatpush2.xpose.msra.mxu0 0.0
        %1467 = vmatprep.subr.mxu0 0.0
        %1468 = vmatpush2.xpose.msra.mxu0 0.0
        %1469 = vmatprep.subr.mxu0 0.0
        %1470 = vmatpush2.xpose.msra.mxu0 0.0
        %1471 = vmatprep.subr.mxu0 0.0
        %1472 = vmatpush2.xpose.msra.mxu0 0.0
        %1473 = vmatprep.subr.mxu0 0.0
        %1474 = vmatpush2.xpose.msra.mxu0 0.0
        %1475 = vmatprep.subr.mxu0 0.0
        %1476 = vmatpush2.xpose.msra.mxu0 0.0
        %1477 = vmatprep.subr.mxu0 0.0
        %1478 = vmatpush2.xpose.msra.mxu0 0.0
        %1479 = vmatprep.subr.mxu0 0.0
        %1480 = vmatpush2.xpose.msra.mxu0 0.0
        %1481 = vmatprep.subr.mxu0 0.0
        %1482 = vmatpush2.xpose.msra.mxu0 0.0
        %1483 = vmatprep.subr.mxu0 0.0
        %1484 = vmatpush2.xpose.msra.mxu0 0.0
        %1485 = vmatprep.subr.mxu0 0.0
        %1486 = vmatpush2.xpose.msra.mxu0 0.0
        %1487 = vmatprep.mubr.f32.mxu0 0.0
        %1488 = vmatmul.mubr.f32.gmra.mxu0 %v1419
        %v1489 = vpop.f32.mrf.mxu0
        %v1490 = vadd.f32 0.0, %v1489
        %v1491 = vpop.f32.mrf.mxu0
        %1492 = vdwg.mxu0
        %v1493 = vsel %vm563, %v1490, -inf
        %1494 = vmax.xlane.f32.xlu0 %v1493
        %v1495 = vpop.xlane.xlu0 %1494
        %v1496 = vsub.f32 %v1490, %v1495
        %v1497 = vmul.f32 %v1496, 1.442695
        %v1498 = vpow.pop %v1497
        %v1499 = vsel %vm563, %v1498, 0.0
        %1500 = vadd.xlane.f32.xlu0 %v1499
        %v1501 = vpop.xlane.xlu0 %1500
        %1502 = vrot.lane.b32.xlu0 %v1413, 56
        %v1503 = vpop.permute.xlu0 %1502
        %v1506 = vsel %vm563, %v1498, 0
        %1508 = vmatprep.subr.mxu0 0.0
        %1509 = vmatpush1.msra.mxu0 0.0
        %1510 = vmatprep.subr.mxu0 0.0
        %1511 = vmatpush1.msra.mxu0 0.0
        %1512 = vmatprep.subr.mxu0 0.0
        %1513 = vmatpush1.msra.mxu0 0.0
        %1514 = vmatprep.subr.mxu0 0.0
        %1515 = vmatpush1.msra.mxu0 0.0
        %1516 = vmatprep.subr.mxu0 0.0
        %1517 = vmatpush1.msra.mxu0 0.0
        %1518 = vmatprep.subr.mxu0 0.0
        %1519 = vmatpush1.msra.mxu0 0.0
        %1520 = vmatprep.subr.mxu0 0.0
        %1521 = vmatpush1.msra.mxu0 0.0
        %1522 = vmatprep.subr.mxu0 0.0
        %1523 = vmatpush1.msra.mxu0 0.0
        %1524 = vmatprep.subr.mxu0 0.0
        %1525 = vmatpush1.msra.mxu0 0.0
        %1526 = vmatprep.subr.mxu0 0.0
        %1527 = vmatpush1.msra.mxu0 0.0
        %1528 = vmatprep.subr.mxu0 0.0
        %1529 = vmatpush1.msra.mxu0 0.0
        %1530 = vmatprep.subr.mxu0 0.0
        %1531 = vmatpush1.msra.mxu0 0.0
        %1532 = vmatprep.subr.mxu0 0.0
        %1533 = vmatpush1.msra.mxu0 0.0
        %1534 = vmatprep.subr.mxu0 0.0
        %1535 = vmatpush1.msra.mxu0 0.0
        %1536 = vmatprep.subr.mxu0 0.0
        %1537 = vmatpush1.msra.mxu0 0.0
        %1538 = vmatprep.subr.mxu0 0.0
        %1539 = vmatpush1.msra.mxu0 %v1503
        %1540 = vmatprep.subr.mxu0 0.0
        %1541 = vmatpush2.msra.mxu0 0.0
        %1542 = vmatprep.subr.mxu0 0.0
        %1543 = vmatpush2.msra.mxu0 0.0
        %1544 = vmatprep.subr.mxu0 0.0
        %1545 = vmatpush2.msra.mxu0 0.0
        %1546 = vmatprep.subr.mxu0 0.0
        %1547 = vmatpush2.msra.mxu0 0.0
        %1548 = vmatprep.subr.mxu0 0.0
        %1549 = vmatpush2.msra.mxu0 0.0
        %1550 = vmatprep.subr.mxu0 0.0
        %1551 = vmatpush2.msra.mxu0 0.0
        %1552 = vmatprep.subr.mxu0 0.0
        %1553 = vmatpush2.msra.mxu0 0.0
        %1554 = vmatprep.subr.mxu0 0.0
        %1555 = vmatpush2.msra.mxu0 0.0
        %1556 = vmatprep.subr.mxu0 0.0
        %1557 = vmatpush2.msra.mxu0 0.0
        %1558 = vmatprep.subr.mxu0 0.0
        %1559 = vmatpush2.msra.mxu0 0.0
        %1560 = vmatprep.subr.mxu0 0.0
        %1561 = vmatpush2.msra.mxu0 0.0
        %1562 = vmatprep.subr.mxu0 0.0
        %1563 = vmatpush2.msra.mxu0 0.0
        %1564 = vmatprep.subr.mxu0 0.0
        %1565 = vmatpush2.msra.mxu0 0.0
        %1566 = vmatprep.subr.mxu0 0.0
        %1567 = vmatpush2.msra.mxu0 0.0
        %1568 = vmatprep.subr.mxu0 0.0
        %1569 = vmatpush2.msra.mxu0 0.0
        %1570 = vmatprep.subr.mxu0 0.0
        %1571 = vmatpush2.msra.mxu0 0.0
        %1572 = vmatprep.mubr.f32.mxu0 0.0
        %1573 = vmatmul.mubr.f32.gmra.mxu0 %v1506
        %v1574 = vpop.f32.mrf.mxu0
        %v1575 = vadd.f32 0.0, %v1574
        %v1576 = vpop.f32.mrf.mxu0
        %1577 = vdwg.mxu0
        %v1578 = vrcp.pop %v1501
        %v1579 = vmul.f32 %v1575, %v1578
        %1581 = vrot.lane.b32.xlu0 %v1579, 8
        %v1582 = vpop.permute.xlu0 %1581
        %1584 = vst.msk [vmem:[%s1411] sm:$0xff] %vm897, %v1582
        %v1585 = vld [vmem:[%s1245] sm:$0xff]
        %1587 = vrot.lane.b32.xlu0 %v1585, 112
        %v1588 = vpop.permute.xlu0 %1587
        %1589 = vrot.lane.b32.xlu0 %v1585, 80
        %v1590 = vpop.permute.xlu0 %1589
        %v1591 = vsel %vm563, %v1588, 0
        %v1593 = vsel %vm563, %v1590, 0
        %1595 = vmatprep.subr.mxu0 0.0
        %1596 = vmatpush1.xpose.msra.mxu0 0.0
        %1597 = vmatprep.subr.mxu0 0.0
        %1598 = vmatpush1.xpose.msra.mxu0 0.0
        %1599 = vmatprep.subr.mxu0 0.0
        %1600 = vmatpush1.xpose.msra.mxu0 0.0
        %1601 = vmatprep.subr.mxu0 0.0
        %1602 = vmatpush1.xpose.msra.mxu0 0.0
        %1603 = vmatprep.subr.mxu0 0.0
        %1604 = vmatpush1.xpose.msra.mxu0 0.0
        %1605 = vmatprep.subr.mxu0 0.0
        %1606 = vmatpush1.xpose.msra.mxu0 0.0
        %1607 = vmatprep.subr.mxu0 0.0
        %1608 = vmatpush1.xpose.msra.mxu0 0.0
        %1609 = vmatprep.subr.mxu0 0.0
        %1610 = vmatpush1.xpose.msra.mxu0 0.0
        %1611 = vmatprep.subr.mxu0 0.0
        %1612 = vmatpush1.xpose.msra.mxu0 0.0
        %1613 = vmatprep.subr.mxu0 0.0
        %1614 = vmatpush1.xpose.msra.mxu0 0.0
        %1615 = vmatprep.subr.mxu0 0.0
        %1616 = vmatpush1.xpose.msra.mxu0 0.0
        %1617 = vmatprep.subr.mxu0 0.0
        %1618 = vmatpush1.xpose.msra.mxu0 0.0
        %1619 = vmatprep.subr.mxu0 0.0
        %1620 = vmatpush1.xpose.msra.mxu0 0.0
        %1621 = vmatprep.subr.mxu0 0.0
        %1622 = vmatpush1.xpose.msra.mxu0 0.0
        %1623 = vmatprep.subr.mxu0 0.0
        %1624 = vmatpush1.xpose.msra.mxu0 0.0
        %1625 = vmatprep.subr.mxu0 0.0
        %1626 = vmatpush1.xpose.msra.mxu0 %v1593
        %1627 = vmatprep.subr.mxu0 0.0
        %1628 = vmatpush2.xpose.msra.mxu0 0.0
        %1629 = vmatprep.subr.mxu0 0.0
        %1630 = vmatpush2.xpose.msra.mxu0 0.0
        %1631 = vmatprep.subr.mxu0 0.0
        %1632 = vmatpush2.xpose.msra.mxu0 0.0
        %1633 = vmatprep.subr.mxu0 0.0
        %1634 = vmatpush2.xpose.msra.mxu0 0.0
        %1635 = vmatprep.subr.mxu0 0.0
        %1636 = vmatpush2.xpose.msra.mxu0 0.0
        %1637 = vmatprep.subr.mxu0 0.0
        %1638 = vmatpush2.xpose.msra.mxu0 0.0
        %1639 = vmatprep.subr.mxu0 0.0
        %1640 = vmatpush2.xpose.msra.mxu0 0.0
        %1641 = vmatprep.subr.mxu0 0.0
        %1642 = vmatpush2.xpose.msra.mxu0 0.0
        %1643 = vmatprep.subr.mxu0 0.0
        %1644 = vmatpush2.xpose.msra.mxu0 0.0
        %1645 = vmatprep.subr.mxu0 0.0
        %1646 = vmatpush2.xpose.msra.mxu0 0.0
        %1647 = vmatprep.subr.mxu0 0.0
        %1648 = vmatpush2.xpose.msra.mxu0 0.0
        %1649 = vmatprep.subr.mxu0 0.0
        %1650 = vmatpush2.xpose.msra.mxu0 0.0
        %1651 = vmatprep.subr.mxu0 0.0
        %1652 = vmatpush2.xpose.msra.mxu0 0.0
        %1653 = vmatprep.subr.mxu0 0.0
        %1654 = vmatpush2.xpose.msra.mxu0 0.0
        %1655 = vmatprep.subr.mxu0 0.0
        %1656 = vmatpush2.xpose.msra.mxu0 0.0
        %1657 = vmatprep.subr.mxu0 0.0
        %1658 = vmatpush2.xpose.msra.mxu0 0.0
        %1659 = vmatprep.mubr.f32.mxu0 0.0
        %1660 = vmatmul.mubr.f32.gmra.mxu0 %v1591
        %v1661 = vpop.f32.mrf.mxu0
        %v1662 = vadd.f32 0.0, %v1661
        %v1663 = vpop.f32.mrf.mxu0
        %1664 = vdwg.mxu0
        %v1665 = vsel %vm563, %v1662, -inf
        %1666 = vmax.xlane.f32.xlu0 %v1665
        %v1667 = vpop.xlane.xlu0 %1666
        %v1668 = vsub.f32 %v1662, %v1667
        %v1669 = vmul.f32 %v1668, 1.442695
        %v1670 = vpow.pop %v1669
        %v1671 = vsel %vm563, %v1670, 0.0
        %1672 = vadd.xlane.f32.xlu0 %v1671
        %v1673 = vpop.xlane.xlu0 %1672
        %1674 = vrot.lane.b32.xlu0 %v1585, 48
        %v1675 = vpop.permute.xlu0 %1674
        %v1678 = vsel %vm563, %v1670, 0
        %1680 = vmatprep.subr.mxu0 0.0
        %1681 = vmatpush1.msra.mxu0 0.0
        %1682 = vmatprep.subr.mxu0 0.0
        %1683 = vmatpush1.msra.mxu0 0.0
        %1684 = vmatprep.subr.mxu0 0.0
        %1685 = vmatpush1.msra.mxu0 0.0
        %1686 = vmatprep.subr.mxu0 0.0
        %1687 = vmatpush1.msra.mxu0 0.0
        %1688 = vmatprep.subr.mxu0 0.0
        %1689 = vmatpush1.msra.mxu0 0.0
        %1690 = vmatprep.subr.mxu0 0.0
        %1691 = vmatpush1.msra.mxu0 0.0
        %1692 = vmatprep.subr.mxu0 0.0
        %1693 = vmatpush1.msra.mxu0 0.0
        %1694 = vmatprep.subr.mxu0 0.0
        %1695 = vmatpush1.msra.mxu0 0.0
        %1696 = vmatprep.subr.mxu0 0.0
        %1697 = vmatpush1.msra.mxu0 0.0
        %1698 = vmatprep.subr.mxu0 0.0
        %1699 = vmatpush1.msra.mxu0 0.0
        %1700 = vmatprep.subr.mxu0 0.0
        %1701 = vmatpush1.msra.mxu0 0.0
        %1702 = vmatprep.subr.mxu0 0.0
        %1703 = vmatpush1.msra.mxu0 0.0
        %1704 = vmatprep.subr.mxu0 0.0
        %1705 = vmatpush1.msra.mxu0 0.0
        %1706 = vmatprep.subr.mxu0 0.0
        %1707 = vmatpush1.msra.mxu0 0.0
        %1708 = vmatprep.subr.mxu0 0.0
        %1709 = vmatpush1.msra.mxu0 0.0
        %1710 = vmatprep.subr.mxu0 0.0
        %1711 = vmatpush1.msra.mxu0 %v1675
        %1712 = vmatprep.subr.mxu0 0.0
        %1713 = vmatpush2.msra.mxu0 0.0
        %1714 = vmatprep.subr.mxu0 0.0
        %1715 = vmatpush2.msra.mxu0 0.0
        %1716 = vmatprep.subr.mxu0 0.0
        %1717 = vmatpush2.msra.mxu0 0.0
        %1718 = vmatprep.subr.mxu0 0.0
        %1719 = vmatpush2.msra.mxu0 0.0
        %1720 = vmatprep.subr.mxu0 0.0
        %1721 = vmatpush2.msra.mxu0 0.0
        %1722 = vmatprep.subr.mxu0 0.0
        %1723 = vmatpush2.msra.mxu0 0.0
        %1724 = vmatprep.subr.mxu0 0.0
        %1725 = vmatpush2.msra.mxu0 0.0
        %1726 = vmatprep.subr.mxu0 0.0
        %1727 = vmatpush2.msra.mxu0 0.0
        %1728 = vmatprep.subr.mxu0 0.0
        %1729 = vmatpush2.msra.mxu0 0.0
        %1730 = vmatprep.subr.mxu0 0.0
        %1731 = vmatpush2.msra.mxu0 0.0
        %1732 = vmatprep.subr.mxu0 0.0
        %1733 = vmatpush2.msra.mxu0 0.0
        %1734 = vmatprep.subr.mxu0 0.0
        %1735 = vmatpush2.msra.mxu0 0.0
        %1736 = vmatprep.subr.mxu0 0.0
        %1737 = vmatpush2.msra.mxu0 0.0
        %1738 = vmatprep.subr.mxu0 0.0
        %1739 = vmatpush2.msra.mxu0 0.0
        %1740 = vmatprep.subr.mxu0 0.0
        %1741 = vmatpush2.msra.mxu0 0.0
        %1742 = vmatprep.subr.mxu0 0.0
        %1743 = vmatpush2.msra.mxu0 0.0
        %1744 = vmatprep.mubr.f32.mxu0 0.0
        %1745 = vmatmul.mubr.f32.gmra.mxu0 %v1678
        %v1746 = vpop.f32.mrf.mxu0
        %v1747 = vadd.f32 0.0, %v1746
        %v1748 = vpop.f32.mrf.mxu0
        %1749 = vdwg.mxu0
        %v1750 = vrcp.pop %v1673
        %v1751 = vmul.f32 %v1747, %v1750
        %1753 = vrot.lane.b32.xlu0 %v1751, 16
        %v1754 = vpop.permute.xlu0 %1753
        %1756 = vst.msk [vmem:[%s1411] sm:$0xff] %vm1070, %v1754
        %v1757 = vld [vmem:[%s1245] sm:$0xff]
        %1759 = vrot.lane.b32.xlu0 %v1757, 104
        %v1760 = vpop.permute.xlu0 %1759
        %1761 = vrot.lane.b32.xlu0 %v1757, 72
        %v1762 = vpop.permute.xlu0 %1761
        %v1763 = vsel %vm563, %v1760, 0
        %v1765 = vsel %vm563, %v1762, 0
        %1767 = vmatprep.subr.mxu0 0.0
        %1768 = vmatpush1.xpose.msra.mxu0 0.0
        %1769 = vmatprep.subr.mxu0 0.0
        %1770 = vmatpush1.xpose.msra.mxu0 0.0
        %1771 = vmatprep.subr.mxu0 0.0
        %1772 = vmatpush1.xpose.msra.mxu0 0.0
        %1773 = vmatprep.subr.mxu0 0.0
        %1774 = vmatpush1.xpose.msra.mxu0 0.0
        %1775 = vmatprep.subr.mxu0 0.0
        %1776 = vmatpush1.xpose.msra.mxu0 0.0
        %1777 = vmatprep.subr.mxu0 0.0
        %1778 = vmatpush1.xpose.msra.mxu0 0.0
        %1779 = vmatprep.subr.mxu0 0.0
        %1780 = vmatpush1.xpose.msra.mxu0 0.0
        %1781 = vmatprep.subr.mxu0 0.0
        %1782 = vmatpush1.xpose.msra.mxu0 0.0
        %1783 = vmatprep.subr.mxu0 0.0
        %1784 = vmatpush1.xpose.msra.mxu0 0.0
        %1785 = vmatprep.subr.mxu0 0.0
        %1786 = vmatpush1.xpose.msra.mxu0 0.0
        %1787 = vmatprep.subr.mxu0 0.0
        %1788 = vmatpush1.xpose.msra.mxu0 0.0
        %1789 = vmatprep.subr.mxu0 0.0
        %1790 = vmatpush1.xpose.msra.mxu0 0.0
        %1791 = vmatprep.subr.mxu0 0.0
        %1792 = vmatpush1.xpose.msra.mxu0 0.0
        %1793 = vmatprep.subr.mxu0 0.0
        %1794 = vmatpush1.xpose.msra.mxu0 0.0
        %1795 = vmatprep.subr.mxu0 0.0
        %1796 = vmatpush1.xpose.msra.mxu0 0.0
        %1797 = vmatprep.subr.mxu0 0.0
        %1798 = vmatpush1.xpose.msra.mxu0 %v1765
        %1799 = vmatprep.subr.mxu0 0.0
        %1800 = vmatpush2.xpose.msra.mxu0 0.0
        %1801 = vmatprep.subr.mxu0 0.0
        %1802 = vmatpush2.xpose.msra.mxu0 0.0
        %1803 = vmatprep.subr.mxu0 0.0
        %1804 = vmatpush2.xpose.msra.mxu0 0.0
        %1805 = vmatprep.subr.mxu0 0.0
        %1806 = vmatpush2.xpose.msra.mxu0 0.0
        %1807 = vmatprep.subr.mxu0 0.0
        %1808 = vmatpush2.xpose.msra.mxu0 0.0
        %1809 = vmatprep.subr.mxu0 0.0
        %1810 = vmatpush2.xpose.msra.mxu0 0.0
        %1811 = vmatprep.subr.mxu0 0.0
        %1812 = vmatpush2.xpose.msra.mxu0 0.0
        %1813 = vmatprep.subr.mxu0 0.0
        %1814 = vmatpush2.xpose.msra.mxu0 0.0
        %1815 = vmatprep.subr.mxu0 0.0
        %1816 = vmatpush2.xpose.msra.mxu0 0.0
        %1817 = vmatprep.subr.mxu0 0.0
        %1818 = vmatpush2.xpose.msra.mxu0 0.0
        %1819 = vmatprep.subr.mxu0 0.0
        %1820 = vmatpush2.xpose.msra.mxu0 0.0
        %1821 = vmatprep.subr.mxu0 0.0
        %1822 = vmatpush2.xpose.msra.mxu0 0.0
        %1823 = vmatprep.subr.mxu0 0.0
        %1824 = vmatpush2.xpose.msra.mxu0 0.0
        %1825 = vmatprep.subr.mxu0 0.0
        %1826 = vmatpush2.xpose.msra.mxu0 0.0
        %1827 = vmatprep.subr.mxu0 0.0
        %1828 = vmatpush2.xpose.msra.mxu0 0.0
        %1829 = vmatprep.subr.mxu0 0.0
        %1830 = vmatpush2.xpose.msra.mxu0 0.0
        %1831 = vmatprep.mubr.f32.mxu0 0.0
        %1832 = vmatmul.mubr.f32.gmra.mxu0 %v1763
        %v1833 = vpop.f32.mrf.mxu0
        %v1834 = vadd.f32 0.0, %v1833
        %v1835 = vpop.f32.mrf.mxu0
        %1836 = vdwg.mxu0
        %v1837 = vsel %vm563, %v1834, -inf
        %1838 = vmax.xlane.f32.xlu0 %v1837
        %v1839 = vpop.xlane.xlu0 %1838
        %v1840 = vsub.f32 %v1834, %v1839
        %v1841 = vmul.f32 %v1840, 1.442695
        %v1842 = vpow.pop %v1841
        %v1843 = vsel %vm563, %v1842, 0.0
        %1844 = vadd.xlane.f32.xlu0 %v1843
        %v1845 = vpop.xlane.xlu0 %1844
        %1846 = vrot.lane.b32.xlu0 %v1757, 40
        %v1847 = vpop.permute.xlu0 %1846
        %v1850 = vsel %vm563, %v1842, 0
        %1852 = vmatprep.subr.mxu0 0.0
        %1853 = vmatpush1.msra.mxu0 0.0
        %1854 = vmatprep.subr.mxu0 0.0
        %1855 = vmatpush1.msra.mxu0 0.0
        %1856 = vmatprep.subr.mxu0 0.0
        %1857 = vmatpush1.msra.mxu0 0.0
        %1858 = vmatprep.subr.mxu0 0.0
        %1859 = vmatpush1.msra.mxu0 0.0
        %1860 = vmatprep.subr.mxu0 0.0
        %1861 = vmatpush1.msra.mxu0 0.0
        %1862 = vmatprep.subr.mxu0 0.0
        %1863 = vmatpush1.msra.mxu0 0.0
        %1864 = vmatprep.subr.mxu0 0.0
        %1865 = vmatpush1.msra.mxu0 0.0
        %1866 = vmatprep.subr.mxu0 0.0
        %1867 = vmatpush1.msra.mxu0 0.0
        %1868 = vmatprep.subr.mxu0 0.0
        %1869 = vmatpush1.msra.mxu0 0.0
        %1870 = vmatprep.subr.mxu0 0.0
        %1871 = vmatpush1.msra.mxu0 0.0
        %1872 = vmatprep.subr.mxu0 0.0
        %1873 = vmatpush1.msra.mxu0 0.0
        %1874 = vmatprep.subr.mxu0 0.0
        %1875 = vmatpush1.msra.mxu0 0.0
        %1876 = vmatprep.subr.mxu0 0.0
        %1877 = vmatpush1.msra.mxu0 0.0
        %1878 = vmatprep.subr.mxu0 0.0
        %1879 = vmatpush1.msra.mxu0 0.0
        %1880 = vmatprep.subr.mxu0 0.0
        %1881 = vmatpush1.msra.mxu0 0.0
        %1882 = vmatprep.subr.mxu0 0.0
        %1883 = vmatpush1.msra.mxu0 %v1847
        %1884 = vmatprep.subr.mxu0 0.0
        %1885 = vmatpush2.msra.mxu0 0.0
        %1886 = vmatprep.subr.mxu0 0.0
        %1887 = vmatpush2.msra.mxu0 0.0
        %1888 = vmatprep.subr.mxu0 0.0
        %1889 = vmatpush2.msra.mxu0 0.0
        %1890 = vmatprep.subr.mxu0 0.0
        %1891 = vmatpush2.msra.mxu0 0.0
        %1892 = vmatprep.subr.mxu0 0.0
        %1893 = vmatpush2.msra.mxu0 0.0
        %1894 = vmatprep.subr.mxu0 0.0
        %1895 = vmatpush2.msra.mxu0 0.0
        %1896 = vmatprep.subr.mxu0 0.0
        %1897 = vmatpush2.msra.mxu0 0.0
        %1898 = vmatprep.subr.mxu0 0.0
        %1899 = vmatpush2.msra.mxu0 0.0
        %1900 = vmatprep.subr.mxu0 0.0
        %1901 = vmatpush2.msra.mxu0 0.0
        %1902 = vmatprep.subr.mxu0 0.0
        %1903 = vmatpush2.msra.mxu0 0.0
        %1904 = vmatprep.subr.mxu0 0.0
        %1905 = vmatpush2.msra.mxu0 0.0
        %1906 = vmatprep.subr.mxu0 0.0
        %1907 = vmatpush2.msra.mxu0 0.0
        %1908 = vmatprep.subr.mxu0 0.0
        %1909 = vmatpush2.msra.mxu0 0.0
        %1910 = vmatprep.subr.mxu0 0.0
        %1911 = vmatpush2.msra.mxu0 0.0
        %1912 = vmatprep.subr.mxu0 0.0
        %1913 = vmatpush2.msra.mxu0 0.0
        %1914 = vmatprep.subr.mxu0 0.0
        %1915 = vmatpush2.msra.mxu0 0.0
        %1916 = vmatprep.mubr.f32.mxu0 0.0
        %1917 = vmatmul.mubr.f32.gmra.mxu0 %v1850
        %v1918 = vpop.f32.mrf.mxu0
        %v1919 = vadd.f32 0.0, %v1918
        %v1920 = vpop.f32.mrf.mxu0
        %1921 = vdwg.mxu0
        %v1922 = vrcp.pop %v1845
        %v1923 = vmul.f32 %v1919, %v1922
        %1925 = vrot.lane.b32.xlu0 %v1923, 24
        %v1926 = vpop.permute.xlu0 %1925
        %1928 = vst.msk [vmem:[%s1411] sm:$0xff] %vm1243, %v1926
        %v1929 = vld [vmem:[#allocation3] sm:$0xff]
        %v1930 = vld [vmem:[#allocation3 + $0x8] sm:$0xff]
        %v1931 = vld [vmem:[%s3] sm:$0xff]
        %v1932 = vld [vmem:[%s3 + $0x8] sm:$0xff]
        %v1933 = vld [vmem:[%s3 + $0x10] sm:$0xff]
        %v1934 = vld [vmem:[%s3 + $0x18] sm:$0xff]
        %v1935 = vld [vmem:[%s4] sm:$0x1]
        %v1937 = vlaneseq
        %v1938 = vshrl.u32 %v1937, 7
        %v1939 = vsub.s32 0, %v1938
        %v1940 = vrot.slane %v1935, %v1939
        %v1943 = vsel %vm470, %v1929, 0
        %v1946 = vsel %vm470, %v1930, 0
        %1948 = vmatprep.subr.mxu0 0.0
        %1949 = vmatpush1.msra.mxu0 0.0
        %1950 = vmatprep.subr.mxu0 0.0
        %1951 = vmatpush1.msra.mxu0 0.0
        %1952 = vmatprep.subr.mxu0 0.0
        %1953 = vmatpush1.msra.mxu0 0.0
        %1954 = vmatprep.subr.mxu0 0.0
        %1955 = vmatpush1.msra.mxu0 0.0
        %1956 = vmatprep.subr.mxu0 0.0
        %1957 = vmatpush1.msra.mxu0 0.0
        %1958 = vmatprep.subr.mxu0 0.0
        %1959 = vmatpush1.msra.mxu0 0.0
        %1960 = vmatprep.subr.mxu0 0.0
        %1961 = vmatpush1.msra.mxu0 0.0
        %1962 = vmatprep.subr.mxu0 0.0
        %1963 = vmatpush1.msra.mxu0 0.0
        %1964 = vmatprep.subr.mxu0 0.0
        %1965 = vmatpush1.msra.mxu0 0.0
        %1966 = vmatprep.subr.mxu0 0.0
        %1967 = vmatpush1.msra.mxu0 0.0
        %1968 = vmatprep.subr.mxu0 0.0
        %1969 = vmatpush1.msra.mxu0 0.0
        %1970 = vmatprep.subr.mxu0 0.0
        %1971 = vmatpush1.msra.mxu0 0.0
        %1972 = vmatprep.subr.mxu0 0.0
        %1973 = vmatpush1.msra.mxu0 %v1934
        %1974 = vmatprep.subr.mxu0 0.0
        %1975 = vmatpush1.msra.mxu0 %v1933
        %1976 = vmatprep.subr.mxu0 0.0
        %1977 = vmatpush1.msra.mxu0 %v1932
        %1978 = vmatprep.subr.mxu0 0.0
        %1979 = vmatpush1.msra.mxu0 %v1931
        %1980 = vmatprep.subr.mxu0 0.0
        %1981 = vmatpush2.msra.mxu0 0.0
        %1982 = vmatprep.subr.mxu0 0.0
        %1983 = vmatpush2.msra.mxu0 0.0
        %1984 = vmatprep.subr.mxu0 0.0
        %1985 = vmatpush2.msra.mxu0 0.0
        %1986 = vmatprep.subr.mxu0 0.0
        %1987 = vmatpush2.msra.mxu0 0.0
        %1988 = vmatprep.subr.mxu0 0.0
        %1989 = vmatpush2.msra.mxu0 0.0
        %1990 = vmatprep.subr.mxu0 0.0
        %1991 = vmatpush2.msra.mxu0 0.0
        %1992 = vmatprep.subr.mxu0 0.0
        %1993 = vmatpush2.msra.mxu0 0.0
        %1994 = vmatprep.subr.mxu0 0.0
        %1995 = vmatpush2.msra.mxu0 0.0
        %1996 = vmatprep.subr.mxu0 0.0
        %1997 = vmatpush2.msra.mxu0 0.0
        %1998 = vmatprep.subr.mxu0 0.0
        %1999 = vmatpush2.msra.mxu0 0.0
        %2000 = vmatprep.subr.mxu0 0.0
        %2001 = vmatpush2.msra.mxu0 0.0
        %2002 = vmatprep.subr.mxu0 0.0
        %2003 = vmatpush2.msra.mxu0 0.0
        %2004 = vmatprep.subr.mxu0 0.0
        %2005 = vmatpush2.msra.mxu0 0.0
        %2006 = vmatprep.subr.mxu0 0.0
        %2007 = vmatpush2.msra.mxu0 0.0
        %2008 = vmatprep.subr.mxu0 0.0
        %2009 = vmatpush2.msra.mxu0 0.0
        %2010 = vmatprep.subr.mxu0 0.0
        %2011 = vmatpush2.msra.mxu0 0.0
        %2012 = vmatprep.mubr.f32.mxu0 0.0
        %2013 = vmatmul.mubr.f32.gmra.mxu0 %v1943
        %v2014 = vpop.f32.mrf.mxu0
        %v2015 = vadd.f32 %v1940, %v2014
        %v2016 = vpop.f32.mrf.mxu0
        %2017 = vmatprep.mubr.f32.mxu0 0.0
        %2018 = vmatmul.mubr.f32.gmra.mxu0 %v1946
        %v2019 = vpop.f32.mrf.mxu0
        %v2020 = vadd.f32 %v1940, %v2019
        %v2021 = vpop.f32.mrf.mxu0
        %2022 = vdwg.mxu0
        %v2023 = vadd.f32 %v457, %v2015
        %v2024 = vadd.f32 %v458, %v2020
        %v2025 = vld [vmem:[%s9] sm:$0x1]
        %v2026 = vld [vmem:[%s10] sm:$0x1]
        %v2027 = vsel %vm470, %v2023, 0.0
        %2028 = vadd.xlane.f32.xlu0 %v2027
        %v2029 = vpop.xlane.xlu0 %2028
        %v2030 = vsel %vm470, %v2024, 0.0
        %2031 = vadd.xlane.f32.xlu0 %v2030
        %v2032 = vpop.xlane.xlu0 %2031
        %v2033 = vrcp.pop 32.0
        %v2034 = vmul.f32 %v2029, %v2033
        %v2035 = vmul.f32 %v2032, %v2033
        %v2036 = vsub.f32 %v2023, %v2034
        %v2037 = vsub.f32 %v2024, %v2035
        %v2038 = vmul.f32 %v2036, %v2036
        %v2039 = vmul.f32 %v2037, %v2037
        %v2040 = vsel %vm470, %v2038, 0.0
        %2041 = vadd.xlane.f32.xlu0 %v2040
        %v2042 = vpop.xlane.xlu0 %2041
        %v2043 = vsel %vm470, %v2039, 0.0
        %2044 = vadd.xlane.f32.xlu0 %v2043
        %v2045 = vpop.xlane.xlu0 %2044
        %v2046 = vmul.f32 %v2042, %v2033
        %v2047 = vmul.f32 %v2045, %v2033
        %v2048 = vadd.f32 %v2046, 1e-05
        %v2049 = vadd.f32 %v2047, 1e-05
        %v2050 = vrsqrt.pop %v2048
        %v2051 = vrsqrt.pop %v2049
        %v2052 = vmul.f32 %v2036, %v2050
        %v2053 = vmul.f32 %v2037, %v2051
        %v2055 = vlaneseq
        %v2056 = vshrl.u32 %v2055, 7
        %v2057 = vsub.s32 0, %v2056
        %v2058 = vrot.slane %v2025, %v2057
        %v2060 = vmul.f32 %v2052, %v2058
        %v2061 = vmul.f32 %v2053, %v2058
        %v2063 = vlaneseq
        %v2064 = vshrl.u32 %v2063, 7
        %v2065 = vsub.s32 0, %v2064
        %v2066 = vrot.slane %v2026, %v2065
        %v2068 = vadd.f32 %v2060, %v2066
        %v2069 = vadd.f32 %v2061, %v2066
        %v2070 = vld [vmem:[#allocation4] sm:$0xff]
        %v2071 = vld [vmem:[#allocation4 + $0x8] sm:$0xff]
        %v2072 = vld [vmem:[#allocation4 + $0x10] sm:$0xff]
        %v2073 = vld [vmem:[#allocation4 + $0x18] sm:$0xff]
        %v2074 = vld [vmem:[%s6] sm:$0x1]
        %v2076 = vlaneseq
        %v2077 = vshrl.u32 %v2076, 7
        %v2078 = vsub.s32 0, %v2077
        %v2079 = vrot.slane %v2074, %v2078
        %v2082 = vsel %vm470, %v2068, 0
        %v2085 = vsel %vm470, %v2069, 0
        %2087 = vmatprep.subr.mxu0 0.0
        %2088 = vmatpush1.msra.mxu0 0.0
        %2089 = vmatprep.subr.mxu0 0.0
        %2090 = vmatpush1.msra.mxu0 0.0
        %2091 = vmatprep.subr.mxu0 0.0
        %2092 = vmatpush1.msra.mxu0 0.0
        %2093 = vmatprep.subr.mxu0 0.0
        %2094 = vmatpush1.msra.mxu0 0.0
        %2095 = vmatprep.subr.mxu0 0.0
        %2096 = vmatpush1.msra.mxu0 0.0
        %2097 = vmatprep.subr.mxu0 0.0
        %2098 = vmatpush1.msra.mxu0 0.0
        %2099 = vmatprep.subr.mxu0 0.0
        %2100 = vmatpush1.msra.mxu0 0.0
        %2101 = vmatprep.subr.mxu0 0.0
        %2102 = vmatpush1.msra.mxu0 0.0
        %2103 = vmatprep.subr.mxu0 0.0
        %2104 = vmatpush1.msra.mxu0 0.0
        %2105 = vmatprep.subr.mxu0 0.0
        %2106 = vmatpush1.msra.mxu0 0.0
        %2107 = vmatprep.subr.mxu0 0.0
        %2108 = vmatpush1.msra.mxu0 0.0
        %2109 = vmatprep.subr.mxu0 0.0
        %2110 = vmatpush1.msra.mxu0 0.0
        %2111 = vmatprep.subr.mxu0 0.0
        %2112 = vmatpush1.msra.mxu0 %v2073
        %2113 = vmatprep.subr.mxu0 0.0
        %2114 = vmatpush1.msra.mxu0 %v2072
        %2115 = vmatprep.subr.mxu0 0.0
        %2116 = vmatpush1.msra.mxu0 %v2071
        %2117 = vmatprep.subr.mxu0 0.0
        %2118 = vmatpush1.msra.mxu0 %v2070
        %2119 = vmatprep.subr.mxu0 0.0
        %2120 = vmatpush2.msra.mxu0 0.0
        %2121 = vmatprep.subr.mxu0 0.0
        %2122 = vmatpush2.msra.mxu0 0.0
        %2123 = vmatprep.subr.mxu0 0.0
        %2124 = vmatpush2.msra.mxu0 0.0
        %2125 = vmatprep.subr.mxu0 0.0
        %2126 = vmatpush2.msra.mxu0 0.0
        %2127 = vmatprep.subr.mxu0 0.0
        %2128 = vmatpush2.msra.mxu0 0.0
        %2129 = vmatprep.subr.mxu0 0.0
        %2130 = vmatpush2.msra.mxu0 0.0
        %2131 = vmatprep.subr.mxu0 0.0
        %2132 = vmatpush2.msra.mxu0 0.0
        %2133 = vmatprep.subr.mxu0 0.0
        %2134 = vmatpush2.msra.mxu0 0.0
        %2135 = vmatprep.subr.mxu0 0.0
        %2136 = vmatpush2.msra.mxu0 0.0
        %2137 = vmatprep.subr.mxu0 0.0
        %2138 = vmatpush2.msra.mxu0 0.0
        %2139 = vmatprep.subr.mxu0 0.0
        %2140 = vmatpush2.msra.mxu0 0.0
        %2141 = vmatprep.subr.mxu0 0.0
        %2142 = vmatpush2.msra.mxu0 0.0
        %2143 = vmatprep.subr.mxu0 0.0
        %2144 = vmatpush2.msra.mxu0 0.0
        %2145 = vmatprep.subr.mxu0 0.0
        %2146 = vmatpush2.msra.mxu0 0.0
        %2147 = vmatprep.subr.mxu0 0.0
        %2148 = vmatpush2.msra.mxu0 0.0
        %2149 = vmatprep.subr.mxu0 0.0
        %2150 = vmatpush2.msra.mxu0 0.0
        %2151 = vmatprep.mubr.f32.mxu0 0.0
        %2152 = vmatmul.mubr.f32.gmra.mxu0 %v2082
        %v2153 = vpop.f32.mrf.mxu0
        %v2154 = vadd.f32 %v2079, %v2153
        %v2155 = vpop.f32.mrf.mxu0
        %2156 = vmatprep.mubr.f32.mxu0 0.0
        %2157 = vmatmul.mubr.f32.gmra.mxu0 %v2085
        %v2158 = vpop.f32.mrf.mxu0
        %v2159 = vadd.f32 %v2079, %v2158
        %v2160 = vpop.f32.mrf.mxu0
        %2161 = vdwg.mxu0
        %v2162 = vmax.f32 %v2154, 0.0
        %v2163 = vmax.f32 %v2159, 0.0
        %v2164 = vld [vmem:[%s7] sm:$0xff]
        %v2165 = vld [vmem:[%s7 + $0x8] sm:$0xff]
        %v2166 = vld [vmem:[%s7 + $0x10] sm:$0xff]
        %v2167 = vld [vmem:[%s7 + $0x18] sm:$0xff]
        %v2168 = vld [vmem:[%s7 + $0x20] sm:$0xff]
        %v2169 = vld [vmem:[%s7 + $0x28] sm:$0xff]
        %v2170 = vld [vmem:[%s7 + $0x30] sm:$0xff]
        %v2171 = vld [vmem:[%s7 + $0x38] sm:$0xff]
        %v2172 = vld [vmem:[%s8] sm:$0x1]
        %v2174 = vlaneseq
        %v2175 = vshrl.u32 %v2174, 7
        %v2176 = vsub.s32 0, %v2175
        %v2177 = vrot.slane %v2172, %v2176
        %vm2179 = vcmask 523264
        %v2181 = vsel %vm2179, %v2162, 0
        %v2184 = vsel %vm2179, %v2163, 0
        %2186 = vmatprep.subr.mxu0 0.0
        %2187 = vmatpush1.msra.mxu0 0.0
        %2188 = vmatprep.subr.mxu0 0.0
        %2189 = vmatpush1.msra.mxu0 0.0
        %2190 = vmatprep.subr.mxu0 0.0
        %2191 = vmatpush1.msra.mxu0 0.0
        %2192 = vmatprep.subr.mxu0 0.0
        %2193 = vmatpush1.msra.mxu0 0.0
        %2194 = vmatprep.subr.mxu0 0.0
        %2195 = vmatpush1.msra.mxu0 0.0
        %2196 = vmatprep.subr.mxu0 0.0
        %2197 = vmatpush1.msra.mxu0 0.0
        %2198 = vmatprep.subr.mxu0 0.0
        %2199 = vmatpush1.msra.mxu0 0.0
        %2200 = vmatprep.subr.mxu0 0.0
        %2201 = vmatpush1.msra.mxu0 0.0
        %2202 = vmatprep.subr.mxu0 0.0
        %2203 = vmatpush1.msra.mxu0 %v2171
        %2204 = vmatprep.subr.mxu0 0.0
        %2205 = vmatpush1.msra.mxu0 %v2170
        %2206 = vmatprep.subr.mxu0 0.0
        %2207 = vmatpush1.msra.mxu0 %v2169
        %2208 = vmatprep.subr.mxu0 0.0
        %2209 = vmatpush1.msra.mxu0 %v2168
        %2210 = vmatprep.subr.mxu0 0.0
        %2211 = vmatpush1.msra.mxu0 %v2167
        %2212 = vmatprep.subr.mxu0 0.0
        %2213 = vmatpush1.msra.mxu0 %v2166
        %2214 = vmatprep.subr.mxu0 0.0
        %2215 = vmatpush1.msra.mxu0 %v2165
        %2216 = vmatprep.subr.mxu0 0.0
        %2217 = vmatpush1.msra.mxu0 %v2164
        %2218 = vmatprep.subr.mxu0 0.0
        %2219 = vmatpush2.msra.mxu0 0.0
        %2220 = vmatprep.subr.mxu0 0.0
        %2221 = vmatpush2.msra.mxu0 0.0
        %2222 = vmatprep.subr.mxu0 0.0
        %2223 = vmatpush2.msra.mxu0 0.0
        %2224 = vmatprep.subr.mxu0 0.0
        %2225 = vmatpush2.msra.mxu0 0.0
        %2226 = vmatprep.subr.mxu0 0.0
        %2227 = vmatpush2.msra.mxu0 0.0
        %2228 = vmatprep.subr.mxu0 0.0
        %2229 = vmatpush2.msra.mxu0 0.0
        %2230 = vmatprep.subr.mxu0 0.0
        %2231 = vmatpush2.msra.mxu0 0.0
        %2232 = vmatprep.subr.mxu0 0.0
        %2233 = vmatpush2.msra.mxu0 0.0
        %2234 = vmatprep.subr.mxu0 0.0
        %2235 = vmatpush2.msra.mxu0 0.0
        %2236 = vmatprep.subr.mxu0 0.0
        %2237 = vmatpush2.msra.mxu0 0.0
        %2238 = vmatprep.subr.mxu0 0.0
        %2239 = vmatpush2.msra.mxu0 0.0
        %2240 = vmatprep.subr.mxu0 0.0
        %2241 = vmatpush2.msra.mxu0 0.0
        %2242 = vmatprep.subr.mxu0 0.0
        %2243 = vmatpush2.msra.mxu0 0.0
        %2244 = vmatprep.subr.mxu0 0.0
        %2245 = vmatpush2.msra.mxu0 0.0
        %2246 = vmatprep.subr.mxu0 0.0
        %2247 = vmatpush2.msra.mxu0 0.0
        %2248 = vmatprep.subr.mxu0 0.0
        %2249 = vmatpush2.msra.mxu0 0.0
        %2250 = vmatprep.mubr.f32.mxu0 0.0
        %2251 = vmatmul.mubr.f32.gmra.mxu0 %v2181
        %v2252 = vpop.f32.mrf.mxu0
        %v2253 = vadd.f32 %v2177, %v2252
        %v2254 = vpop.f32.mrf.mxu0
        %2255 = vmatprep.mubr.f32.mxu0 0.0
        %2256 = vmatmul.mubr.f32.gmra.mxu0 %v2184
        %v2257 = vpop.f32.mrf.mxu0
        %v2258 = vadd.f32 %v2177, %v2257
        %v2259 = vpop.f32.mrf.mxu0
        %2260 = vdwg.mxu0
        %v2261 = vadd.f32 %v2068, %v2253
        %v2262 = vadd.f32 %v2069, %v2258
        %v2263 = vld [vmem:[%s11] sm:$0x1]
        %v2264 = vld [vmem:[%s12] sm:$0x1]
        %v2265 = vsel %vm470, %v2261, 0.0
        %2266 = vadd.xlane.f32.xlu0 %v2265
        %v2267 = vpop.xlane.xlu0 %2266
        %v2268 = vsel %vm470, %v2262, 0.0
        %2269 = vadd.xlane.f32.xlu0 %v2268
        %v2270 = vpop.xlane.xlu0 %2269
        %v2271 = vmul.f32 %v2267, %v2033
        %v2272 = vmul.f32 %v2270, %v2033
        %v2273 = vsub.f32 %v2261, %v2271
        %v2274 = vsub.f32 %v2262, %v2272
        %v2275 = vmul.f32 %v2273, %v2273
        %v2276 = vmul.f32 %v2274, %v2274
        %v2277 = vsel %vm470, %v2275, 0.0
        %2278 = vadd.xlane.f32.xlu0 %v2277
        %v2279 = vpop.xlane.xlu0 %2278
        %v2280 = vsel %vm470, %v2276, 0.0
        %2281 = vadd.xlane.f32.xlu0 %v2280
        %v2282 = vpop.xlane.xlu0 %2281
        %v2283 = vmul.f32 %v2279, %v2033
        %v2284 = vmul.f32 %v2282, %v2033
        %v2285 = vadd.f32 %v2283, 1e-05
        %v2286 = vadd.f32 %v2284, 1e-05
        %v2287 = vrsqrt.pop %v2285
        %v2288 = vrsqrt.pop %v2286
        %v2289 = vmul.f32 %v2273, %v2287
        %v2290 = vmul.f32 %v2274, %v2288
        %v2292 = vlaneseq
        %v2293 = vshrl.u32 %v2292, 7
        %v2294 = vsub.s32 0, %v2293
        %v2295 = vrot.slane %v2263, %v2294
        %v2297 = vmul.f32 %v2289, %v2295
        %v2298 = vmul.f32 %v2290, %v2295
        %v2300 = vlaneseq
        %v2301 = vshrl.u32 %v2300, 7
        %v2302 = vsub.s32 0, %v2301
        %v2303 = vrot.slane %v2264, %v2302
        %v2305 = vadd.f32 %v2297, %v2303
        %v2306 = vadd.f32 %v2298, %v2303
        %2307 = vst.msk [vmem:[%s449] sm:$0xff] %vm470, %v2305
        %2308 = vst.msk [vmem:[%s449 + $0x8] sm:$0xff] %vm470, %v2306
        %s2309 = sand.u32 %s314, 1
        %s2310 = scalar_lea.sflag [#allocation6], %s2309
        %s2311 = sand.u32 %s314, 1
        %s2312 = smul.addr %s2311, 16
        %s2313 = scalar_lea.vmem [#allocation7], %s2312
        // Predicated region
        $region77: #{tpu_custom_call.1} parent=71 // pred_check
          %p2314 = pneg %p324
        $region78: #{tpu_custom_call.1} parent=71 // pred_check_branch
          %2316 = sbr.rel (%p2314) target = $region80
        $region79: #{tpu_custom_call.1} parent=71 // pred_region
          %s2317 = smul.u32 2, %s28
          %s2319 = ssub.s32 256, 256
          %2320 = vsyncadd %s2310, %s2319
          %s2321 = smul.addr %s2317, 128
          %s2322 = scalar_lea.hbm %s13, %s2321
          %s2323 = sshll.u32 %s2313, 4
          %s2324 = int_to_ptr.vmem [resolvable:$true] %s2323
          %2329 = dma.vmem_to_hbm [thread:$0]  %s2324, 256, %s2322, %s2310, 128, 128, 8
        $region80: #{tpu_custom_call.1} parent=71 // pred_fallthru
          _
      $region72: #{tpu_custom_call.1} parent=5 // pred_fallthru
        _
      %p2330 = scmp.le.s32.totalorder 2, %s23
      // Predicated region
      $region81: #{tpu_custom_call.1} parent=5 // pred_check
        %p2331 = pneg %p2330
      $region82: #{tpu_custom_call.1} parent=5 // pred_check_branch
        %2333 = sbr.rel (%p2331) target = $region84
      $region83: #{tpu_custom_call.1} parent=5 // pred_region
        %s2334 = ssub.s32 %s23, 2
        // Predicated region
        $region85: #{tpu_custom_call.1} parent=83 // pred_check
          %p2335 = pneg %p330
        $region86: #{tpu_custom_call.1} parent=83 // pred_check_branch
          %2337 = sbr.rel (%p2335) target = $region88
        $region87: #{tpu_custom_call.1} parent=83 // pred_region
          %s2338 = sand.u32 %s315, 1
          %s2339 = scalar_lea.sflag [#allocation6], %s2338
          %s2340 = sand.u32 %s315, 1
          %s2341 = smul.addr %s2340, 16
          %s2342 = scalar_lea.vmem [#allocation7], %s2341
          %2343 = dma.done %s2339, 256
        $region88: #{tpu_custom_call.1} parent=83 // pred_fallthru
          _
      $region84: #{tpu_custom_call.1} parent=5 // pred_fallthru
        _
    $region6: #{tpu_custom_call.1} parent=1 // loop_footer
      %s27 = sadd.s32 1, %s23
    $region7: #{tpu_custom_call.1} parent=1 // loop_footer_branch
      %22 = sbr.rel target = $region3
    $region8: #{tpu_custom_call.1} parent=1 // loop_exit
      _
    %2344 = vsyncpa [#allocation5], 1
    %s2345 = scalar_lea.sflag [#allocation5], 1
    %2346 = vsyncpa %s2345, 1
    %2347 = vsyncpa [#allocation6], 1
    %s2348 = scalar_lea.sflag [#allocation6], 1
    %2349 = vsyncpa %s2348, 1

// kernel: tpu_custom_call.1
$region0: #{tpu_custom_call.1}
  #allocation0 [shape = 'u32[]', space=smem, size = 0x4, offset = 0x4, fixed_abs, tag = 'smem constant byte address 0x4 - core index']
  #allocation1 [shape = 'u32[144,128]{1,0:T(1,128)}', space=vmem, size = 0x12000, scoped, tag = 'internal scratch']
  #allocation2 [shape = 'f32[16,96]{1,0:T(8,128)}', space=vmem, size = 0x2000, scoped, tag = 'scratch operand']
  #allocation3 [shape = 'f32[16,32]{1,0:T(8,128)}', space=vmem, size = 0x2000, scoped, tag = 'scratch operand']
  %s0 = inlined_call_operand.vmem [shape: f32[4,8,32], index: 0, kind: input, shape index: {}]
  %s1 = inlined_call_operand.vmem [shape: f32[32,96], index: 1, kind: input, shape index: {}]
  %s2 = inlined_call_operand.vmem [shape: f32[1,96], index: 2, kind: input, shape index: {}]
  %s3 = inlined_call_operand.vmem [shape: f32[32,32], index: 3, kind: input, shape index: {}]
  %s4 = inlined_call_operand.vmem [shape: f32[1,32], index: 4, kind: input, shape index: {}]
  %s5 = inlined_call_operand.hbm [shape: f32[32,64], index: 5, kind: input, shape index: {}]
  %s6 = inlined_call_operand.vmem [shape: f32[1,64], index: 6, kind: input, shape index: {}]
  %s7 = inlined_call_operand.vmem [shape: f32[64,32], index: 7, kind: input, shape index: {}]
  %s8 = inlined_call_operand.vmem [shape: f32[1,32], index: 8, kind: input, shape index: {}]
  %s9 = inlined_call_operand.vmem [shape: f32[1,32], index: 9, kind: input, shape index: {}]
  %s10 = inlined_call_operand.vmem [shape: f32[1,32], index: 10, kind: input, shape index: {}]
  %s11 = inlined_call_operand.vmem [shape: f32[1,32], index: 11, kind: input, shape index: {}]
  %s12 = inlined_call_operand.vmem [shape: f32[1,32], index: 12, kind: input, shape index: {}]
  %s13 = inlined_call_operand.hbm [shape: f32[4,8,32], index: 13, kind: output, shape index: {}]
  %s14 = sld [smem:[#allocation0]]
  $region89: #{tpu_custom_call.1} parent=0
    _
  %s16 = ssub.s32 1, %s14
  %s17 = scalar_select 0, %s16, %s14
  $region1: #{tpu_custom_call.1} parent=0
    #allocation4 [shape = 'u8[16384]{0}', space=vmem, size = 0x4000, scoped, tag = 'input window, operand 5, single buffered']
    #allocation5 [shape = 's32[2]{0}', space=sflag, size = 0x8, scoped, tag = 'scoped memory for tpu_custom_call.1']
    #allocation6 [shape = 's32[2]{0}', space=sflag, size = 0x8, scoped, tag = 'scoped memory for tpu_custom_call.1']
    #allocation7 [shape = 'u8[16384]{0}', space=vmem, size = 0x4000, scoped, tag = 'output window, operand 0']
    %18 = vsyncpa [#allocation5], 0
    %19 = vsyncpa [#allocation6], 0
    %s20 = scalar_lea.sflag [#allocation6], 1
    %21 = vsyncpa %s20, 0
    loop: start=0, step=1, limit=4
    $region2: #{tpu_custom_call.1} parent=1 // loop_pre_header
      _
    $region3: #{tpu_custom_call.1} parent=1 // loop_header
      %s23 = sphi 0, %s27
      %p24 = scmp.ge.s32.totalorder %s23, 4
      %s33 = sphi 0, %s35
      %s36 = sphi 0, %s33
      %s37 = sphi 0, %s36
      %s53 = sphi 0, %s37
      %s57 = sphi 0, %s57
      %s59 = sphi 0, %s57
      %s60 = sphi 0, %s59
      %s74 = sphi 0, %s60
      %s78 = sphi 0, %s78
      %s80 = sphi 0, %s78
      %s81 = sphi 0, %s80
      %s95 = sphi 0, %s81
      %s99 = sphi 0, %s99
      %s101 = sphi 0, %s99
      %s102 = sphi 0, %s101
      %s116 = sphi 0, %s102
      %s120 = sphi 0, %s120
      %s122 = sphi 0, %s120
      %s123 = sphi 0, %s122
      %s137 = sphi 0, %s123
      %s141 = sphi 0, %s141
      %s143 = sphi 0, %s141
      %s144 = sphi 0, %s143
      %s158 = sphi 0, %s144
      %s162 = sphi 0, %s162
      %s164 = sphi 0, %s162
      %s165 = sphi 0, %s164
      %s179 = sphi 0, %s165
      %s183 = sphi 0, %s183
      %s185 = sphi 0, %s183
      %s186 = sphi 0, %s185
      %s200 = sphi 0, %s186
      %s204 = sphi 0, %s204
      %s206 = sphi 0, %s204
      %s207 = sphi 0, %s206
      %s221 = sphi 0, %s207
      %s225 = sphi 0, %s225
      %s227 = sphi 0, %s225
      %s228 = sphi 0, %s227
      %s242 = sphi 0, %s228
      %s246 = sphi 0, %s246
      %s248 = sphi 0, %s246
      %s249 = sphi 0, %s248
      %s263 = sphi 0, %s249
      %s267 = sphi 0, %s267
      %s269 = sphi 0, %s267
      %s270 = sphi 0, %s269
      %s284 = sphi 0, %s270
      %s288 = sphi 0, %s288
      %s290 = sphi 0, %s288
      %s291 = sphi 0, %s290
      %s305 = sphi 0, %s291
      %s311 = sphi 0, %s313
      %s314 = sphi 0, %s311
      %s315 = sphi 0, %s314
      %s331 = sphi 0, %s315
    $region4: #{tpu_custom_call.1} parent=1 // loop_header_branch
      %26 = sbr.rel (%p24) target = $region8
    $region5: #{tpu_custom_call.1} parent=1 // loop_body
      %s28 = ssub.s32 %s23, 1
      %s29 = ssub.s32 %s23, 2
      %s30 = sadd.s32 %s23, 1
      %s31 = ssub.s32 %s23, %s30
      %p32 = scmp.eq.s32.totalorder %s31, 0
      %s34 = sadd.s32 %s33, 1
      %s35 = scalar_select %p32, %s33, %s34
      %p38 = pneg %p32
      %p39 = scmp.eq.s32.totalorder %s23, 1
      %p40 = por %p38, %p39
      %p41 = scmp.ne.s32.totalorder %s33, %s36
      %p42 = scmp.eq.s32.totalorder %s23, 0
      %p43 = por %p41, %p42
      %p44 = scmp.ne.s32.totalorder %s33, %s36
      %p45 = scmp.eq.s32.totalorder %s28, 1
      %p46 = por %p44, %p45
      %p47 = scmp.ne.s32.totalorder %s36, %s37
      %p48 = scmp.eq.s32.totalorder %s28, 0
      %p49 = por %p47, %p48
      %p50 = scmp.ne.s32.totalorder %s36, %s37
      %p51 = scmp.eq.s32.totalorder %s29, 1
      %p52 = por %p50, %p51
      %p54 = scmp.ne.s32.totalorder %s37, %s53
      %p55 = scmp.eq.s32.totalorder %s29, 0
      %p56 = por %p54, %p55
      %s58 = sadd.s32 %s57, 1
      %p61 = scmp.eq.s32.totalorder %s23, 1
      %p62 = scmp.ne.s32.totalorder %s57, %s59
      %p63 = scmp.eq.s32.totalorder %s23, 0
      %p64 = por %p62, %p63
      %p65 = scmp.ne.s32.totalorder %s57, %s59
      %p66 = scmp.eq.s32.totalorder %s28, 1
      %p67 = por %p65, %p66
      %p68 = scmp.ne.s32.totalorder %s59, %s60
      %p69 = scmp.eq.s32.totalorder %s28, 0
      %p70 = por %p68, %p69
      %p71 = scmp.ne.s32.totalorder %s59, %s60
      %p72 = scmp.eq.s32.totalorder %s29, 1
      %p73 = por %p71, %p72
      %p75 = scmp.ne.s32.totalorder %s60, %s74
      %p76 = scmp.eq.s32.totalorder %s29, 0
      %p77 = por %p75, %p76
      %s79 = sadd.s32 %s78, 1
      %p82 = scmp.eq.s32.totalorder %s23, 1
      %p83 = scmp.ne.s32.totalorder %s78, %s80
      %p84 = scmp.eq.s32.totalorder %s23, 0
      %p85 = por %p83, %p84
      %p86 = scmp.ne.s32.totalorder %s78, %s80
      %p87 = scmp.eq.s32.totalorder %s28, 1
      %p88 = por %p86, %p87
      %p89 = scmp.ne.s32.totalorder %s80, %s81
      %p90 = scmp.eq.s32.totalorder %s28, 0
      %p91 = por %p89, %p90
      %p92 = scmp.ne.s32.totalorder %s80, %s81
      %p93 = scmp.eq.s32.totalorder %s29, 1
      %p94 = por %p92, %p93
      %p96 = scmp.ne.s32.totalorder %s81, %s95
      %p97 = scmp.eq.s32.totalorder %s29, 0
      %p98 = por %p96, %p97
      %s100 = sadd.s32 %s99, 1
      %p103 = scmp.eq.s32.totalorder %s23, 1
      %p104 = scmp.ne.s32.totalorder %s99, %s101
      %p105 = scmp.eq.s32.totalorder %s23, 0
      %p106 = por %p104, %p105
      %p107 = scmp.ne.s32.totalorder %s99, %s101
      %p108 = scmp.eq.s32.totalorder %s28, 1
      %p109 = por %p107, %p108
      %p110 = scmp.ne.s32.totalorder %s101, %s102
      %p111 = scmp.eq.s32.totalorder %s28, 0
      %p112 = por %p110, %p111
      %p113 = scmp.ne.s32.totalorder %s101, %s102
      %p114 = scmp.eq.s32.totalorder %s29, 1
      %p115 = por %p113, %p114
      %p117 = scmp.ne.s32.totalorder %s102, %s116
      %p118 = scmp.eq.s32.totalorder %s29, 0
      %p119 = por %p117, %p118
      %s121 = sadd.s32 %s120, 1
      %p124 = scmp.eq.s32.totalorder %s23, 1
      %p125 = scmp.ne.s32.totalorder %s120, %s122
      %p126 = scmp.eq.s32.totalorder %s23, 0
      %p127 = por %p125, %p126
      %p128 = scmp.ne.s32.totalorder %s120, %s122
      %p129 = scmp.eq.s32.totalorder %s28, 1
      %p130 = por %p128, %p129
      %p131 = scmp.ne.s32.totalorder %s122, %s123
      %p132 = scmp.eq.s32.totalorder %s28, 0
      %p133 = por %p131, %p132
      %p134 = scmp.ne.s32.totalorder %s122, %s123
      %p135 = scmp.eq.s32.totalorder %s29, 1
      %p136 = por %p134, %p135
      %p138 = scmp.ne.s32.totalorder %s123, %s137
      %p139 = scmp.eq.s32.totalorder %s29, 0
      %p140 = por %p138, %p139
      %s142 = sadd.s32 %s141, 1
      %p145 = scmp.eq.s32.totalorder %s23, 1
      %p146 = scmp.ne.s32.totalorder %s141, %s143
      %p147 = scmp.eq.s32.totalorder %s23, 0
      %p148 = por %p146, %p147
      %p149 = scmp.ne.s32.totalorder %s141, %s143
      %p150 = scmp.eq.s32.totalorder %s28, 1
      %p151 = por %p149, %p150
      %p152 = scmp.ne.s32.totalorder %s143, %s144
      %p153 = scmp.eq.s32.totalorder %s28, 0
      %p154 = por %p152, %p153
      %p155 = scmp.ne.s32.totalorder %s143, %s144
      %p156 = scmp.eq.s32.totalorder %s29, 1
      %p157 = por %p155, %p156
      %p159 = scmp.ne.s32.totalorder %s144, %s158
      %p160 = scmp.eq.s32.totalorder %s29, 0
      %p161 = por %p159, %p160
      %s163 = sadd.s32 %s162, 1
      %p166 = scmp.eq.s32.totalorder %s23, 1
      %p167 = scmp.ne.s32.totalorder %s162, %s164
      %p168 = scmp.eq.s32.totalorder %s23, 0
      %p169 = por %p167, %p168
      %p170 = scmp.ne.s32.totalorder %s162, %s164
      %p171 = scmp.eq.s32.totalorder %s28, 1
      %p172 = por %p170, %p171
      %p173 = scmp.ne.s32.totalorder %s164, %s165
      %p174 = scmp.eq.s32.totalorder %s28, 0
      %p175 = por %p173, %p174
      %p176 = scmp.ne.s32.totalorder %s164, %s165
      %p177 = scmp.eq.s32.totalorder %s29, 1
      %p178 = por %p176, %p177
      %p180 = scmp.ne.s32.totalorder %s165, %s179
      %p181 = scmp.eq.s32.totalorder %s29, 0
      %p182 = por %p180, %p181
      %s184 = sadd.s32 %s183, 1
      %p187 = scmp.eq.s32.totalorder %s23, 1
      %p188 = scmp.ne.s32.totalorder %s183, %s185
      %p189 = scmp.eq.s32.totalorder %s23, 0
      %p190 = por %p188, %p189
      %p191 = scmp.ne.s32.totalorder %s183, %s185
      %p192 = scmp.eq.s32.totalorder %s28, 1
      %p193 = por %p191, %p192
      %p194 = scmp.ne.s32.totalorder %s185, %s186
      %p195 = scmp.eq.s32.totalorder %s28, 0
      %p196 = por %p194, %p195
      %p197 = scmp.ne.s32.totalorder %s185, %s186
      %p198 = scmp.eq.s32.totalorder %s29, 1
      %p199 = por %p197, %p198
      %p201 = scmp.ne.s32.totalorder %s186, %s200
      %p202 = scmp.eq.s32.totalorder %s29, 0
      %p203 = por %p201, %p202
      %s205 = sadd.s32 %s204, 1
      %p208 = scmp.eq.s32.totalorder %s23, 1
      %p209 = scmp.ne.s32.totalorder %s204, %s206
      %p210 = scmp.eq.s32.totalorder %s23, 0
      %p211 = por %p209, %p210
      %p212 = scmp.ne.s32.totalorder %s204, %s206
      %p213 = scmp.eq.s32.totalorder %s28, 1
      %p214 = por %p212, %p213
      %p215 = scmp.ne.s32.totalorder %s206, %s207
      %p216 = scmp.eq.s32.totalorder %s28, 0
      %p217 = por %p215, %p216
      %p218 = scmp.ne.s32.totalorder %s206, %s207
      %p219 = scmp.eq.s32.totalorder %s29, 1
      %p220 = por %p218, %p219
      %p222 = scmp.ne.s32.totalorder %s207, %s221
      %p223 = scmp.eq.s32.totalorder %s29, 0
      %p224 = por %p222, %p223
      %s226 = sadd.s32 %s225, 1
      %p229 = scmp.eq.s32.totalorder %s23, 1
      %p230 = scmp.ne.s32.totalorder %s225, %s227
      %p231 = scmp.eq.s32.totalorder %s23, 0
      %p232 = por %p230, %p231
      %p233 = scmp.ne.s32.totalorder %s225, %s227
      %p234 = scmp.eq.s32.totalorder %s28, 1
      %p235 = por %p233, %p234
      %p236 = scmp.ne.s32.totalorder %s227, %s228
      %p237 = scmp.eq.s32.totalorder %s28, 0
      %p238 = por %p236, %p237
      %p239 = scmp.ne.s32.totalorder %s227, %s228
      %p240 = scmp.eq.s32.totalorder %s29, 1
      %p241 = por %p239, %p240
      %p243 = scmp.ne.s32.totalorder %s228, %s242
      %p244 = scmp.eq.s32.totalorder %s29, 0
      %p245 = por %p243, %p244
      %s247 = sadd.s32 %s246, 1
      %p250 = scmp.eq.s32.totalorder %s23, 1
      %p251 = scmp.ne.s32.totalorder %s246, %s248
      %p252 = scmp.eq.s32.totalorder %s23, 0
      %p253 = por %p251, %p252
      %p254 = scmp.ne.s32.totalorder %s246, %s248
      %p255 = scmp.eq.s32.totalorder %s28, 1
      %p256 = por %p254, %p255
      %p257 = scmp.ne.s32.totalorder %s248, %s249
      %p258 = scmp.eq.s32.totalorder %s28, 0
      %p259 = por %p257, %p258
      %p260 = scmp.ne.s32.totalorder %s248, %s249
      %p261 = scmp.eq.s32.totalorder %s29, 1
      %p262 = por %p260, %p261
      %p264 = scmp.ne.s32.totalorder %s249, %s263
      %p265 = scmp.eq.s32.totalorder %s29, 0
      %p266 = por %p264, %p265
      %s268 = sadd.s32 %s267, 1
      %p271 = scmp.eq.s32.totalorder %s23, 1
      %p272 = scmp.ne.s32.totalorder %s267, %s269
      %p273 = scmp.eq.s32.totalorder %s23, 0
      %p274 = por %p272, %p273
      %p275 = scmp.ne.s32.totalorder %s267, %s269
      %p276 = scmp.eq.s32.totalorder %s28, 1
      %p277 = por %p275, %p276
      %p278 = scmp.ne.s32.totalorder %s269, %s270
      %p279 = scmp.eq.s32.totalorder %s28, 0
      %p280 = por %p278, %p279
      %p281 = scmp.ne.s32.totalorder %s269, %s270
      %p282 = scmp.eq.s32.totalorder %s29, 1
      %p283 = por %p281, %p282
      %p285 = scmp.ne.s32.totalorder %s270, %s284
      %p286 = scmp.eq.s32.totalorder %s29, 0
      %p287 = por %p285, %p286
      %s289 = sadd.s32 %s288, 1
      %p292 = scmp.eq.s32.totalorder %s23, 1
      %p293 = scmp.ne.s32.totalorder %s288, %s290
      %p294 = scmp.eq.s32.totalorder %s23, 0
      %p295 = por %p293, %p294
      %p296 = scmp.ne.s32.totalorder %s288, %s290
      %p297 = scmp.eq.s32.totalorder %s28, 1
      %p298 = por %p296, %p297
      %p299 = scmp.ne.s32.totalorder %s290, %s291
      %p300 = scmp.eq.s32.totalorder %s28, 0
      %p301 = por %p299, %p300
      %p302 = scmp.ne.s32.totalorder %s290, %s291
      %p303 = scmp.eq.s32.totalorder %s29, 1
      %p304 = por %p302, %p303
      %p306 = scmp.ne.s32.totalorder %s291, %s305
      %p307 = scmp.eq.s32.totalorder %s29, 0
      %p308 = por %p306, %p307
      %s309 = ssub.s32 %s23, %s30
      %p310 = scmp.eq.s32.totalorder %s309, 0
      %s312 = sadd.s32 %s311, 1
      %s313 = scalar_select %p310, %s311, %s312
      %p316 = pneg %p310
      %p317 = scmp.eq.s32.totalorder %s23, 1
      %p318 = por %p316, %p317
      %p319 = scmp.ne.s32.totalorder %s311, %s314
      %p320 = scmp.eq.s32.totalorder %s23, 0
      %p321 = por %p319, %p320
      %p322 = scmp.ne.s32.totalorder %s311, %s314
      %p323 = scmp.eq.s32.totalorder %s28, 1
      %p324 = por %p322, %p323
      %p325 = scmp.ne.s32.totalorder %s314, %s315
      %p326 = scmp.eq.s32.totalorder %s28, 0
      %p327 = por %p325, %p326
      %p328 = scmp.ne.s32.totalorder %s314, %s315
      %p329 = scmp.eq.s32.totalorder %s29, 1
      %p330 = por %p328, %p329
      %p332 = scmp.ne.s32.totalorder %s315, %s331
      %p333 = scmp.eq.s32.totalorder %s29, 0
      %p334 = por %p332, %p333
      %p335 = scmp.le.s32.totalorder 1, %s23
      %p336 = scmp.lt.s32.totalorder %s23, 3
      %p337 = pnand %p335, %p336
      %p338 = pneg %p337
      // Predicated region
      $region9: #{tpu_custom_call.1} parent=5 // pred_check
        _
      $region10: #{tpu_custom_call.1} parent=5 // pred_check_branch
        %340 = sbr.rel (%p337) target = $region12
      $region11: #{tpu_custom_call.1} parent=5 // pred_region
        %s341 = ssub.s32 %s23, 1
        // Predicated region
        $region13: #{tpu_custom_call.1} parent=11 // pred_check
          %p342 = pneg %p70
        $region14: #{tpu_custom_call.1} parent=11 // pred_check_branch
          %344 = sbr.rel (%p342) target = $region16
        $region15: #{tpu_custom_call.1} parent=11 // pred_region
          _
        $region16: #{tpu_custom_call.1} parent=11 // pred_fallthru
          _
        // Predicated region
        $region17: #{tpu_custom_call.1} parent=11 // pred_check
          %p345 = pneg %p91
        $region18: #{tpu_custom_call.1} parent=11 // pred_check_branch
          %347 = sbr.rel (%p345) target = $region20
        $region19: #{tpu_custom_call.1} parent=11 // pred_region
          _
        $region20: #{tpu_custom_call.1} parent=11 // pred_fallthru
          _
        // Predicated region
        $region21: #{tpu_custom_call.1} parent=11 // pred_check
          %p348 = pneg %p112
        $region22: #{tpu_custom_call.1} parent=11 // pred_check_branch
          %350 = sbr.rel (%p348) target = $region24
        $region23: #{tpu_custom_call.1} parent=11 // pred_region
          _
        $region24: #{tpu_custom_call.1} parent=11 // pred_fallthru
          _
        // Predicated region
        $region25: #{tpu_custom_call.1} parent=11 // pred_check
          %p351 = pneg %p133
        $region26: #{tpu_custom_call.1} parent=11 // pred_check_branch
          %353 = sbr.rel (%p351) target = $region28
        $region27: #{tpu_custom_call.1} parent=11 // pred_region
          _
        $region28: #{tpu_custom_call.1} parent=11 // pred_fallthru
          _
        // Predicated region
        $region29: #{tpu_custom_call.1} parent=11 // pred_check
          %p354 = pneg %p154
        $region30: #{tpu_custom_call.1} parent=11 // pred_check_branch
          %356 = sbr.rel (%p354) target = $region32
        $region31: #{tpu_custom_call.1} parent=11 // pred_region
          %s358 = ssub.s32 512, 512
          %359 = vsyncadd [#allocation5], %s358
          %s360 = sshll.u32 [#allocation4], 4
          %s361 = int_to_ptr.vmem [resolvable:$true] %s360
          %366 = dma.hbm_to_vmem [thread:$0]  %s5, 512, %s361, [#allocation5], 128, 128, 8
        $region32: #{tpu_custom_call.1} parent=11 // pred_fallthru
          _
        // Predicated region
        $region33: #{tpu_custom_call.1} parent=11 // pred_check
          %p367 = pneg %p175
        $region34: #{tpu_custom_call.1} parent=11 // pred_check_branch
          %369 = sbr.rel (%p367) target = $region36
        $region35: #{tpu_custom_call.1} parent=11 // pred_region
          _
        $region36: #{tpu_custom_call.1} parent=11 // pred_fallthru
          _
        // Predicated region
        $region37: #{tpu_custom_call.1} parent=11 // pred_check
          %p370 = pneg %p196
        $region38: #{tpu_custom_call.1} parent=11 // pred_check_branch
          %372 = sbr.rel (%p370) target = $region40
        $region39: #{tpu_custom_call.1} parent=11 // pred_region
          _
        $region40: #{tpu_custom_call.1} parent=11 // pred_fallthru
          _
        // Predicated region
        $region41: #{tpu_custom_call.1} parent=11 // pred_check
          %p373 = pneg %p217
        $region42: #{tpu_custom_call.1} parent=11 // pred_check_branch
          %375 = sbr.rel (%p373) target = $region44
        $region43: #{tpu_custom_call.1} parent=11 // pred_region
          _
        $region44: #{tpu_custom_call.1} parent=11 // pred_fallthru
          _
        // Predicated region
        $region45: #{tpu_custom_call.1} parent=11 // pred_check
          %p376 = pneg %p238
        $region46: #{tpu_custom_call.1} parent=11 // pred_check_branch
          %378 = sbr.rel (%p376) target = $region48
        $region47: #{tpu_custom_call.1} parent=11 // pred_region
          _
        $region48: #{tpu_custom_call.1} parent=11 // pred_fallthru
          _
        // Predicated region
        $region49: #{tpu_custom_call.1} parent=11 // pred_check
          %p379 = pneg %p259
        $region50: #{tpu_custom_call.1} parent=11 // pred_check_branch
          %381 = sbr.rel (%p379) target = $region52
        $region51: #{tpu_custom_call.1} parent=11 // pred_region
          _
        $region52: #{tpu_custom_call.1} parent=11 // pred_fallthru
          _
        // Predicated region
        $region53: #{tpu_custom_call.1} parent=11 // pred_check
          %p382 = pneg %p280
        $region54: #{tpu_custom_call.1} parent=11 // pred_check_branch
          %384 = sbr.rel (%p382) target = $region56
        $region55: #{tpu_custom_call.1} parent=11 // pred_region
          _
        $region56: #{tpu_custom_call.1} parent=11 // pred_fallthru
          _
        // Predicated region
        $region57: #{tpu_custom_call.1} parent=11 // pred_check
          %p385 = pneg %p301
        $region58: #{tpu_custom_call.1} parent=11 // pred_check_branch
          %387 = sbr.rel (%p385) target = $region60
        $region59: #{tpu_custom_call.1} parent=11 // pred_region
          _
        $region60: #{tpu_custom_call.1} parent=11 // pred_fallthru
          _
      $region12: #{tpu_custom_call.1} parent=5 // pred_fallthru
        _
      %p388 = scmp.lt.s32.totalorder %s23, 2
      // Predicated region
      $region61: #{tpu_custom_call.1} parent=5 // pred_check
        %p389 = pneg %p388
      $region62: #{tpu_custom_call.1} parent=5 // pred_check_branch
        %391 = sbr.rel (%p389) target = $region64
      $region63: #{tpu_custom_call.1} parent=5 // pred_region
        // Predicated region
        $region65: #{tpu_custom_call.1} parent=63 // pred_check
          %p392 = pneg %p43
        $region66: #{tpu_custom_call.1} parent=63 // pred_check_branch
          %394 = sbr.rel (%p392) target = $region68
        $region67: #{tpu_custom_call.1} parent=63 // pred_region
          %s395 = smul.u32 2, %s23
          %p396 = scmp.lt.s32.totalorder %s395, 3
          %s397 = scalar_select %p396, %s395, 3
          %s398 = smul.addr %s397, 8
          %s399 = scalar_lea.vmem %s0, %s398
          %s400 = smul.u32 2, %s23
        $region68: #{tpu_custom_call.1} parent=63 // pred_fallthru
          _
      $region64: #{tpu_custom_call.1} parent=5 // pred_fallthru
        _
      %p401 = scmp.le.s32.totalorder 1, %s23
      %p402 = scmp.lt.s32.totalorder %s23, 3
      %p403 = pnand %p401, %p402
      %p404 = pneg %p403
      // Predicated region
      $region69: #{tpu_custom_call.1} parent=5 // pred_check
        _
      $region70: #{tpu_custom_call.1} parent=5 // pred_check_branch
        %406 = sbr.rel (%p403) target = $region72
      $region71: #{tpu_custom_call.1} parent=5 // pred_region
        %s407 = ssub.s32 %s23, 1
        // Predicated region
        $region73: #{tpu_custom_call.1} parent=71 // pred_check
          %p408 = pneg %p154
        $region74: #{tpu_custom_call.1} parent=71 // pred_check_branch
          %410 = sbr.rel (%p408) target = $region76
        $region75: #{tpu_custom_call.1} parent=71 // pred_region
          %411 = dma.done [#allocation5], 512
        $region76: #{tpu_custom_call.1} parent=71 // pred_fallthru
          _
        %s412 = smul.u32 2, %s28
        %p413 = scmp.lt.s32.totalorder %s412, 3
        %s414 = scalar_select %p413, %s412, 3
        %s415 = smul.addr %s414, 8
        %s416 = scalar_lea.vmem %s0, %s415
        %p417 = pneg %p49
        %p418 = pneg %p46
        %p419 = pneg %p70
        %p420 = pneg %p67
        %p421 = pneg %p91
        %p422 = pneg %p88
        %p423 = pneg %p112
        %p424 = pneg %p109
        %p425 = pneg %p133
        %p426 = pneg %p130
        %p427 = pneg %p154
        %p428 = pneg %p151
        %p429 = pneg %p175
        %p430 = pneg %p172
        %p431 = pneg %p196
        %p432 = pneg %p193
        %p433 = pneg %p217
        %p434 = pneg %p214
        %p435 = pneg %p238
        %p436 = pneg %p235
        %p437 = pneg %p259
        %p438 = pneg %p256
        %p439 = pneg %p280
        %p440 = pneg %p277
        %p441 = pneg %p301
        %p442 = pneg %p298
        %p443 = pneg %p327
        %p444 = pneg %p324
        %s445 = sand.u32 %s314, 1
        %s446 = scalar_lea.sflag [#allocation6], %s445
        %s447 = sand.u32 %s314, 1
        %s448 = smul.addr %s447, 16
        %s449 = scalar_lea.vmem [#allocation7], %s448
        %s450 = smul.u32 2, %s28
        %p451 = scmp.lt.s32.totalorder %s450, 3
        %s452 = scalar_select %p451, %s450, 3
        %s453 = smul.addr %s452, 8
        %s454 = scalar_lea.vmem %s0, %s453
        %s455 = smul.u32 2, %s28
        %s456 = smul.u32 2, %s28
        %v457 = vld [vmem:[%s454] sm:$0xff]
        %v458 = vld [vmem:[%s454 + $0x8] sm:$0xff]
        %v459 = vld [vmem:[%s1] sm:$0xff]
        %v460 = vld [vmem:[%s1 + $0x8] sm:$0xff]
        %v461 = vld [vmem:[%s1 + $0x10] sm:$0xff]
        %v462 = vld [vmem:[%s1 + $0x18] sm:$0xff]
        %v463 = vld [vmem:[%s2] sm:$0x1]
        %v465 = vlaneseq
        %v466 = vshrl.u32 %v465, 7
        %v467 = vsub.s32 0, %v466
        %v468 = vrot.slane %v463, %v467
        %vm470 = vcmask 261120
        %v472 = vsel %vm470, %v457, 0
        %v475 = vsel %vm470, %v458, 0
        %477 = vmatprep.subr.mxu0 0.0
        %478 = vmatpush1.msra.mxu0 0.0
        %479 = vmatprep.subr.mxu0 0.0
        %480 = vmatpush1.msra.mxu0 0.0
        %481 = vmatprep.subr.mxu0 0.0
        %482 = vmatpush1.msra.mxu0 0.0
        %483 = vmatprep.subr.mxu0 0.0
        %484 = vmatpush1.msra.mxu0 0.0
        %485 = vmatprep.subr.mxu0 0.0
        %486 = vmatpush1.msra.mxu0 0.0
        %487 = vmatprep.subr.mxu0 0.0
        %488 = vmatpush1.msra.mxu0 0.0
        %489 = vmatprep.subr.mxu0 0.0
        %490 = vmatpush1.msra.mxu0 0.0
        %491 = vmatprep.subr.mxu0 0.0
        %492 = vmatpush1.msra.mxu0 0.0
        %493 = vmatprep.subr.mxu0 0.0
        %494 = vmatpush1.msra.mxu0 0.0
        %495 = vmatprep.subr.mxu0 0.0
        %496 = vmatpush1.msra.mxu0 0.0
        %497 = vmatprep.subr.mxu0 0.0
        %498 = vmatpush1.msra.mxu0 0.0
        %499 = vmatprep.subr.mxu0 0.0
        %500 = vmatpush1.msra.mxu0 0.0
        %501 = vmatprep.subr.mxu0 0.0
        %502 = vmatpush1.msra.mxu0 %v462
        %503 = vmatprep.subr.mxu0 0.0
        %504 = vmatpush1.msra.mxu0 %v461
        %505 = vmatprep.subr.mxu0 0.0
        %506 = vmatpush1.msra.mxu0 %v460
        %507 = vmatprep.subr.mxu0 0.0
        %508 = vmatpush1.msra.mxu0 %v459
        %509 = vmatprep.subr.mxu0 0.0
        %510 = vmatpush2.msra.mxu0 0.0
        %511 = vmatprep.subr.mxu0 0.0
        %512 = vmatpush2.msra.mxu0 0.0
        %513 = vmatprep.subr.mxu0 0.0
        %514 = vmatpush2.msra.mxu0 0.0
        %515 = vmatprep.subr.mxu0 0.0
        %516 = vmatpush2.msra.mxu0 0.0
        %517 = vmatprep.subr.mxu0 0.0
        %518 = vmatpush2.msra.mxu0 0.0
        %519 = vmatprep.subr.mxu0 0.0
        %520 = vmatpush2.msra.mxu0 0.0
        %521 = vmatprep.subr.mxu0 0.0
        %522 = vmatpush2.msra.mxu0 0.0
        %523 = vmatprep.subr.mxu0 0.0
        %524 = vmatpush2.msra.mxu0 0.0
        %525 = vmatprep.subr.mxu0 0.0
        %526 = vmatpush2.msra.mxu0 0.0
        %527 = vmatprep.subr.mxu0 0.0
        %528 = vmatpush2.msra.mxu0 0.0
        %529 = vmatprep.subr.mxu0 0.0
        %530 = vmatpush2.msra.mxu0 0.0
        %531 = vmatprep.subr.mxu0 0.0
        %532 = vmatpush2.msra.mxu0 0.0
        %533 = vmatprep.subr.mxu0 0.0
        %534 = vmatpush2.msra.mxu0 0.0
        %535 = vmatprep.subr.mxu0 0.0
        %536 = vmatpush2.msra.mxu0 0.0
        %537 = vmatprep.subr.mxu0 0.0
        %538 = vmatpush2.msra.mxu0 0.0
        %539 = vmatprep.subr.mxu0 0.0
        %540 = vmatpush2.msra.mxu0 0.0
        %541 = vmatprep.mubr.f32.mxu0 0.0
        %542 = vmatmul.mubr.f32.gmra.mxu0 %v472
        %v543 = vpop.f32.mrf.mxu0
        %v544 = vadd.f32 %v468, %v543
        %v545 = vpop.f32.mrf.mxu0
        %546 = vmatprep.mubr.f32.mxu0 0.0
        %547 = vmatmul.mubr.f32.gmra.mxu0 %v475
        %v548 = vpop.f32.mrf.mxu0
        %v549 = vadd.f32 %v468, %v548
        %v550 = vpop.f32.mrf.mxu0
        %551 = vdwg.mxu0
        %v552 = vmul.f32 %v544, 0.35355338
        %v553 = vmul.f32 %v549, 0.35355338
        %554 = vst.msk [vmem:[#allocation2] sm:$0xff] %vm470, %v552
        %555 = vst.msk [vmem:[#allocation2 + $0x8] sm:$0xff] %vm470, %v553
        %vm556 = vcmask 785664
        %557 = vst.msk [vmem:[#allocation2] sm:$0xff] %vm556, %v544
        %558 = vst.msk [vmem:[#allocation2 + $0x8] sm:$0xff] %vm556, %v549
        %v559 = vld [vmem:[#allocation2] sm:$0xff]
        %561 = vrot.lane.b32.xlu0 %v559, 96
        %v562 = vpop.permute.xlu0 %561
        %vm563 = vcmask 64512
        %v564 = vsel %vm563, %v559, 0
        %v566 = vsel %vm563, %v562, 0
        %568 = vmatprep.subr.mxu0 0.0
        %569 = vmatpush1.xpose.msra.mxu0 0.0
        %570 = vmatprep.subr.mxu0 0.0
        %571 = vmatpush1.xpose.msra.mxu0 0.0
        %572 = vmatprep.subr.mxu0 0.0
        %573 = vmatpush1.xpose.msra.mxu0 0.0
        %574 = vmatprep.subr.mxu0 0.0
        %575 = vmatpush1.xpose.msra.mxu0 0.0
        %576 = vmatprep.subr.mxu0 0.0
        %577 = vmatpush1.xpose.msra.mxu0 0.0
        %578 = vmatprep.subr.mxu0 0.0
        %579 = vmatpush1.xpose.msra.mxu0 0.0
        %580 = vmatprep.subr.mxu0 0.0
        %581 = vmatpush1.xpose.msra.mxu0 0.0
        %582 = vmatprep.subr.mxu0 0.0
        %583 = vmatpush1.xpose.msra.mxu0 0.0
        %584 = vmatprep.subr.mxu0 0.0
        %585 = vmatpush1.xpose.msra.mxu0 0.0
        %586 = vmatprep.subr.mxu0 0.0
        %587 = vmatpush1.xpose.msra.mxu0 0.0
        %588 = vmatprep.subr.mxu0 0.0
        %589 = vmatpush1.xpose.msra.mxu0 0.0
        %590 = vmatprep.subr.mxu0 0.0
        %591 = vmatpush1.xpose.msra.mxu0 0.0
        %592 = vmatprep.subr.mxu0 0.0
        %593 = vmatpush1.xpose.msra.mxu0 0.0
        %594 = vmatprep.subr.mxu0 0.0
        %595 = vmatpush1.xpose.msra.mxu0 0.0
        %596 = vmatprep.subr.mxu0 0.0
        %597 = vmatpush1.xpose.msra.mxu0 0.0
        %598 = vmatprep.subr.mxu0 0.0
        %599 = vmatpush1.xpose.msra.mxu0 %v566
        %600 = vmatprep.subr.mxu0 0.0
        %601 = vmatpush2.xpose.msra.mxu0 0.0
        %602 = vmatprep.subr.mxu0 0.0
        %603 = vmatpush2.xpose.msra.mxu0 0.0
        %604 = vmatprep.subr.mxu0 0.0
        %605 = vmatpush2.xpose.msra.mxu0 0.0
        %606 = vmatprep.subr.mxu0 0.0
        %607 = vmatpush2.xpose.msra.mxu0 0.0
        %608 = vmatprep.subr.mxu0 0.0
        %609 = vmatpush2.xpose.msra.mxu0 0.0
        %610 = vmatprep.subr.mxu0 0.0
        %611 = vmatpush2.xpose.msra.mxu0 0.0
        %612 = vmatprep.subr.mxu0 0.0
        %613 = vmatpush2.xpose.msra.mxu0 0.0
        %614 = vmatprep.subr.mxu0 0.0
        %615 = vmatpush2.xpose.msra.mxu0 0.0
        %616 = vmatprep.subr.mxu0 0.0
        %617 = vmatpush2.xpose.msra.mxu0 0.0
        %618 = vmatprep.subr.mxu0 0.0
        %619 = vmatpush2.xpose.msra.mxu0 0.0
        %620 = vmatprep.subr.mxu0 0.0
        %621 = vmatpush2.xpose.msra.mxu0 0.0
        %622 = vmatprep.subr.mxu0 0.0
        %623 = vmatpush2.xpose.msra.mxu0 0.0
        %624 = vmatprep.subr.mxu0 0.0
        %625 = vmatpush2.xpose.msra.mxu0 0.0
        %626 = vmatprep.subr.mxu0 0.0
        %627 = vmatpush2.xpose.msra.mxu0 0.0
        %628 = vmatprep.subr.mxu0 0.0
        %629 = vmatpush2.xpose.msra.mxu0 0.0
        %630 = vmatprep.subr.mxu0 0.0
        %631 = vmatpush2.xpose.msra.mxu0 0.0
        %632 = vmatprep.mubr.f32.mxu0 0.0
        %633 = vmatmul.mubr.f32.gmra.mxu0 %v564
        %v634 = vpop.f32.mrf.mxu0
        %v635 = vadd.f32 0.0, %v634
        %v636 = vpop.f32.mrf.mxu0
        %637 = vdwg.mxu0
        %v638 = vsel %vm563, %v635, -inf
        %639 = vmax.xlane.f32.xlu0 %v638
        %v640 = vpop.xlane.xlu0 %639
        %v641 = vsub.f32 %v635, %v640
        %v642 = vmul.f32 %v641, 1.442695
        %v643 = vpow.pop %v642
        %v644 = vsel %vm563, %v643, 0.0
        %645 = vadd.xlane.f32.xlu0 %v644
        %v646 = vpop.xlane.xlu0 %645
        %647 = vrot.lane.b32.xlu0 %v559, 64
        %v648 = vpop.permute.xlu0 %647
        %v651 = vsel %vm563, %v643, 0
        %653 = vmatprep.subr.mxu0 0.0
        %654 = vmatpush1.msra.mxu0 0.0
        %655 = vmatprep.subr.mxu0 0.0
        %656 = vmatpush1.msra.mxu0 0.0
        %657 = vmatprep.subr.mxu0 0.0
        %658 = vmatpush1.msra.mxu0 0.0
        %659 = vmatprep.subr.mxu0 0.0
        %660 = vmatpush1.msra.mxu0 0.0
        %661 = vmatprep.subr.mxu0 0.0
        %662 = vmatpush1.msra.mxu0 0.0
        %663 = vmatprep.subr.mxu0 0.0
        %664 = vmatpush1.msra.mxu0 0.0
        %665 = vmatprep.subr.mxu0 0.0
        %666 = vmatpush1.msra.mxu0 0.0
        %667 = vmatprep.subr.mxu0 0.0
        %668 = vmatpush1.msra.mxu0 0.0
        %669 = vmatprep.subr.mxu0 0.0
        %670 = vmatpush1.msra.mxu0 0.0
        %671 = vmatprep.subr.mxu0 0.0
        %672 = vmatpush1.msra.mxu0 0.0
        %673 = vmatprep.subr.mxu0 0.0
        %674 = vmatpush1.msra.mxu0 0.0
        %675 = vmatprep.subr.mxu0 0.0
        %676 = vmatpush1.msra.mxu0 0.0
        %677 = vmatprep.subr.mxu0 0.0
        %678 = vmatpush1.msra.mxu0 0.0
        %679 = vmatprep.subr.mxu0 0.0
        %680 = vmatpush1.msra.mxu0 0.0
        %681 = vmatprep.subr.mxu0 0.0
        %682 = vmatpush1.msra.mxu0 0.0
        %683 = vmatprep.subr.mxu0 0.0
        %684 = vmatpush1.msra.mxu0 %v648
        %685 = vmatprep.subr.mxu0 0.0
        %686 = vmatpush2.msra.mxu0 0.0
        %687 = vmatprep.subr.mxu0 0.0
        %688 = vmatpush2.msra.mxu0 0.0
        %689 = vmatprep.subr.mxu0 0.0
        %690 = vmatpush2.msra.mxu0 0.0
        %691 = vmatprep.subr.mxu0 0.0
        %692 = vmatpush2.msra.mxu0 0.0
        %693 = vmatprep.subr.mxu0 0.0
        %694 = vmatpush2.msra.mxu0 0.0
        %695 = vmatprep.subr.mxu0 0.0
        %696 = vmatpush2.msra.mxu0 0.0
        %697 = vmatprep.subr.mxu0 0.0
        %698 = vmatpush2.msra.mxu0 0.0
        %699 = vmatprep.subr.mxu0 0.0
        %700 = vmatpush2.msra.mxu0 0.0
        %701 = vmatprep.subr.mxu0 0.0
        %702 = vmatpush2.msra.mxu0 0.0
        %703 = vmatprep.subr.mxu0 0.0
        %704 = vmatpush2.msra.mxu0 0.0
        %705 = vmatprep.subr.mxu0 0.0
        %706 = vmatpush2.msra.mxu0 0.0
        %707 = vmatprep.subr.mxu0 0.0
        %708 = vmatpush2.msra.mxu0 0.0
        %709 = vmatprep.subr.mxu0 0.0
        %710 = vmatpush2.msra.mxu0 0.0
        %711 = vmatprep.subr.mxu0 0.0
        %712 = vmatpush2.msra.mxu0 0.0
        %713 = vmatprep.subr.mxu0 0.0
        %714 = vmatpush2.msra.mxu0 0.0
        %715 = vmatprep.subr.mxu0 0.0
        %716 = vmatpush2.msra.mxu0 0.0
        %717 = vmatprep.mubr.f32.mxu0 0.0
        %718 = vmatmul.mubr.f32.gmra.mxu0 %v651
        %v719 = vpop.f32.mrf.mxu0
        %v720 = vadd.f32 0.0, %v719
        %v721 = vpop.f32.mrf.mxu0
        %722 = vdwg.mxu0
        %v723 = vrcp.pop %v646
        %v724 = vmul.f32 %v720, %v723
        %725 = vst.msk [vmem:[#allocation3] sm:$0xff] %vm563, %v724
        %v726 = vld [vmem:[#allocation2] sm:$0xff]
        %728 = vrot.lane.b32.xlu0 %v726, 120
        %v729 = vpop.permute.xlu0 %728
        %730 = vrot.lane.b32.xlu0 %v726, 88
        %v731 = vpop.permute.xlu0 %730
        %v732 = vsel %vm563, %v729, 0
        %v734 = vsel %vm563, %v731, 0
        %736 = vmatprep.subr.mxu0 0.0
        %737 = vmatpush1.xpose.msra.mxu0 0.0
        %738 = vmatprep.subr.mxu0 0.0
        %739 = vmatpush1.xpose.msra.mxu0 0.0
        %740 = vmatprep.subr.mxu0 0.0
        %741 = vmatpush1.xpose.msra.mxu0 0.0
        %742 = vmatprep.subr.mxu0 0.0
        %743 = vmatpush1.xpose.msra.mxu0 0.0
        %744 = vmatprep.subr.mxu0 0.0
        %745 = vmatpush1.xpose.msra.mxu0 0.0
        %746 = vmatprep.subr.mxu0 0.0
        %747 = vmatpush1.xpose.msra.mxu0 0.0
        %748 = vmatprep.subr.mxu0 0.0
        %749 = vmatpush1.xpose.msra.mxu0 0.0
        %750 = vmatprep.subr.mxu0 0.0
        %751 = vmatpush1.xpose.msra.mxu0 0.0
        %752 = vmatprep.subr.mxu0 0.0
        %753 = vmatpush1.xpose.msra.mxu0 0.0
        %754 = vmatprep.subr.mxu0 0.0
        %755 = vmatpush1.xpose.msra.mxu0 0.0
        %756 = vmatprep.subr.mxu0 0.0
        %757 = vmatpush1.xpose.msra.mxu0 0.0
        %758 = vmatprep.subr.mxu0 0.0
        %759 = vmatpush1.xpose.msra.mxu0 0.0
        %760 = vmatprep.subr.mxu0 0.0
        %761 = vmatpush1.xpose.msra.mxu0 0.0
        %762 = vmatprep.subr.mxu0 0.0
        %763 = vmatpush1.xpose.msra.mxu0 0.0
        %764 = vmatprep.subr.mxu0 0.0
        %765 = vmatpush1.xpose.msra.mxu0 0.0
        %766 = vmatprep.subr.mxu0 0.0
        %767 = vmatpush1.xpose.msra.mxu0 %v734
        %768 = vmatprep.subr.mxu0 0.0
        %769 = vmatpush2.xpose.msra.mxu0 0.0
        %770 = vmatprep.subr.mxu0 0.0
        %771 = vmatpush2.xpose.msra.mxu0 0.0
        %772 = vmatprep.subr.mxu0 0.0
        %773 = vmatpush2.xpose.msra.mxu0 0.0
        %774 = vmatprep.subr.mxu0 0.0
        %775 = vmatpush2.xpose.msra.mxu0 0.0
        %776 = vmatprep.subr.mxu0 0.0
        %777 = vmatpush2.xpose.msra.mxu0 0.0
        %778 = vmatprep.subr.mxu0 0.0
        %779 = vmatpush2.xpose.msra.mxu0 0.0
        %780 = vmatprep.subr.mxu0 0.0
        %781 = vmatpush2.xpose.msra.mxu0 0.0
        %782 = vmatprep.subr.mxu0 0.0
        %783 = vmatpush2.xpose.msra.mxu0 0.0
        %784 = vmatprep.subr.mxu0 0.0
        %785 = vmatpush2.xpose.msra.mxu0 0.0
        %786 = vmatprep.subr.mxu0 0.0
        %787 = vmatpush2.xpose.msra.mxu0 0.0
        %788 = vmatprep.subr.mxu0 0.0
        %789 = vmatpush2.xpose.msra.mxu0 0.0
        %790 = vmatprep.subr.mxu0 0.0
        %791 = vmatpush2.xpose.msra.mxu0 0.0
        %792 = vmatprep.subr.mxu0 0.0
        %793 = vmatpush2.xpose.msra.mxu0 0.0
        %794 = vmatprep.subr.mxu0 0.0
        %795 = vmatpush2.xpose.msra.mxu0 0.0
        %796 = vmatprep.subr.mxu0 0.0
        %797 = vmatpush2.xpose.msra.mxu0 0.0
        %798 = vmatprep.subr.mxu0 0.0
        %799 = vmatpush2.xpose.msra.mxu0 0.0
        %800 = vmatprep.mubr.f32.mxu0 0.0
        %801 = vmatmul.mubr.f32.gmra.mxu0 %v732
        %v802 = vpop.f32.mrf.mxu0
        %v803 = vadd.f32 0.0, %v802
        %v804 = vpop.f32.mrf.mxu0
        %805 = vdwg.mxu0
        %v806 = vsel %vm563, %v803, -inf
        %807 = vmax.xlane.f32.xlu0 %v806
        %v808 = vpop.xlane.xlu0 %807
        %v809 = vsub.f32 %v803, %v808
        %v810 = vmul.f32 %v809, 1.442695
        %v811 = vpow.pop %v810
        %v812 = vsel %vm563, %v811, 0.0
        %813 = vadd.xlane.f32.xlu0 %v812
        %v814 = vpop.xlane.xlu0 %813
        %815 = vrot.lane.b32.xlu0 %v726, 56
        %v816 = vpop.permute.xlu0 %815
        %v819 = vsel %vm563, %v811, 0
        %821 = vmatprep.subr.mxu0 0.0
        %822 = vmatpush1.msra.mxu0 0.0
        %823 = vmatprep.subr.mxu0 0.0
        %824 = vmatpush1.msra.mxu0 0.0
        %825 = vmatprep.subr.mxu0 0.0
        %826 = vmatpush1.msra.mxu0 0.0
        %827 = vmatprep.subr.mxu0 0.0
        %828 = vmatpush1.msra.mxu0 0.0
        %829 = vmatprep.subr.mxu0 0.0
        %830 = vmatpush1.msra.mxu0 0.0
        %831 = vmatprep.subr.mxu0 0.0
        %832 = vmatpush1.msra.mxu0 0.0
        %833 = vmatprep.subr.mxu0 0.0
        %834 = vmatpush1.msra.mxu0 0.0
        %835 = vmatprep.subr.mxu0 0.0
        %836 = vmatpush1.msra.mxu0 0.0
        %837 = vmatprep.subr.mxu0 0.0
        %838 = vmatpush1.msra.mxu0 0.0
        %839 = vmatprep.subr.mxu0 0.0
        %840 = vmatpush1.msra.mxu0 0.0
        %841 = vmatprep.subr.mxu0 0.0
        %842 = vmatpush1.msra.mxu0 0.0
        %843 = vmatprep.subr.mxu0 0.0
        %844 = vmatpush1.msra.mxu0 0.0
        %845 = vmatprep.subr.mxu0 0.0
        %846 = vmatpush1.msra.mxu0 0.0
        %847 = vmatprep.subr.mxu0 0.0
        %848 = vmatpush1.msra.mxu0 0.0
        %849 = vmatprep.subr.mxu0 0.0
        %850 = vmatpush1.msra.mxu0 0.0
        %851 = vmatprep.subr.mxu0 0.0
        %852 = vmatpush1.msra.mxu0 %v816
        %853 = vmatprep.subr.mxu0 0.0
        %854 = vmatpush2.msra.mxu0 0.0
        %855 = vmatprep.subr.mxu0 0.0
        %856 = vmatpush2.msra.mxu0 0.0
        %857 = vmatprep.subr.mxu0 0.0
        %858 = vmatpush2.msra.mxu0 0.0
        %859 = vmatprep.subr.mxu0 0.0
        %860 = vmatpush2.msra.mxu0 0.0
        %861 = vmatprep.subr.mxu0 0.0
        %862 = vmatpush2.msra.mxu0 0.0
        %863 = vmatprep.subr.mxu0 0.0
        %864 = vmatpush2.msra.mxu0 0.0
        %865 = vmatprep.subr.mxu0 0.0
        %866 = vmatpush2.msra.mxu0 0.0
        %867 = vmatprep.subr.mxu0 0.0
        %868 = vmatpush2.msra.mxu0 0.0
        %869 = vmatprep.subr.mxu0 0.0
        %870 = vmatpush2.msra.mxu0 0.0
        %871 = vmatprep.subr.mxu0 0.0
        %872 = vmatpush2.msra.mxu0 0.0
        %873 = vmatprep.subr.mxu0 0.0
        %874 = vmatpush2.msra.mxu0 0.0
        %875 = vmatprep.subr.mxu0 0.0
        %876 = vmatpush2.msra.mxu0 0.0
        %877 = vmatprep.subr.mxu0 0.0
        %878 = vmatpush2.msra.mxu0 0.0
        %879 = vmatprep.subr.mxu0 0.0
        %880 = vmatpush2.msra.mxu0 0.0
        %881 = vmatprep.subr.mxu0 0.0
        %882 = vmatpush2.msra.mxu0 0.0
        %883 = vmatprep.subr.mxu0 0.0
        %884 = vmatpush2.msra.mxu0 0.0
        %885 = vmatprep.mubr.f32.mxu0 0.0
        %886 = vmatmul.mubr.f32.gmra.mxu0 %v819
        %v887 = vpop.f32.mrf.mxu0
        %v888 = vadd.f32 0.0, %v887
        %v889 = vpop.f32.mrf.mxu0
        %890 = vdwg.mxu0
        %v891 = vrcp.pop %v814
        %v892 = vmul.f32 %v888, %v891
        %894 = vrot.lane.b32.xlu0 %v892, 8
        %v895 = vpop.permute.xlu0 %894
        %vm897 = vcmask 130112
        %898 = vst.msk [vmem:[#allocation3] sm:$0xff] %vm897, %v895
        %v899 = vld [vmem:[#allocation2] sm:$0xff]
        %901 = vrot.lane.b32.xlu0 %v899, 112
        %v902 = vpop.permute.xlu0 %901
        %903 = vrot.lane.b32.xlu0 %v899, 80
        %v904 = vpop.permute.xlu0 %903
        %v905 = vsel %vm563, %v902, 0
        %v907 = vsel %vm563, %v904, 0
        %909 = vmatprep.subr.mxu0 0.0
        %910 = vmatpush1.xpose.msra.mxu0 0.0
        %911 = vmatprep.subr.mxu0 0.0
        %912 = vmatpush1.xpose.msra.mxu0 0.0
        %913 = vmatprep.subr.mxu0 0.0
        %914 = vmatpush1.xpose.msra.mxu0 0.0
        %915 = vmatprep.subr.mxu0 0.0
        %916 = vmatpush1.xpose.msra.mxu0 0.0
        %917 = vmatprep.subr.mxu0 0.0
        %918 = vmatpush1.xpose.msra.mxu0 0.0
        %919 = vmatprep.subr.mxu0 0.0
        %920 = vmatpush1.xpose.msra.mxu0 0.0
        %921 = vmatprep.subr.mxu0 0.0
        %922 = vmatpush1.xpose.msra.mxu0 0.0
        %923 = vmatprep.subr.mxu0 0.0
        %924 = vmatpush1.xpose.msra.mxu0 0.0
        %925 = vmatprep.subr.mxu0 0.0
        %926 = vmatpush1.xpose.msra.mxu0 0.0
        %927 = vmatprep.subr.mxu0 0.0
        %928 = vmatpush1.xpose.msra.mxu0 0.0
        %929 = vmatprep.subr.mxu0 0.0
        %930 = vmatpush1.xpose.msra.mxu0 0.0
        %931 = vmatprep.subr.mxu0 0.0
        %932 = vmatpush1.xpose.msra.mxu0 0.0
        %933 = vmatprep.subr.mxu0 0.0
        %934 = vmatpush1.xpose.msra.mxu0 0.0
        %935 = vmatprep.subr.mxu0 0.0
        %936 = vmatpush1.xpose.msra.mxu0 0.0
        %937 = vmatprep.subr.mxu0 0.0
        %938 = vmatpush1.xpose.msra.mxu0 0.0
        %939 = vmatprep.subr.mxu0 0.0
        %940 = vmatpush1.xpose.msra.mxu0 %v907
        %941 = vmatprep.subr.mxu0 0.0
        %942 = vmatpush2.xpose.msra.mxu0 0.0
        %943 = vmatprep.subr.mxu0 0.0
        %944 = vmatpush2.xpose.msra.mxu0 0.0
        %945 = vmatprep.subr.mxu0 0.0
        %946 = vmatpush2.xpose.msra.mxu0 0.0
        %947 = vmatprep.subr.mxu0 0.0
        %948 = vmatpush2.xpose.msra.mxu0 0.0
        %949 = vmatprep.subr.mxu0 0.0
        %950 = vmatpush2.xpose.msra.mxu0 0.0
        %951 = vmatprep.subr.mxu0 0.0
        %952 = vmatpush2.xpose.msra.mxu0 0.0
        %953 = vmatprep.subr.mxu0 0.0
        %954 = vmatpush2.xpose.msra.mxu0 0.0
        %955 = vmatprep.subr.mxu0 0.0
        %956 = vmatpush2.xpose.msra.mxu0 0.0
        %957 = vmatprep.subr.mxu0 0.0
        %958 = vmatpush2.xpose.msra.mxu0 0.0
        %959 = vmatprep.subr.mxu0 0.0
        %960 = vmatpush2.xpose.msra.mxu0 0.0
        %961 = vmatprep.subr.mxu0 0.0
        %962 = vmatpush2.xpose.msra.mxu0 0.0
        %963 = vmatprep.subr.mxu0 0.0
        %964 = vmatpush2.xpose.msra.mxu0 0.0
        %965 = vmatprep.subr.mxu0 0.0
        %966 = vmatpush2.xpose.msra.mxu0 0.0
        %967 = vmatprep.subr.mxu0 0.0
        %968 = vmatpush2.xpose.msra.mxu0 0.0
        %969 = vmatprep.subr.mxu0 0.0
        %970 = vmatpush2.xpose.msra.mxu0 0.0
        %971 = vmatprep.subr.mxu0 0.0
        %972 = vmatpush2.xpose.msra.mxu0 0.0
        %973 = vmatprep.mubr.f32.mxu0 0.0
        %974 = vmatmul.mubr.f32.gmra.mxu0 %v905
        %v975 = vpop.f32.mrf.mxu0
        %v976 = vadd.f32 0.0, %v975
        %v977 = vpop.f32.mrf.mxu0
        %978 = vdwg.mxu0
        %v979 = vsel %vm563, %v976, -inf
        %980 = vmax.xlane.f32.xlu0 %v979
        %v981 = vpop.xlane.xlu0 %980
        %v982 = vsub.f32 %v976, %v981
        %v983 = vmul.f32 %v982, 1.442695
        %v984 = vpow.pop %v983
        %v985 = vsel %vm563, %v984, 0.0
        %986 = vadd.xlane.f32.xlu0 %v985
        %v987 = vpop.xlane.xlu0 %986
        %988 = vrot.lane.b32.xlu0 %v899, 48
        %v989 = vpop.permute.xlu0 %988
        %v992 = vsel %vm563, %v984, 0
        %994 = vmatprep.subr.mxu0 0.0
        %995 = vmatpush1.msra.mxu0 0.0
        %996 = vmatprep.subr.mxu0 0.0
        %997 = vmatpush1.msra.mxu0 0.0
        %998 = vmatprep.subr.mxu0 0.0
        %999 = vmatpush1.msra.mxu0 0.0
        %1000 = vmatprep.subr.mxu0 0.0
        %1001 = vmatpush1.msra.mxu0 0.0
        %1002 = vmatprep.subr.mxu0 0.0
        %1003 = vmatpush1.msra.mxu0 0.0
        %1004 = vmatprep.subr.mxu0 0.0
        %1005 = vmatpush1.msra.mxu0 0.0
        %1006 = vmatprep.subr.mxu0 0.0
        %1007 = vmatpush1.msra.mxu0 0.0
        %1008 = vmatprep.subr.mxu0 0.0
        %1009 = vmatpush1.msra.mxu0 0.0
        %1010 = vmatprep.subr.mxu0 0.0
        %1011 = vmatpush1.msra.mxu0 0.0
        %1012 = vmatprep.subr.mxu0 0.0
        %1013 = vmatpush1.msra.mxu0 0.0
        %1014 = vmatprep.subr.mxu0 0.0
        %1015 = vmatpush1.msra.mxu0 0.0
        %1016 = vmatprep.subr.mxu0 0.0
        %1017 = vmatpush1.msra.mxu0 0.0
        %1018 = vmatprep.subr.mxu0 0.0
        %1019 = vmatpush1.msra.mxu0 0.0
        %1020 = vmatprep.subr.mxu0 0.0
        %1021 = vmatpush1.msra.mxu0 0.0
        %1022 = vmatprep.subr.mxu0 0.0
        %1023 = vmatpush1.msra.mxu0 0.0
        %1024 = vmatprep.subr.mxu0 0.0
        %1025 = vmatpush1.msra.mxu0 %v989
        %1026 = vmatprep.subr.mxu0 0.0
        %1027 = vmatpush2.msra.mxu0 0.0
        %1028 = vmatprep.subr.mxu0 0.0
        %1029 = vmatpush2.msra.mxu0 0.0
        %1030 = vmatprep.subr.mxu0 0.0
        %1031 = vmatpush2.msra.mxu0 0.0
        %1032 = vmatprep.subr.mxu0 0.0
        %1033 = vmatpush2.msra.mxu0 0.0
        %1034 = vmatprep.subr.mxu0 0.0
        %1035 = vmatpush2.msra.mxu0 0.0
        %1036 = vmatprep.subr.mxu0 0.0
        %1037 = vmatpush2.msra.mxu0 0.0
        %1038 = vmatprep.subr.mxu0 0.0
        %1039 = vmatpush2.msra.mxu0 0.0
        %1040 = vmatprep.subr.mxu0 0.0
        %1041 = vmatpush2.msra.mxu0 0.0
        %1042 = vmatprep.subr.mxu0 0.0
        %1043 = vmatpush2.msra.mxu0 0.0
        %1044 = vmatprep.subr.mxu0 0.0
        %1045 = vmatpush2.msra.mxu0 0.0
        %1046 = vmatprep.subr.mxu0 0.0
        %1047 = vmatpush2.msra.mxu0 0.0
        %1048 = vmatprep.subr.mxu0 0.0
        %1049 = vmatpush2.msra.mxu0 0.0
        %1050 = vmatprep.subr.mxu0 0.0
        %1051 = vmatpush2.msra.mxu0 0.0
        %1052 = vmatprep.subr.mxu0 0.0
        %1053 = vmatpush2.msra.mxu0 0.0
        %1054 = vmatprep.subr.mxu0 0.0
        %1055 = vmatpush2.msra.mxu0 0.0
        %1056 = vmatprep.subr.mxu0 0.0
        %1057 = vmatpush2.msra.mxu0 0.0
        %1058 = vmatprep.mubr.f32.mxu0 0.0
        %1059 = vmatmul.mubr.f32.gmra.mxu0 %v992
        %v1060 = vpop.f32.mrf.mxu0
        %v1061 = vadd.f32 0.0, %v1060
        %v1062 = vpop.f32.mrf.mxu0
        %1063 = vdwg.mxu0
        %v1064 = vrcp.pop %v987
        %v1065 = vmul.f32 %v1061, %v1064
        %1067 = vrot.lane.b32.xlu0 %v1065, 16
        %v1068 = vpop.permute.xlu0 %1067
        %vm1070 = vcmask 195712
        %1071 = vst.msk [vmem:[#allocation3] sm:$0xff] %vm1070, %v1068
        %v1072 = vld [vmem:[#allocation2] sm:$0xff]
        %1074 = vrot.lane.b32.xlu0 %v1072, 104
        %v1075 = vpop.permute.xlu0 %1074
        %1076 = vrot.lane.b32.xlu0 %v1072, 72
        %v1077 = vpop.permute.xlu0 %1076
        %v1078 = vsel %vm563, %v1075, 0
        %v1080 = vsel %vm563, %v1077, 0
        %1082 = vmatprep.subr.mxu0 0.0
        %1083 = vmatpush1.xpose.msra.mxu0 0.0
        %1084 = vmatprep.subr.mxu0 0.0
        %1085 = vmatpush1.xpose.msra.mxu0 0.0
        %1086 = vmatprep.subr.mxu0 0.0
        %1087 = vmatpush1.xpose.msra.mxu0 0.0
        %1088 = vmatprep.subr.mxu0 0.0
        %1089 = vmatpush1.xpose.msra.mxu0 0.0
        %1090 = vmatprep.subr.mxu0 0.0
        %1091 = vmatpush1.xpose.msra.mxu0 0.0
        %1092 = vmatprep.subr.mxu0 0.0
        %1093 = vmatpush1.xpose.msra.mxu0 0.0
        %1094 = vmatprep.subr.mxu0 0.0
        %1095 = vmatpush1.xpose.msra.mxu0 0.0
        %1096 = vmatprep.subr.mxu0 0.0
        %1097 = vmatpush1.xpose.msra.mxu0 0.0
        %1098 = vmatprep.subr.mxu0 0.0
        %1099 = vmatpush1.xpose.msra.mxu0 0.0
        %1100 = vmatprep.subr.mxu0 0.0
        %1101 = vmatpush1.xpose.msra.mxu0 0.0
        %1102 = vmatprep.subr.mxu0 0.0
        %1103 = vmatpush1.xpose.msra.mxu0 0.0
        %1104 = vmatprep.subr.mxu0 0.0
        %1105 = vmatpush1.xpose.msra.mxu0 0.0
        %1106 = vmatprep.subr.mxu0 0.0
        %1107 = vmatpush1.xpose.msra.mxu0 0.0
        %1108 = vmatprep.subr.mxu0 0.0
        %1109 = vmatpush1.xpose.msra.mxu0 0.0
        %1110 = vmatprep.subr.mxu0 0.0
        %1111 = vmatpush1.xpose.msra.mxu0 0.0
        %1112 = vmatprep.subr.mxu0 0.0
        %1113 = vmatpush1.xpose.msra.mxu0 %v1080
        %1114 = vmatprep.subr.mxu0 0.0
        %1115 = vmatpush2.xpose.msra.mxu0 0.0
        %1116 = vmatprep.subr.mxu0 0.0
        %1117 = vmatpush2.xpose.msra.mxu0 0.0
        %1118 = vmatprep.subr.mxu0 0.0
        %1119 = vmatpush2.xpose.msra.mxu0 0.0
        %1120 = vmatprep.subr.mxu0 0.0
        %1121 = vmatpush2.xpose.msra.mxu0 0.0
        %1122 = vmatprep.subr.mxu0 0.0
        %1123 = vmatpush2.xpose.msra.mxu0 0.0
        %1124 = vmatprep.subr.mxu0 0.0
        %1125 = vmatpush2.xpose.msra.mxu0 0.0
        %1126 = vmatprep.subr.mxu0 0.0
        %1127 = vmatpush2.xpose.msra.mxu0 0.0
        %1128 = vmatprep.subr.mxu0 0.0
        %1129 = vmatpush2.xpose.msra.mxu0 0.0
        %1130 = vmatprep.subr.mxu0 0.0
        %1131 = vmatpush2.xpose.msra.mxu0 0.0
        %1132 = vmatprep.subr.mxu0 0.0
        %1133 = vmatpush2.xpose.msra.mxu0 0.0
        %1134 = vmatprep.subr.mxu0 0.0
        %1135 = vmatpush2.xpose.msra.mxu0 0.0
        %1136 = vmatprep.subr.mxu0 0.0
        %1137 = vmatpush2.xpose.msra.mxu0 0.0
        %1138 = vmatprep.subr.mxu0 0.0
        %1139 = vmatpush2.xpose.msra.mxu0 0.0
        %1140 = vmatprep.subr.mxu0 0.0
        %1141 = vmatpush2.xpose.msra.mxu0 0.0
        %1142 = vmatprep.subr.mxu0 0.0
        %1143 = vmatpush2.xpose.msra.mxu0 0.0
        %1144 = vmatprep.subr.mxu0 0.0
        %1145 = vmatpush2.xpose.msra.mxu0 0.0
        %1146 = vmatprep.mubr.f32.mxu0 0.0
        %1147 = vmatmul.mubr.f32.gmra.mxu0 %v1078
        %v1148 = vpop.f32.mrf.mxu0
        %v1149 = vadd.f32 0.0, %v1148
        %v1150 = vpop.f32.mrf.mxu0
        %1151 = vdwg.mxu0
        %v1152 = vsel %vm563, %v1149, -inf
        %1153 = vmax.xlane.f32.xlu0 %v1152
        %v1154 = vpop.xlane.xlu0 %1153
        %v1155 = vsub.f32 %v1149, %v1154
        %v1156 = vmul.f32 %v1155, 1.442695
        %v1157 = vpow.pop %v1156
        %v1158 = vsel %vm563, %v1157, 0.0
        %1159 = vadd.xlane.f32.xlu0 %v1158
        %v1160 = vpop.xlane.xlu0 %1159
        %1161 = vrot.lane.b32.xlu0 %v1072, 40
        %v1162 = vpop.permute.xlu0 %1161
        %v1165 = vsel %vm563, %v1157, 0
        %1167 = vmatprep.subr.mxu0 0.0
        %1168 = vmatpush1.msra.mxu0 0.0
        %1169 = vmatprep.subr.mxu0 0.0
        %1170 = vmatpush1.msra.mxu0 0.0
        %1171 = vmatprep.subr.mxu0 0.0
        %1172 = vmatpush1.msra.mxu0 0.0
        %1173 = vmatprep.subr.mxu0 0.0
        %1174 = vmatpush1.msra.mxu0 0.0
        %1175 = vmatprep.subr.mxu0 0.0
        %1176 = vmatpush1.msra.mxu0 0.0
        %1177 = vmatprep.subr.mxu0 0.0
        %1178 = vmatpush1.msra.mxu0 0.0
        %1179 = vmatprep.subr.mxu0 0.0
        %1180 = vmatpush1.msra.mxu0 0.0
        %1181 = vmatprep.subr.mxu0 0.0
        %1182 = vmatpush1.msra.mxu0 0.0
        %1183 = vmatprep.subr.mxu0 0.0
        %1184 = vmatpush1.msra.mxu0 0.0
        %1185 = vmatprep.subr.mxu0 0.0
        %1186 = vmatpush1.msra.mxu0 0.0
        %1187 = vmatprep.subr.mxu0 0.0
        %1188 = vmatpush1.msra.mxu0 0.0
        %1189 = vmatprep.subr.mxu0 0.0
        %1190 = vmatpush1.msra.mxu0 0.0
        %1191 = vmatprep.subr.mxu0 0.0
        %1192 = vmatpush1.msra.mxu0 0.0
        %1193 = vmatprep.subr.mxu0 0.0
        %1194 = vmatpush1.msra.mxu0 0.0
        %1195 = vmatprep.subr.mxu0 0.0
        %1196 = vmatpush1.msra.mxu0 0.0
        %1197 = vmatprep.subr.mxu0 0.0
        %1198 = vmatpush1.msra.mxu0 %v1162
        %1199 = vmatprep.subr.mxu0 0.0
        %1200 = vmatpush2.msra.mxu0 0.0
        %1201 = vmatprep.subr.mxu0 0.0
        %1202 = vmatpush2.msra.mxu0 0.0
        %1203 = vmatprep.subr.mxu0 0.0
        %1204 = vmatpush2.msra.mxu0 0.0
        %1205 = vmatprep.subr.mxu0 0.0
        %1206 = vmatpush2.msra.mxu0 0.0
        %1207 = vmatprep.subr.mxu0 0.0
        %1208 = vmatpush2.msra.mxu0 0.0
        %1209 = vmatprep.subr.mxu0 0.0
        %1210 = vmatpush2.msra.mxu0 0.0
        %1211 = vmatprep.subr.mxu0 0.0
        %1212 = vmatpush2.msra.mxu0 0.0
        %1213 = vmatprep.subr.mxu0 0.0
        %1214 = vmatpush2.msra.mxu0 0.0
        %1215 = vmatprep.subr.mxu0 0.0
        %1216 = vmatpush2.msra.mxu0 0.0
        %1217 = vmatprep.subr.mxu0 0.0
        %1218 = vmatpush2.msra.mxu0 0.0
        %1219 = vmatprep.subr.mxu0 0.0
        %1220 = vmatpush2.msra.mxu0 0.0
        %1221 = vmatprep.subr.mxu0 0.0
        %1222 = vmatpush2.msra.mxu0 0.0
        %1223 = vmatprep.subr.mxu0 0.0
        %1224 = vmatpush2.msra.mxu0 0.0
        %1225 = vmatprep.subr.mxu0 0.0
        %1226 = vmatpush2.msra.mxu0 0.0
        %1227 = vmatprep.subr.mxu0 0.0
        %1228 = vmatpush2.msra.mxu0 0.0
        %1229 = vmatprep.subr.mxu0 0.0
        %1230 = vmatpush2.msra.mxu0 0.0
        %1231 = vmatprep.mubr.f32.mxu0 0.0
        %1232 = vmatmul.mubr.f32.gmra.mxu0 %v1165
        %v1233 = vpop.f32.mrf.mxu0
        %v1234 = vadd.f32 0.0, %v1233
        %v1235 = vpop.f32.mrf.mxu0
        %1236 = vdwg.mxu0
        %v1237 = vrcp.pop %v1160
        %v1238 = vmul.f32 %v1234, %v1237
        %1240 = vrot.lane.b32.xlu0 %v1238, 24
        %v1241 = vpop.permute.xlu0 %1240
        %vm1243 = vcmask 261312
        %1244 = vst.msk [vmem:[#allocation3] sm:$0xff] %vm1243, %v1241
        %s1245 = scalar_lea.vmem [#allocation2], 8
        %v1246 = vld [vmem:[%s1245] sm:$0xff]
        %1248 = vrot.lane.b32.xlu0 %v1246, 96
        %v1249 = vpop.permute.xlu0 %1248
        %v1250 = vsel %vm563, %v1246, 0
        %v1252 = vsel %vm563, %v1249, 0
        %1254 = vmatprep.subr.mxu0 0.0
        %1255 = vmatpush1.xpose.msra.mxu0 0.0
        %1256 = vmatprep.subr.mxu0 0.0
        %1257 = vmatpush1.xpose.msra.mxu0 0.0
        %1258 = vmatprep.subr.mxu0 0.0
        %1259 = vmatpush1.xpose.msra.mxu0 0.0
        %1260 = vmatprep.subr.mxu0 0.0
        %1261 = vmatpush1.xpose.msra.mxu0 0.0
        %1262 = vmatprep.subr.mxu0 0.0
        %1263 = vmatpush1.xpose.msra.mxu0 0.0
        %1264 = vmatprep.subr.mxu0 0.0
        %1265 = vmatpush1.xpose.msra.mxu0 0.0
        %1266 = vmatprep.subr.mxu0 0.0
        %1267 = vmatpush1.xpose.msra.mxu0 0.0
        %1268 = vmatprep.subr.mxu0 0.0
        %1269 = vmatpush1.xpose.msra.mxu0 0.0
        %1270 = vmatprep.subr.mxu0 0.0
        %1271 = vmatpush1.xpose.msra.mxu0 0.0
        %1272 = vmatprep.subr.mxu0 0.0
        %1273 = vmatpush1.xpose.msra.mxu0 0.0
        %1274 = vmatprep.subr.mxu0 0.0
        %1275 = vmatpush1.xpose.msra.mxu0 0.0
        %1276 = vmatprep.subr.mxu0 0.0
        %1277 = vmatpush1.xpose.msra.mxu0 0.0
        %1278 = vmatprep.subr.mxu0 0.0
        %1279 = vmatpush1.xpose.msra.mxu0 0.0
        %1280 = vmatprep.subr.mxu0 0.0
        %1281 = vmatpush1.xpose.msra.mxu0 0.0
        %1282 = vmatprep.subr.mxu0 0.0
        %1283 = vmatpush1.xpose.msra.mxu0 0.0
        %1284 = vmatprep.subr.mxu0 0.0
        %1285 = vmatpush1.xpose.msra.mxu0 %v1252
        %1286 = vmatprep.subr.mxu0 0.0
        %1287 = vmatpush2.xpose.msra.mxu0 0.0
        %1288 = vmatprep.subr.mxu0 0.0
        %1289 = vmatpush2.xpose.msra.mxu0 0.0
        %1290 = vmatprep.subr.mxu0 0.0
        %1291 = vmatpush2.xpose.msra.mxu0 0.0
        %1292 = vmatprep.subr.mxu0 0.0
        %1293 = vmatpush2.xpose.msra.mxu0 0.0
        %1294 = vmatprep.subr.mxu0 0.0
        %1295 = vmatpush2.xpose.msra.mxu0 0.0
        %1296 = vmatprep.subr.mxu0 0.0
        %1297 = vmatpush2.xpose.msra.mxu0 0.0
        %1298 = vmatprep.subr.mxu0 0.0
        %1299 = vmatpush2.xpose.msra.mxu0 0.0
        %1300 = vmatprep.subr.mxu0 0.0
        %1301 = vmatpush2.xpose.msra.mxu0 0.0
        %1302 = vmatprep.subr.mxu0 0.0
        %1303 = vmatpush2.xpose.msra.mxu0 0.0
        %1304 = vmatprep.subr.mxu0 0.0
        %1305 = vmatpush2.xpose.msra.mxu0 0.0
        %1306 = vmatprep.subr.mxu0 0.0
        %1307 = vmatpush2.xpose.msra.mxu0 0.0
        %1308 = vmatprep.subr.mxu0 0.0
        %1309 = vmatpush2.xpose.msra.mxu0 0.0
        %1310 = vmatprep.subr.mxu0 0.0
        %1311 = vmatpush2.xpose.msra.mxu0 0.0
        %1312 = vmatprep.subr.mxu0 0.0
        %1313 = vmatpush2.xpose.msra.mxu0 0.0
        %1314 = vmatprep.subr.mxu0 0.0
        %1315 = vmatpush2.xpose.msra.mxu0 0.0
        %1316 = vmatprep.subr.mxu0 0.0
        %1317 = vmatpush2.xpose.msra.mxu0 0.0
        %1318 = vmatprep.mubr.f32.mxu0 0.0
        %1319 = vmatmul.mubr.f32.gmra.mxu0 %v1250
        %v1320 = vpop.f32.mrf.mxu0
        %v1321 = vadd.f32 0.0, %v1320
        %v1322 = vpop.f32.mrf.mxu0
        %1323 = vdwg.mxu0
        %v1324 = vsel %vm563, %v1321, -inf
        %1325 = vmax.xlane.f32.xlu0 %v1324
        %v1326 = vpop.xlane.xlu0 %1325
        %v1327 = vsub.f32 %v1321, %v1326
        %v1328 = vmul.f32 %v1327, 1.442695
        %v1329 = vpow.pop %v1328
        %v1330 = vsel %vm563, %v1329, 0.0
        %1331 = vadd.xlane.f32.xlu0 %v1330
        %v1332 = vpop.xlane.xlu0 %1331
        %1333 = vrot.lane.b32.xlu0 %v1246, 64
        %v1334 = vpop.permute.xlu0 %1333
        %v1337 = vsel %vm563, %v1329, 0
        %1339 = vmatprep.subr.mxu0 0.0
        %1340 = vmatpush1.msra.mxu0 0.0
        %1341 = vmatprep.subr.mxu0 0.0
        %1342 = vmatpush1.msra.mxu0 0.0
        %1343 = vmatprep.subr.mxu0 0.0
        %1344 = vmatpush1.msra.mxu0 0.0
        %1345 = vmatprep.subr.mxu0 0.0
        %1346 = vmatpush1.msra.mxu0 0.0
        %1347 = vmatprep.subr.mxu0 0.0
        %1348 = vmatpush1.msra.mxu0 0.0
        %1349 = vmatprep.subr.mxu0 0.0
        %1350 = vmatpush1.msra.mxu0 0.0
        %1351 = vmatprep.subr.mxu0 0.0
        %1352 = vmatpush1.msra.mxu0 0.0
        %1353 = vmatprep.subr.mxu0 0.0
        %1354 = vmatpush1.msra.mxu0 0.0
        %1355 = vmatprep.subr.mxu0 0.0
        %1356 = vmatpush1.msra.mxu0 0.0
        %1357 = vmatprep.subr.mxu0 0.0
        %1358 = vmatpush1.msra.mxu0 0.0
        %1359 = vmatprep.subr.mxu0 0.0
        %1360 = vmatpush1.msra.mxu0 0.0
        %1361 = vmatprep.subr.mxu0 0.0
        %1362 = vmatpush1.msra.mxu0 0.0
        %1363 = vmatprep.subr.mxu0 0.0
        %1364 = vmatpush1.msra.mxu0 0.0
        %1365 = vmatprep.subr.mxu0 0.0
        %1366 = vmatpush1.msra.mxu0 0.0
        %1367 = vmatprep.subr.mxu0 0.0
        %1368 = vmatpush1.msra.mxu0 0.0
        %1369 = vmatprep.subr.mxu0 0.0
        %1370 = vmatpush1.msra.mxu0 %v1334
        %1371 = vmatprep.subr.mxu0 0.0
        %1372 = vmatpush2.msra.mxu0 0.0
        %1373 = vmatprep.subr.mxu0 0.0
        %1374 = vmatpush2.msra.mxu0 0.0
        %1375 = vmatprep.subr.mxu0 0.0
        %1376 = vmatpush2.msra.mxu0 0.0
        %1377 = vmatprep.subr.mxu0 0.0
        %1378 = vmatpush2.msra.mxu0 0.0
        %1379 = vmatprep.subr.mxu0 0.0
        %1380 = vmatpush2.msra.mxu0 0.0
        %1381 = vmatprep.subr.mxu0 0.0
        %1382 = vmatpush2.msra.mxu0 0.0
        %1383 = vmatprep.subr.mxu0 0.0
        %1384 = vmatpush2.msra.mxu0 0.0
        %1385 = vmatprep.subr.mxu0 0.0
        %1386 = vmatpush2.msra.mxu0 0.0
        %1387 = vmatprep.subr.mxu0 0.0
        %1388 = vmatpush2.msra.mxu0 0.0
        %1389 = vmatprep.subr.mxu0 0.0
        %1390 = vmatpush2.msra.mxu0 0.0
        %1391 = vmatprep.subr.mxu0 0.0
        %1392 = vmatpush2.msra.mxu0 0.0
        %1393 = vmatprep.subr.mxu0 0.0
        %1394 = vmatpush2.msra.mxu0 0.0
        %1395 = vmatprep.subr.mxu0 0.0
        %1396 = vmatpush2.msra.mxu0 0.0
        %1397 = vmatprep.subr.mxu0 0.0
        %1398 = vmatpush2.msra.mxu0 0.0
        %1399 = vmatprep.subr.mxu0 0.0
        %1400 = vmatpush2.msra.mxu0 0.0
        %1401 = vmatprep.subr.mxu0 0.0
        %1402 = vmatpush2.msra.mxu0 0.0
        %1403 = vmatprep.mubr.f32.mxu0 0.0
        %1404 = vmatmul.mubr.f32.gmra.mxu0 %v1337
        %v1405 = vpop.f32.mrf.mxu0
        %v1406 = vadd.f32 0.0, %v1405
        %v1407 = vpop.f32.mrf.mxu0
        %1408 = vdwg.mxu0
        %v1409 = vrcp.pop %v1332
        %v1410 = vmul.f32 %v1406, %v1409
        %s1411 = scalar_lea.vmem [#allocation3], 8
        %1412 = vst.msk [vmem:[%s1411] sm:$0xff] %vm563, %v1410
        %v1413 = vld [vmem:[%s1245] sm:$0xff]
        %1415 = vrot.lane.b32.xlu0 %v1413, 120
        %v1416 = vpop.permute.xlu0 %1415
        %1417 = vrot.lane.b32.xlu0 %v1413, 88
        %v1418 = vpop.permute.xlu0 %1417
        %v1419 = vsel %vm563, %v1416, 0
        %v1421 = vsel %vm563, %v1418, 0
        %1423 = vmatprep.subr.mxu0 0.0
        %1424 = vmatpush1.xpose.msra.mxu0 0.0
        %1425 = vmatprep.subr.mxu0 0.0
        %1426 = vmatpush1.xpose.msra.mxu0 0.0
        %1427 = vmatprep.subr.mxu0 0.0
        %1428 = vmatpush1.xpose.msra.mxu0 0.0
        %1429 = vmatprep.subr.mxu0 0.0
        %1430 = vmatpush1.xpose.msra.mxu0 0.0
        %1431 = vmatprep.subr.mxu0 0.0
        %1432 = vmatpush1.xpose.msra.mxu0 0.0
        %1433 = vmatprep.subr.mxu0 0.0
        %1434 = vmatpush1.xpose.msra.mxu0 0.0
        %1435 = vmatprep.subr.mxu0 0.0
        %1436 = vmatpush1.xpose.msra.mxu0 0.0
        %1437 = vmatprep.subr.mxu0 0.0
        %1438 = vmatpush1.xpose.msra.mxu0 0.0
        %1439 = vmatprep.subr.mxu0 0.0
        %1440 = vmatpush1.xpose.msra.mxu0 0.0
        %1441 = vmatprep.subr.mxu0 0.0
        %1442 = vmatpush1.xpose.msra.mxu0 0.0
        %1443 = vmatprep.subr.mxu0 0.0
        %1444 = vmatpush1.xpose.msra.mxu0 0.0
        %1445 = vmatprep.subr.mxu0 0.0
        %1446 = vmatpush1.xpose.msra.mxu0 0.0
        %1447 = vmatprep.subr.mxu0 0.0
        %1448 = vmatpush1.xpose.msra.mxu0 0.0
        %1449 = vmatprep.subr.mxu0 0.0
        %1450 = vmatpush1.xpose.msra.mxu0 0.0
        %1451 = vmatprep.subr.mxu0 0.0
        %1452 = vmatpush1.xpose.msra.mxu0 0.0
        %1453 = vmatprep.subr.mxu0 0.0
        %1454 = vmatpush1.xpose.msra.mxu0 %v1421
        %1455 = vmatprep.subr.mxu0 0.0
        %1456 = vmatpush2.xpose.msra.mxu0 0.0
        %1457 = vmatprep.subr.mxu0 0.0
        %1458 = vmatpush2.xpose.msra.mxu0 0.0
        %1459 = vmatprep.subr.mxu0 0.0
        %1460 = vmatpush2.xpose.msra.mxu0 0.0
        %1461 = vmatprep.subr.mxu0 0.0
        %1462 = vmatpush2.xpose.msra.mxu0 0.0
        %1463 = vmatprep.subr.mxu0 0.0
        %1464 = vmatpush2.xpose.msra.mxu0 0.0
        %1465 = vmatprep.subr.mxu0 0.0
        %1466 = vmatpush2.xpose.msra.mxu0 0.0
        %1467 = vmatprep.subr.mxu0 0.0
        %1468 = vmatpush2.xpose.msra.mxu0 0.0
        %1469 = vmatprep.subr.mxu0 0.0
        %1470 = vmatpush2.xpose.msra.mxu0 0.0
        %1471 = vmatprep.subr.mxu0 0.0
        %1472 = vmatpush2.xpose.msra.mxu0 0.0
        %1473 = vmatprep.subr.mxu0 0.0
        %1474 = vmatpush2.xpose.msra.mxu0 0.0
        %1475 = vmatprep.subr.mxu0 0.0
        %1476 = vmatpush2.xpose.msra.mxu0 0.0
        %1477 = vmatprep.subr.mxu0 0.0
        %1478 = vmatpush2.xpose.msra.mxu0 0.0
        %1479 = vmatprep.subr.mxu0 0.0
        %1480 = vmatpush2.xpose.msra.mxu0 0.0
        %1481 = vmatprep.subr.mxu0 0.0
        %1482 = vmatpush2.xpose.msra.mxu0 0.0
        %1483 = vmatprep.subr.mxu0 0.0
        %1484 = vmatpush2.xpose.msra.mxu0 0.0
        %1485 = vmatprep.subr.mxu0 0.0
        %1486 = vmatpush2.xpose.msra.mxu0 0.0
        %1487 = vmatprep.mubr.f32.mxu0 0.0
        %1488 = vmatmul.mubr.f32.gmra.mxu0 %v1419
        %v1489 = vpop.f32.mrf.mxu0
        %v1490 = vadd.f32 0.0, %v1489
        %v1491 = vpop.f32.mrf.mxu0
        %1492 = vdwg.mxu0
        %v1493 = vsel %vm563, %v1490, -inf
        %1494 = vmax.xlane.f32.xlu0 %v1493
        %v1495 = vpop.xlane.xlu0 %1494
        %v1496 = vsub.f32 %v1490, %v1495
        %v1497 = vmul.f32 %v1496, 1.442695
        %v1498 = vpow.pop %v1497
        %v1499 = vsel %vm563, %v1498, 0.0
        %1500 = vadd.xlane.f32.xlu0 %v1499
        %v1501 = vpop.xlane.xlu0 %1500
        %1502 = vrot.lane.b32.xlu0 %v1413, 56
        %v1503 = vpop.permute.xlu0 %1502
        %v1506 = vsel %vm563, %v1498, 0
        %1508 = vmatprep.subr.mxu0 0.0
        %1509 = vmatpush1.msra.mxu0 0.0
        %1510 = vmatprep.subr.mxu0 0.0
        %1511 = vmatpush1.msra.mxu0 0.0
        %1512 = vmatprep.subr.mxu0 0.0
        %1513 = vmatpush1.msra.mxu0 0.0
        %1514 = vmatprep.subr.mxu0 0.0
        %1515 = vmatpush1.msra.mxu0 0.0
        %1516 = vmatprep.subr.mxu0 0.0
        %1517 = vmatpush1.msra.mxu0 0.0
        %1518 = vmatprep.subr.mxu0 0.0
        %1519 = vmatpush1.msra.mxu0 0.0
        %1520 = vmatprep.subr.mxu0 0.0
        %1521 = vmatpush1.msra.mxu0 0.0
        %1522 = vmatprep.subr.mxu0 0.0
        %1523 = vmatpush1.msra.mxu0 0.0
        %1524 = vmatprep.subr.mxu0 0.0
        %1525 = vmatpush1.msra.mxu0 0.0
        %1526 = vmatprep.subr.mxu0 0.0
        %1527 = vmatpush1.msra.mxu0 0.0
        %1528 = vmatprep.subr.mxu0 0.0
        %1529 = vmatpush1.msra.mxu0 0.0
        %1530 = vmatprep.subr.mxu0 0.0
        %1531 = vmatpush1.msra.mxu0 0.0
        %1532 = vmatprep.subr.mxu0 0.0
        %1533 = vmatpush1.msra.mxu0 0.0
        %1534 = vmatprep.subr.mxu0 0.0
        %1535 = vmatpush1.msra.mxu0 0.0
        %1536 = vmatprep.subr.mxu0 0.0
        %1537 = vmatpush1.msra.mxu0 0.0
        %1538 = vmatprep.subr.mxu0 0.0
        %1539 = vmatpush1.msra.mxu0 %v1503
        %1540 = vmatprep.subr.mxu0 0.0
        %1541 = vmatpush2.msra.mxu0 0.0
        %1542 = vmatprep.subr.mxu0 0.0
        %1543 = vmatpush2.msra.mxu0 0.0
        %1544 = vmatprep.subr.mxu0 0.0
        %1545 = vmatpush2.msra.mxu0 0.0
        %1546 = vmatprep.subr.mxu0 0.0
        %1547 = vmatpush2.msra.mxu0 0.0
        %1548 = vmatprep.subr.mxu0 0.0
        %1549 = vmatpush2.msra.mxu0 0.0
        %1550 = vmatprep.subr.mxu0 0.0
        %1551 = vmatpush2.msra.mxu0 0.0
        %1552 = vmatprep.subr.mxu0 0.0
        %1553 = vmatpush2.msra.mxu0 0.0
        %1554 = vmatprep.subr.mxu0 0.0
        %1555 = vmatpush2.msra.mxu0 0.0
        %1556 = vmatprep.subr.mxu0 0.0
        %1557 = vmatpush2.msra.mxu0 0.0
        %1558 = vmatprep.subr.mxu0 0.0
        %1559 = vmatpush2.msra.mxu0 0.0
        %1560 = vmatprep.subr.mxu0 0.0
        %1561 = vmatpush2.msra.mxu0 0.0
        %1562 = vmatprep.subr.mxu0 0.0
        %1563 = vmatpush2.msra.mxu0 0.0
        %1564 = vmatprep.subr.mxu0 0.0
        %1565 = vmatpush2.msra.mxu0 0.0
        %1566 = vmatprep.subr.mxu0 0.0
        %1567 = vmatpush2.msra.mxu0 0.0
        %1568 = vmatprep.subr.mxu0 0.0
        %1569 = vmatpush2.msra.mxu0 0.0
        %1570 = vmatprep.subr.mxu0 0.0
        %1571 = vmatpush2.msra.mxu0 0.0
        %1572 = vmatprep.mubr.f32.mxu0 0.0
        %1573 = vmatmul.mubr.f32.gmra.mxu0 %v1506
        %v1574 = vpop.f32.mrf.mxu0
        %v1575 = vadd.f32 0.0, %v1574
        %v1576 = vpop.f32.mrf.mxu0
        %1577 = vdwg.mxu0
        %v1578 = vrcp.pop %v1501
        %v1579 = vmul.f32 %v1575, %v1578
        %1581 = vrot.lane.b32.xlu0 %v1579, 8
        %v1582 = vpop.permute.xlu0 %1581
        %1584 = vst.msk [vmem:[%s1411] sm:$0xff] %vm897, %v1582
        %v1585 = vld [vmem:[%s1245] sm:$0xff]
        %1587 = vrot.lane.b32.xlu0 %v1585, 112
        %v1588 = vpop.permute.xlu0 %1587
        %1589 = vrot.lane.b32.xlu0 %v1585, 80
        %v1590 = vpop.permute.xlu0 %1589
        %v1591 = vsel %vm563, %v1588, 0
        %v1593 = vsel %vm563, %v1590, 0
        %1595 = vmatprep.subr.mxu0 0.0
        %1596 = vmatpush1.xpose.msra.mxu0 0.0
        %1597 = vmatprep.subr.mxu0 0.0
        %1598 = vmatpush1.xpose.msra.mxu0 0.0
        %1599 = vmatprep.subr.mxu0 0.0
        %1600 = vmatpush1.xpose.msra.mxu0 0.0
        %1601 = vmatprep.subr.mxu0 0.0
        %1602 = vmatpush1.xpose.msra.mxu0 0.0
        %1603 = vmatprep.subr.mxu0 0.0
        %1604 = vmatpush1.xpose.msra.mxu0 0.0
        %1605 = vmatprep.subr.mxu0 0.0
        %1606 = vmatpush1.xpose.msra.mxu0 0.0
        %1607 = vmatprep.subr.mxu0 0.0
        %1608 = vmatpush1.xpose.msra.mxu0 0.0
        %1609 = vmatprep.subr.mxu0 0.0
        %1610 = vmatpush1.xpose.msra.mxu0 0.0
        %1611 = vmatprep.subr.mxu0 0.0
        %1612 = vmatpush1.xpose.msra.mxu0 0.0
        %1613 = vmatprep.subr.mxu0 0.0
        %1614 = vmatpush1.xpose.msra.mxu0 0.0
        %1615 = vmatprep.subr.mxu0 0.0
        %1616 = vmatpush1.xpose.msra.mxu0 0.0
        %1617 = vmatprep.subr.mxu0 0.0
        %1618 = vmatpush1.xpose.msra.mxu0 0.0
        %1619 = vmatprep.subr.mxu0 0.0
        %1620 = vmatpush1.xpose.msra.mxu0 0.0
        %1621 = vmatprep.subr.mxu0 0.0
        %1622 = vmatpush1.xpose.msra.mxu0 0.0
        %1623 = vmatprep.subr.mxu0 0.0
        %1624 = vmatpush1.xpose.msra.mxu0 0.0
        %1625 = vmatprep.subr.mxu0 0.0
        %1626 = vmatpush1.xpose.msra.mxu0 %v1593
        %1627 = vmatprep.subr.mxu0 0.0
        %1628 = vmatpush2.xpose.msra.mxu0 0.0
        %1629 = vmatprep.subr.mxu0 0.0
        %1630 = vmatpush2.xpose.msra.mxu0 0.0
        %1631 = vmatprep.subr.mxu0 0.0
        %1632 = vmatpush2.xpose.msra.mxu0 0.0
        %1633 = vmatprep.subr.mxu0 0.0
        %1634 = vmatpush2.xpose.msra.mxu0 0.0
        %1635 = vmatprep.subr.mxu0 0.0
        %1636 = vmatpush2.xpose.msra.mxu0 0.0
        %1637 = vmatprep.subr.mxu0 0.0
        %1638 = vmatpush2.xpose.msra.mxu0 0.0
        %1639 = vmatprep.subr.mxu0 0.0
        %1640 = vmatpush2.xpose.msra.mxu0 0.0
        %1641 = vmatprep.subr.mxu0 0.0
        %1642 = vmatpush2.xpose.msra.mxu0 0.0
        %1643 = vmatprep.subr.mxu0 0.0
        %1644 = vmatpush2.xpose.msra.mxu0 0.0
        %1645 = vmatprep.subr.mxu0 0.0
        %1646 = vmatpush2.xpose.msra.mxu0 0.0
        %1647 = vmatprep.subr.mxu0 0.0
        %1648 = vmatpush2.xpose.msra.mxu0 0.0
        %1649 = vmatprep.subr.mxu0 0.0
        %1650 = vmatpush2.xpose.msra.mxu0 0.0
        %1651 = vmatprep.subr.mxu0 0.0
        %1652 = vmatpush2.xpose.msra.mxu0 0.0
        %1653 = vmatprep.subr.mxu0 0.0
        %1654 = vmatpush2.xpose.msra.mxu0 0.0
        %1655 = vmatprep.subr.mxu0 0.0
        %1656 = vmatpush2.xpose.msra.mxu0 0.0
        %1657 = vmatprep.subr.mxu0 0.0
        %1658 = vmatpush2.xpose.msra.mxu0 0.0
        %1659 = vmatprep.mubr.f32.mxu0 0.0
        %1660 = vmatmul.mubr.f32.gmra.mxu0 %v1591
        %v1661 = vpop.f32.mrf.mxu0
        %v1662 = vadd.f32 0.0, %v1661
        %v1663 = vpop.f32.mrf.mxu0
        %1664 = vdwg.mxu0
        %v1665 = vsel %vm563, %v1662, -inf
        %1666 = vmax.xlane.f32.xlu0 %v1665
        %v1667 = vpop.xlane.xlu0 %1666
        %v1668 = vsub.f32 %v1662, %v1667
        %v1669 = vmul.f32 %v1668, 1.442695
        %v1670 = vpow.pop %v1669
        %v1671 = vsel %vm563, %v1670, 0.0
        %1672 = vadd.xlane.f32.xlu0 %v1671
        %v1673 = vpop.xlane.xlu0 %1672
        %1674 = vrot.lane.b32.xlu0 %v1585, 48
        %v1675 = vpop.permute.xlu0 %1674
        %v1678 = vsel %vm563, %v1670, 0
        %1680 = vmatprep.subr.mxu0 0.0
        %1681 = vmatpush1.msra.mxu0 0.0
        %1682 = vmatprep.subr.mxu0 0.0
        %1683 = vmatpush1.msra.mxu0 0.0
        %1684 = vmatprep.subr.mxu0 0.0
        %1685 = vmatpush1.msra.mxu0 0.0
        %1686 = vmatprep.subr.mxu0 0.0
        %1687 = vmatpush1.msra.mxu0 0.0
        %1688 = vmatprep.subr.mxu0 0.0
        %1689 = vmatpush1.msra.mxu0 0.0
        %1690 = vmatprep.subr.mxu0 0.0
        %1691 = vmatpush1.msra.mxu0 0.0
        %1692 = vmatprep.subr.mxu0 0.0
        %1693 = vmatpush1.msra.mxu0 0.0
        %1694 = vmatprep.subr.mxu0 0.0
        %1695 = vmatpush1.msra.mxu0 0.0
        %1696 = vmatprep.subr.mxu0 0.0
        %1697 = vmatpush1.msra.mxu0 0.0
        %1698 = vmatprep.subr.mxu0 0.0
        %1699 = vmatpush1.msra.mxu0 0.0
        %1700 = vmatprep.subr.mxu0 0.0
        %1701 = vmatpush1.msra.mxu0 0.0
        %1702 = vmatprep.subr.mxu0 0.0
        %1703 = vmatpush1.msra.mxu0 0.0
        %1704 = vmatprep.subr.mxu0 0.0
        %1705 = vmatpush1.msra.mxu0 0.0
        %1706 = vmatprep.subr.mxu0 0.0
        %1707 = vmatpush1.msra.mxu0 0.0
        %1708 = vmatprep.subr.mxu0 0.0
        %1709 = vmatpush1.msra.mxu0 0.0
        %1710 = vmatprep.subr.mxu0 0.0
        %1711 = vmatpush1.msra.mxu0 %v1675
        %1712 = vmatprep.subr.mxu0 0.0
        %1713 = vmatpush2.msra.mxu0 0.0
        %1714 = vmatprep.subr.mxu0 0.0
        %1715 = vmatpush2.msra.mxu0 0.0
        %1716 = vmatprep.subr.mxu0 0.0
        %1717 = vmatpush2.msra.mxu0 0.0
        %1718 = vmatprep.subr.mxu0 0.0
        %1719 = vmatpush2.msra.mxu0 0.0
        %1720 = vmatprep.subr.mxu0 0.0
        %1721 = vmatpush2.msra.mxu0 0.0
        %1722 = vmatprep.subr.mxu0 0.0
        %1723 = vmatpush2.msra.mxu0 0.0
        %1724 = vmatprep.subr.mxu0 0.0
        %1725 = vmatpush2.msra.mxu0 0.0
        %1726 = vmatprep.subr.mxu0 0.0
        %1727 = vmatpush2.msra.mxu0 0.0
        %1728 = vmatprep.subr.mxu0 0.0
        %1729 = vmatpush2.msra.mxu0 0.0
        %1730 = vmatprep.subr.mxu0 0.0
        %1731 = vmatpush2.msra.mxu0 0.0
        %1732 = vmatprep.subr.mxu0 0.0
        %1733 = vmatpush2.msra.mxu0 0.0
        %1734 = vmatprep.subr.mxu0 0.0
        %1735 = vmatpush2.msra.mxu0 0.0
        %1736 = vmatprep.subr.mxu0 0.0
        %1737 = vmatpush2.msra.mxu0 0.0
        %1738 = vmatprep.subr.mxu0 0.0
        %1739 = vmatpush2.msra.mxu0 0.0
        %1740 = vmatprep.subr.mxu0 0.0
        %1741 = vmatpush2.msra.mxu0 0.0
        %1742 = vmatprep.subr.mxu0 0.0
        %1743 = vmatpush2.msra.mxu0 0.0
        %1744 = vmatprep.mubr.f32.mxu0 0.0
        %1745 = vmatmul.mubr.f32.gmra.mxu0 %v1678
        %v1746 = vpop.f32.mrf.mxu0
        %v1747 = vadd.f32 0.0, %v1746
        %v1748 = vpop.f32.mrf.mxu0
        %1749 = vdwg.mxu0
        %v1750 = vrcp.pop %v1673
        %v1751 = vmul.f32 %v1747, %v1750
        %1753 = vrot.lane.b32.xlu0 %v1751, 16
        %v1754 = vpop.permute.xlu0 %1753
        %1756 = vst.msk [vmem:[%s1411] sm:$0xff] %vm1070, %v1754
        %v1757 = vld [vmem:[%s1245] sm:$0xff]
        %1759 = vrot.lane.b32.xlu0 %v1757, 104
        %v1760 = vpop.permute.xlu0 %1759
        %1761 = vrot.lane.b32.xlu0 %v1757, 72
        %v1762 = vpop.permute.xlu0 %1761
        %v1763 = vsel %vm563, %v1760, 0
        %v1765 = vsel %vm563, %v1762, 0
        %1767 = vmatprep.subr.mxu0 0.0
        %1768 = vmatpush1.xpose.msra.mxu0 0.0
        %1769 = vmatprep.subr.mxu0 0.0
        %1770 = vmatpush1.xpose.msra.mxu0 0.0
        %1771 = vmatprep.subr.mxu0 0.0
        %1772 = vmatpush1.xpose.msra.mxu0 0.0
        %1773 = vmatprep.subr.mxu0 0.0
        %1774 = vmatpush1.xpose.msra.mxu0 0.0
        %1775 = vmatprep.subr.mxu0 0.0
        %1776 = vmatpush1.xpose.msra.mxu0 0.0
        %1777 = vmatprep.subr.mxu0 0.0
        %1778 = vmatpush1.xpose.msra.mxu0 0.0
        %1779 = vmatprep.subr.mxu0 0.0
        %1780 = vmatpush1.xpose.msra.mxu0 0.0
        %1781 = vmatprep.subr.mxu0 0.0
        %1782 = vmatpush1.xpose.msra.mxu0 0.0
        %1783 = vmatprep.subr.mxu0 0.0
        %1784 = vmatpush1.xpose.msra.mxu0 0.0
        %1785 = vmatprep.subr.mxu0 0.0
        %1786 = vmatpush1.xpose.msra.mxu0 0.0
        %1787 = vmatprep.subr.mxu0 0.0
        %1788 = vmatpush1.xpose.msra.mxu0 0.0
        %1789 = vmatprep.subr.mxu0 0.0
        %1790 = vmatpush1.xpose.msra.mxu0 0.0
        %1791 = vmatprep.subr.mxu0 0.0
        %1792 = vmatpush1.xpose.msra.mxu0 0.0
        %1793 = vmatprep.subr.mxu0 0.0
        %1794 = vmatpush1.xpose.msra.mxu0 0.0
        %1795 = vmatprep.subr.mxu0 0.0
        %1796 = vmatpush1.xpose.msra.mxu0 0.0
        %1797 = vmatprep.subr.mxu0 0.0
        %1798 = vmatpush1.xpose.msra.mxu0 %v1765
        %1799 = vmatprep.subr.mxu0 0.0
        %1800 = vmatpush2.xpose.msra.mxu0 0.0
        %1801 = vmatprep.subr.mxu0 0.0
        %1802 = vmatpush2.xpose.msra.mxu0 0.0
        %1803 = vmatprep.subr.mxu0 0.0
        %1804 = vmatpush2.xpose.msra.mxu0 0.0
        %1805 = vmatprep.subr.mxu0 0.0
        %1806 = vmatpush2.xpose.msra.mxu0 0.0
        %1807 = vmatprep.subr.mxu0 0.0
        %1808 = vmatpush2.xpose.msra.mxu0 0.0
        %1809 = vmatprep.subr.mxu0 0.0
        %1810 = vmatpush2.xpose.msra.mxu0 0.0
        %1811 = vmatprep.subr.mxu0 0.0
        %1812 = vmatpush2.xpose.msra.mxu0 0.0
        %1813 = vmatprep.subr.mxu0 0.0
        %1814 = vmatpush2.xpose.msra.mxu0 0.0
        %1815 = vmatprep.subr.mxu0 0.0
        %1816 = vmatpush2.xpose.msra.mxu0 0.0
        %1817 = vmatprep.subr.mxu0 0.0
        %1818 = vmatpush2.xpose.msra.mxu0 0.0
        %1819 = vmatprep.subr.mxu0 0.0
        %1820 = vmatpush2.xpose.msra.mxu0 0.0
        %1821 = vmatprep.subr.mxu0 0.0
        %1822 = vmatpush2.xpose.msra.mxu0 0.0
        %1823 = vmatprep.subr.mxu0 0.0
        %1824 = vmatpush2.xpose.msra.mxu0 0.0
        %1825 = vmatprep.subr.mxu0 0.0
        %1826 = vmatpush2.xpose.msra.mxu0 0.0
        %1827 = vmatprep.subr.mxu0 0.0
        %1828 = vmatpush2.xpose.msra.mxu0 0.0
        %1829 = vmatprep.subr.mxu0 0.0
        %1830 = vmatpush2.xpose.msra.mxu0 0.0
        %1831 = vmatprep.mubr.f32.mxu0 0.0
        %1832 = vmatmul.mubr.f32.gmra.mxu0 %v1763
        %v1833 = vpop.f32.mrf.mxu0
        %v1834 = vadd.f32 0.0, %v1833
        %v1835 = vpop.f32.mrf.mxu0
        %1836 = vdwg.mxu0
        %v1837 = vsel %vm563, %v1834, -inf
        %1838 = vmax.xlane.f32.xlu0 %v1837
        %v1839 = vpop.xlane.xlu0 %1838
        %v1840 = vsub.f32 %v1834, %v1839
        %v1841 = vmul.f32 %v1840, 1.442695
        %v1842 = vpow.pop %v1841
        %v1843 = vsel %vm563, %v1842, 0.0
        %1844 = vadd.xlane.f32.xlu0 %v1843
        %v1845 = vpop.xlane.xlu0 %1844
        %1846 = vrot.lane.b32.xlu0 %v1757, 40
        %v1847 = vpop.permute.xlu0 %1846
        %v1850 = vsel %vm563, %v1842, 0
        %1852 = vmatprep.subr.mxu0 0.0
        %1853 = vmatpush1.msra.mxu0 0.0
        %1854 = vmatprep.subr.mxu0 0.0
        %1855 = vmatpush1.msra.mxu0 0.0
        %1856 = vmatprep.subr.mxu0 0.0
        %1857 = vmatpush1.msra.mxu0 0.0
        %1858 = vmatprep.subr.mxu0 0.0
        %1859 = vmatpush1.msra.mxu0 0.0
        %1860 = vmatprep.subr.mxu0 0.0
        %1861 = vmatpush1.msra.mxu0 0.0
        %1862 = vmatprep.subr.mxu0 0.0
        %1863 = vmatpush1.msra.mxu0 0.0
        %1864 = vmatprep.subr.mxu0 0.0
        %1865 = vmatpush1.msra.mxu0 0.0
        %1866 = vmatprep.subr.mxu0 0.0
        %1867 = vmatpush1.msra.mxu0 0.0
        %1868 = vmatprep.subr.mxu0 0.0
        %1869 = vmatpush1.msra.mxu0 0.0
        %1870 = vmatprep.subr.mxu0 0.0
        %1871 = vmatpush1.msra.mxu0 0.0
        %1872 = vmatprep.subr.mxu0 0.0
        %1873 = vmatpush1.msra.mxu0 0.0
        %1874 = vmatprep.subr.mxu0 0.0
        %1875 = vmatpush1.msra.mxu0 0.0
        %1876 = vmatprep.subr.mxu0 0.0
        %1877 = vmatpush1.msra.mxu0 0.0
        %1878 = vmatprep.subr.mxu0 0.0
        %1879 = vmatpush1.msra.mxu0 0.0
        %1880 = vmatprep.subr.mxu0 0.0
        %1881 = vmatpush1.msra.mxu0 0.0
        %1882 = vmatprep.subr.mxu0 0.0
        %1883 = vmatpush1.msra.mxu0 %v1847
        %1884 = vmatprep.subr.mxu0 0.0
        %1885 = vmatpush2.msra.mxu0 0.0
        %1886 = vmatprep.subr.mxu0 0.0
        %1887 = vmatpush2.msra.mxu0 0.0
        %1888 = vmatprep.subr.mxu0 0.0
        %1889 = vmatpush2.msra.mxu0 0.0
        %1890 = vmatprep.subr.mxu0 0.0
        %1891 = vmatpush2.msra.mxu0 0.0
        %1892 = vmatprep.subr.mxu0 0.0
        %1893 = vmatpush2.msra.mxu0 0.0
        %1894 = vmatprep.subr.mxu0 0.0
        %1895 = vmatpush2.msra.mxu0 0.0
        %1896 = vmatprep.subr.mxu0 0.0
        %1897 = vmatpush2.msra.mxu0 0.0
        %1898 = vmatprep.subr.mxu0 0.0
        %1899 = vmatpush2.msra.mxu0 0.0
        %1900 = vmatprep.subr.mxu0 0.0
        %1901 = vmatpush2.msra.mxu0 0.0
        %1902 = vmatprep.subr.mxu0 0.0
        %1903 = vmatpush2.msra.mxu0 0.0
        %1904 = vmatprep.subr.mxu0 0.0
        %1905 = vmatpush2.msra.mxu0 0.0
        %1906 = vmatprep.subr.mxu0 0.0
        %1907 = vmatpush2.msra.mxu0 0.0
        %1908 = vmatprep.subr.mxu0 0.0
        %1909 = vmatpush2.msra.mxu0 0.0
        %1910 = vmatprep.subr.mxu0 0.0
        %1911 = vmatpush2.msra.mxu0 0.0
        %1912 = vmatprep.subr.mxu0 0.0
        %1913 = vmatpush2.msra.mxu0 0.0
        %1914 = vmatprep.subr.mxu0 0.0
        %1915 = vmatpush2.msra.mxu0 0.0
        %1916 = vmatprep.mubr.f32.mxu0 0.0
        %1917 = vmatmul.mubr.f32.gmra.mxu0 %v1850
        %v1918 = vpop.f32.mrf.mxu0
        %v1919 = vadd.f32 0.0, %v1918
        %v1920 = vpop.f32.mrf.mxu0
        %1921 = vdwg.mxu0
        %v1922 = vrcp.pop %v1845
        %v1923 = vmul.f32 %v1919, %v1922
        %1925 = vrot.lane.b32.xlu0 %v1923, 24
        %v1926 = vpop.permute.xlu0 %1925
        %1928 = vst.msk [vmem:[%s1411] sm:$0xff] %vm1243, %v1926
        %v1929 = vld [vmem:[#allocation3] sm:$0xff]
        %v1930 = vld [vmem:[#allocation3 + $0x8] sm:$0xff]
        %v1931 = vld [vmem:[%s3] sm:$0xff]
        %v1932 = vld [vmem:[%s3 + $0x8] sm:$0xff]
        %v1933 = vld [vmem:[%s3 + $0x10] sm:$0xff]
        %v1934 = vld [vmem:[%s3 + $0x18] sm:$0xff]
        %v1935 = vld [vmem:[%s4] sm:$0x1]
        %v1937 = vlaneseq
        %v1938 = vshrl.u32 %v1937, 7
        %v1939 = vsub.s32 0, %v1938
        %v1940 = vrot.slane %v1935, %v1939
        %v1943 = vsel %vm470, %v1929, 0
        %v1946 = vsel %vm470, %v1930, 0
        %1948 = vmatprep.subr.mxu0 0.0
        %1949 = vmatpush1.msra.mxu0 0.0
        %1950 = vmatprep.subr.mxu0 0.0
        %1951 = vmatpush1.msra.mxu0 0.0
        %1952 = vmatprep.subr.mxu0 0.0
        %1953 = vmatpush1.msra.mxu0 0.0
        %1954 = vmatprep.subr.mxu0 0.0
        %1955 = vmatpush1.msra.mxu0 0.0
        %1956 = vmatprep.subr.mxu0 0.0
        %1957 = vmatpush1.msra.mxu0 0.0
        %1958 = vmatprep.subr.mxu0 0.0
        %1959 = vmatpush1.msra.mxu0 0.0
        %1960 = vmatprep.subr.mxu0 0.0
        %1961 = vmatpush1.msra.mxu0 0.0
        %1962 = vmatprep.subr.mxu0 0.0
        %1963 = vmatpush1.msra.mxu0 0.0
        %1964 = vmatprep.subr.mxu0 0.0
        %1965 = vmatpush1.msra.mxu0 0.0
        %1966 = vmatprep.subr.mxu0 0.0
        %1967 = vmatpush1.msra.mxu0 0.0
        %1968 = vmatprep.subr.mxu0 0.0
        %1969 = vmatpush1.msra.mxu0 0.0
        %1970 = vmatprep.subr.mxu0 0.0
        %1971 = vmatpush1.msra.mxu0 0.0
        %1972 = vmatprep.subr.mxu0 0.0
        %1973 = vmatpush1.msra.mxu0 %v1934
        %1974 = vmatprep.subr.mxu0 0.0
        %1975 = vmatpush1.msra.mxu0 %v1933
        %1976 = vmatprep.subr.mxu0 0.0
        %1977 = vmatpush1.msra.mxu0 %v1932
        %1978 = vmatprep.subr.mxu0 0.0
        %1979 = vmatpush1.msra.mxu0 %v1931
        %1980 = vmatprep.subr.mxu0 0.0
        %1981 = vmatpush2.msra.mxu0 0.0
        %1982 = vmatprep.subr.mxu0 0.0
        %1983 = vmatpush2.msra.mxu0 0.0
        %1984 = vmatprep.subr.mxu0 0.0
        %1985 = vmatpush2.msra.mxu0 0.0
        %1986 = vmatprep.subr.mxu0 0.0
        %1987 = vmatpush2.msra.mxu0 0.0
        %1988 = vmatprep.subr.mxu0 0.0
        %1989 = vmatpush2.msra.mxu0 0.0
        %1990 = vmatprep.subr.mxu0 0.0
        %1991 = vmatpush2.msra.mxu0 0.0
        %1992 = vmatprep.subr.mxu0 0.0
        %1993 = vmatpush2.msra.mxu0 0.0
        %1994 = vmatprep.subr.mxu0 0.0
        %1995 = vmatpush2.msra.mxu0 0.0
        %1996 = vmatprep.subr.mxu0 0.0
        %1997 = vmatpush2.msra.mxu0 0.0
        %1998 = vmatprep.subr.mxu0 0.0
        %1999 = vmatpush2.msra.mxu0 0.0
        %2000 = vmatprep.subr.mxu0 0.0
        %2001 = vmatpush2.msra.mxu0 0.0
        %2002 = vmatprep.subr.mxu0 0.0
        %2003 = vmatpush2.msra.mxu0 0.0
        %2004 = vmatprep.subr.mxu0 0.0
        %2005 = vmatpush2.msra.mxu0 0.0
        %2006 = vmatprep.subr.mxu0 0.0
        %2007 = vmatpush2.msra.mxu0 0.0
        %2008 = vmatprep.subr.mxu0 0.0
        %2009 = vmatpush2.msra.mxu0 0.0
        %2010 = vmatprep.subr.mxu0 0.0
        %2011 = vmatpush2.msra.mxu0 0.0
        %2012 = vmatprep.mubr.f32.mxu0 0.0
        %2013 = vmatmul.mubr.f32.gmra.mxu0 %v1943
        %v2014 = vpop.f32.mrf.mxu0
        %v2015 = vadd.f32 %v1940, %v2014
        %v2016 = vpop.f32.mrf.mxu0
        %2017 = vmatprep.mubr.f32.mxu0 0.0
        %2018 = vmatmul.mubr.f32.gmra.mxu0 %v1946
        %v2019 = vpop.f32.mrf.mxu0
        %v2020 = vadd.f32 %v1940, %v2019
        %v2021 = vpop.f32.mrf.mxu0
        %2022 = vdwg.mxu0
        %v2023 = vadd.f32 %v457, %v2015
        %v2024 = vadd.f32 %v458, %v2020
        %v2025 = vld [vmem:[%s9] sm:$0x1]
        %v2026 = vld [vmem:[%s10] sm:$0x1]
        %v2027 = vsel %vm470, %v2023, 0.0
        %2028 = vadd.xlane.f32.xlu0 %v2027
        %v2029 = vpop.xlane.xlu0 %2028
        %v2030 = vsel %vm470, %v2024, 0.0
        %2031 = vadd.xlane.f32.xlu0 %v2030
        %v2032 = vpop.xlane.xlu0 %2031
        %v2033 = vrcp.pop 32.0
        %v2034 = vmul.f32 %v2029, %v2033
        %v2035 = vmul.f32 %v2032, %v2033
        %v2036 = vsub.f32 %v2023, %v2034
        %v2037 = vsub.f32 %v2024, %v2035
        %v2038 = vmul.f32 %v2036, %v2036
        %v2039 = vmul.f32 %v2037, %v2037
        %v2040 = vsel %vm470, %v2038, 0.0
        %2041 = vadd.xlane.f32.xlu0 %v2040
        %v2042 = vpop.xlane.xlu0 %2041
        %v2043 = vsel %vm470, %v2039, 0.0
        %2044 = vadd.xlane.f32.xlu0 %v2043
        %v2045 = vpop.xlane.xlu0 %2044
        %v2046 = vmul.f32 %v2042, %v2033
        %v2047 = vmul.f32 %v2045, %v2033
        %v2048 = vadd.f32 %v2046, 1e-05
        %v2049 = vadd.f32 %v2047, 1e-05
        %v2050 = vrsqrt.pop %v2048
        %v2051 = vrsqrt.pop %v2049
        %v2052 = vmul.f32 %v2036, %v2050
        %v2053 = vmul.f32 %v2037, %v2051
        %v2055 = vlaneseq
        %v2056 = vshrl.u32 %v2055, 7
        %v2057 = vsub.s32 0, %v2056
        %v2058 = vrot.slane %v2025, %v2057
        %v2060 = vmul.f32 %v2052, %v2058
        %v2061 = vmul.f32 %v2053, %v2058
        %v2063 = vlaneseq
        %v2064 = vshrl.u32 %v2063, 7
        %v2065 = vsub.s32 0, %v2064
        %v2066 = vrot.slane %v2026, %v2065
        %v2068 = vadd.f32 %v2060, %v2066
        %v2069 = vadd.f32 %v2061, %v2066
        %v2070 = vld [vmem:[#allocation4] sm:$0xff]
        %v2071 = vld [vmem:[#allocation4 + $0x8] sm:$0xff]
        %v2072 = vld [vmem:[#allocation4 + $0x10] sm:$0xff]
        %v2073 = vld [vmem:[#allocation4 + $0x18] sm:$0xff]
        %v2074 = vld [vmem:[%s6] sm:$0x1]
        %v2076 = vlaneseq
        %v2077 = vshrl.u32 %v2076, 7
        %v2078 = vsub.s32 0, %v2077
        %v2079 = vrot.slane %v2074, %v2078
        %v2082 = vsel %vm470, %v2068, 0
        %v2085 = vsel %vm470, %v2069, 0
        %2087 = vmatprep.subr.mxu0 0.0
        %2088 = vmatpush1.msra.mxu0 0.0
        %2089 = vmatprep.subr.mxu0 0.0
        %2090 = vmatpush1.msra.mxu0 0.0
        %2091 = vmatprep.subr.mxu0 0.0
        %2092 = vmatpush1.msra.mxu0 0.0
        %2093 = vmatprep.subr.mxu0 0.0
        %2094 = vmatpush1.msra.mxu0 0.0
        %2095 = vmatprep.subr.mxu0 0.0
        %2096 = vmatpush1.msra.mxu0 0.0
        %2097 = vmatprep.subr.mxu0 0.0
        %2098 = vmatpush1.msra.mxu0 0.0
        %2099 = vmatprep.subr.mxu0 0.0
        %2100 = vmatpush1.msra.mxu0 0.0
        %2101 = vmatprep.subr.mxu0 0.0
        %2102 = vmatpush1.msra.mxu0 0.0
        %2103 = vmatprep.subr.mxu0 0.0
        %2104 = vmatpush1.msra.mxu0 0.0
        %2105 = vmatprep.subr.mxu0 0.0
        %2106 = vmatpush1.msra.mxu0 0.0
        %2107 = vmatprep.subr.mxu0 0.0
        %2108 = vmatpush1.msra.mxu0 0.0
        %2109 = vmatprep.subr.mxu0 0.0
        %2110 = vmatpush1.msra.mxu0 0.0
        %2111 = vmatprep.subr.mxu0 0.0
        %2112 = vmatpush1.msra.mxu0 %v2073
        %2113 = vmatprep.subr.mxu0 0.0
        %2114 = vmatpush1.msra.mxu0 %v2072
        %2115 = vmatprep.subr.mxu0 0.0
        %2116 = vmatpush1.msra.mxu0 %v2071
        %2117 = vmatprep.subr.mxu0 0.0
        %2118 = vmatpush1.msra.mxu0 %v2070
        %2119 = vmatprep.subr.mxu0 0.0
        %2120 = vmatpush2.msra.mxu0 0.0
        %2121 = vmatprep.subr.mxu0 0.0
        %2122 = vmatpush2.msra.mxu0 0.0
        %2123 = vmatprep.subr.mxu0 0.0
        %2124 = vmatpush2.msra.mxu0 0.0
        %2125 = vmatprep.subr.mxu0 0.0
        %2126 = vmatpush2.msra.mxu0 0.0
        %2127 = vmatprep.subr.mxu0 0.0
        %2128 = vmatpush2.msra.mxu0 0.0
        %2129 = vmatprep.subr.mxu0 0.0
        %2130 = vmatpush2.msra.mxu0 0.0
        %2131 = vmatprep.subr.mxu0 0.0
        %2132 = vmatpush2.msra.mxu0 0.0
        %2133 = vmatprep.subr.mxu0 0.0
        %2134 = vmatpush2.msra.mxu0 0.0
        %2135 = vmatprep.subr.mxu0 0.0
        %2136 = vmatpush2.msra.mxu0 0.0
        %2137 = vmatprep.subr.mxu0 0.0
        %2138 = vmatpush2.msra.mxu0 0.0
        %2139 = vmatprep.subr.mxu0 0.0
        %2140 = vmatpush2.msra.mxu0 0.0
        %2141 = vmatprep.subr.mxu0 0.0
        %2142 = vmatpush2.msra.mxu0 0.0
        %2143 = vmatprep.subr.mxu0 0.0
        %2144 = vmatpush2.msra.mxu0 0.0
        %2145 = vmatprep.subr.mxu0 0.0
        %2146 = vmatpush2.msra.mxu0 0.0
        %2147 = vmatprep.subr.mxu0 0.0
        %2148 = vmatpush2.msra.mxu0 0.0
        %2149 = vmatprep.subr.mxu0 0.0
        %2150 = vmatpush2.msra.mxu0 0.0
        %2151 = vmatprep.mubr.f32.mxu0 0.0
        %2152 = vmatmul.mubr.f32.gmra.mxu0 %v2082
        %v2153 = vpop.f32.mrf.mxu0
        %v2154 = vadd.f32 %v2079, %v2153
        %v2155 = vpop.f32.mrf.mxu0
        %2156 = vmatprep.mubr.f32.mxu0 0.0
        %2157 = vmatmul.mubr.f32.gmra.mxu0 %v2085
        %v2158 = vpop.f32.mrf.mxu0
        %v2159 = vadd.f32 %v2079, %v2158
        %v2160 = vpop.f32.mrf.mxu0
        %2161 = vdwg.mxu0
        %v2162 = vmax.f32 %v2154, 0.0
        %v2163 = vmax.f32 %v2159, 0.0
        %v2164 = vld [vmem:[%s7] sm:$0xff]
        %v2165 = vld [vmem:[%s7 + $0x8] sm:$0xff]
        %v2166 = vld [vmem:[%s7 + $0x10] sm:$0xff]
        %v2167 = vld [vmem:[%s7 + $0x18] sm:$0xff]
        %v2168 = vld [vmem:[%s7 + $0x20] sm:$0xff]
        %v2169 = vld [vmem:[%s7 + $0x28] sm:$0xff]
        %v2170 = vld [vmem:[%s7 + $0x30] sm:$0xff]
        %v2171 = vld [vmem:[%s7 + $0x38] sm:$0xff]
        %v2172 = vld [vmem:[%s8] sm:$0x1]
        %v2174 = vlaneseq
        %v2175 = vshrl.u32 %v2174, 7
        %v2176 = vsub.s32 0, %v2175
        %v2177 = vrot.slane %v2172, %v2176
        %vm2179 = vcmask 523264
        %v2181 = vsel %vm2179, %v2162, 0
        %v2184 = vsel %vm2179, %v2163, 0
        %2186 = vmatprep.subr.mxu0 0.0
        %2187 = vmatpush1.msra.mxu0 0.0
        %2188 = vmatprep.subr.mxu0 0.0
        %2189 = vmatpush1.msra.mxu0 0.0
        %2190 = vmatprep.subr.mxu0 0.0
        %2191 = vmatpush1.msra.mxu0 0.0
        %2192 = vmatprep.subr.mxu0 0.0
        %2193 = vmatpush1.msra.mxu0 0.0
        %2194 = vmatprep.subr.mxu0 0.0
        %2195 = vmatpush1.msra.mxu0 0.0
        %2196 = vmatprep.subr.mxu0 0.0
        %2197 = vmatpush1.msra.mxu0 0.0
        %2198 = vmatprep.subr.mxu0 0.0
        %2199 = vmatpush1.msra.mxu0 0.0
        %2200 = vmatprep.subr.mxu0 0.0
        %2201 = vmatpush1.msra.mxu0 0.0
        %2202 = vmatprep.subr.mxu0 0.0
        %2203 = vmatpush1.msra.mxu0 %v2171
        %2204 = vmatprep.subr.mxu0 0.0
        %2205 = vmatpush1.msra.mxu0 %v2170
        %2206 = vmatprep.subr.mxu0 0.0
        %2207 = vmatpush1.msra.mxu0 %v2169
        %2208 = vmatprep.subr.mxu0 0.0
        %2209 = vmatpush1.msra.mxu0 %v2168
        %2210 = vmatprep.subr.mxu0 0.0
        %2211 = vmatpush1.msra.mxu0 %v2167
        %2212 = vmatprep.subr.mxu0 0.0
        %2213 = vmatpush1.msra.mxu0 %v2166
        %2214 = vmatprep.subr.mxu0 0.0
        %2215 = vmatpush1.msra.mxu0 %v2165
        %2216 = vmatprep.subr.mxu0 0.0
        %2217 = vmatpush1.msra.mxu0 %v2164
        %2218 = vmatprep.subr.mxu0 0.0
        %2219 = vmatpush2.msra.mxu0 0.0
        %2220 = vmatprep.subr.mxu0 0.0
        %2221 = vmatpush2.msra.mxu0 0.0
        %2222 = vmatprep.subr.mxu0 0.0
        %2223 = vmatpush2.msra.mxu0 0.0
        %2224 = vmatprep.subr.mxu0 0.0
        %2225 = vmatpush2.msra.mxu0 0.0
        %2226 = vmatprep.subr.mxu0 0.0
        %2227 = vmatpush2.msra.mxu0 0.0
        %2228 = vmatprep.subr.mxu0 0.0
        %2229 = vmatpush2.msra.mxu0 0.0
        %2230 = vmatprep.subr.mxu0 0.0
        %2231 = vmatpush2.msra.mxu0 0.0
        %2232 = vmatprep.subr.mxu0 0.0
        %2233 = vmatpush2.msra.mxu0 0.0
        %2234 = vmatprep.subr.mxu0 0.0
        %2235 = vmatpush2.msra.mxu0 0.0
        %2236 = vmatprep.subr.mxu0 0.0
        %2237 = vmatpush2.msra.mxu0 0.0
        %2238 = vmatprep.subr.mxu0 0.0
        %2239 = vmatpush2.msra.mxu0 0.0
        %2240 = vmatprep.subr.mxu0 0.0
        %2241 = vmatpush2.msra.mxu0 0.0
        %2242 = vmatprep.subr.mxu0 0.0
        %2243 = vmatpush2.msra.mxu0 0.0
        %2244 = vmatprep.subr.mxu0 0.0
        %2245 = vmatpush2.msra.mxu0 0.0
        %2246 = vmatprep.subr.mxu0 0.0
        %2247 = vmatpush2.msra.mxu0 0.0
        %2248 = vmatprep.subr.mxu0 0.0
        %2249 = vmatpush2.msra.mxu0 0.0
        %2250 = vmatprep.mubr.f32.mxu0 0.0
        %2251 = vmatmul.mubr.f32.gmra.mxu0 %v2181
        %v2252 = vpop.f32.mrf.mxu0
        %v2253 = vadd.f32 %v2177, %v2252
        %v2254 = vpop.f32.mrf.mxu0
        %2255 = vmatprep.mubr.f32.mxu0 0.0
        %2256 = vmatmul.mubr.f32.gmra.mxu0 %v2184
        %v2257 = vpop.f32.mrf.mxu0
        %v2258 = vadd.f32 %v2177, %v2257
        %v2259 = vpop.f32.mrf.mxu0
        %2260 = vdwg.mxu0
        %v2261 = vadd.f32 %v2068, %v2253
        %v2262 = vadd.f32 %v2069, %v2258
        %v2263 = vld [vmem:[%s11] sm:$0x1]
        %v2264 = vld [vmem:[%s12] sm:$0x1]
        %v2265 = vsel %vm470, %v2261, 0.0
        %2266 = vadd.xlane.f32.xlu0 %v2265
        %v2267 = vpop.xlane.xlu0 %2266
        %v2268 = vsel %vm470, %v2262, 0.0
        %2269 = vadd.xlane.f32.xlu0 %v2268
        %v2270 = vpop.xlane.xlu0 %2269
        %v2271 = vmul.f32 %v2267, %v2033
        %v2272 = vmul.f32 %v2270, %v2033
        %v2273 = vsub.f32 %v2261, %v2271
        %v2274 = vsub.f32 %v2262, %v2272
        %v2275 = vmul.f32 %v2273, %v2273
        %v2276 = vmul.f32 %v2274, %v2274
        %v2277 = vsel %vm470, %v2275, 0.0
        %2278 = vadd.xlane.f32.xlu0 %v2277
        %v2279 = vpop.xlane.xlu0 %2278
        %v2280 = vsel %vm470, %v2276, 0.0
        %2281 = vadd.xlane.f32.xlu0 %v2280
        %v2282 = vpop.xlane.xlu0 %2281
        %v2283 = vmul.f32 %v2279, %v2033
        %v2284 = vmul.f32 %v2282, %v2033
        %v2285 = vadd.f32 %v2283, 1e-05
        %v2286 = vadd.f32 %v2284, 1e-05
        %v2287 = vrsqrt.pop %v2285
        %v2288 = vrsqrt.pop %v2286
        %v2289 = vmul.f32 %v2273, %v2287
        %v2290 = vmul.f32 %v2274, %v2288
        %v2292 = vlaneseq
        %v2293 = vshrl.u32 %v2292, 7
        %v2294 = vsub.s32 0, %v2293
        %v2295 = vrot.slane %v2263, %v2294
        %v2297 = vmul.f32 %v2289, %v2295
        %v2298 = vmul.f32 %v2290, %v2295
        %v2300 = vlaneseq
        %v2301 = vshrl.u32 %v2300, 7
        %v2302 = vsub.s32 0, %v2301
        %v2303 = vrot.slane %v2264, %v2302
        %v2305 = vadd.f32 %v2297, %v2303
        %v2306 = vadd.f32 %v2298, %v2303
        %2307 = vst.msk [vmem:[%s449] sm:$0xff] %vm470, %v2305
        %2308 = vst.msk [vmem:[%s449 + $0x8] sm:$0xff] %vm470, %v2306
        %s2309 = sand.u32 %s314, 1
        %s2310 = scalar_lea.sflag [#allocation6], %s2309
        %s2311 = sand.u32 %s314, 1
        %s2312 = smul.addr %s2311, 16
        %s2313 = scalar_lea.vmem [#allocation7], %s2312
        // Predicated region
        $region77: #{tpu_custom_call.1} parent=71 // pred_check
          %p2314 = pneg %p324
        $region78: #{tpu_custom_call.1} parent=71 // pred_check_branch
          %2316 = sbr.rel (%p2314) target = $region80
        $region79: #{tpu_custom_call.1} parent=71 // pred_region
          %s2317 = smul.u32 2, %s28
          %s2319 = ssub.s32 256, 256
          %2320 = vsyncadd %s2310, %s2319
          %s2321 = smul.addr %s2317, 128
          %s2322 = scalar_lea.hbm %s13, %s2321
          %s2323 = sshll.u32 %s2313, 4
          %s2324 = int_to_ptr.vmem [resolvable:$true] %s2323
          %2329 = dma.vmem_to_hbm [thread:$0]  %s2324, 256, %s2322, %s2310, 128, 128, 8
        $region80: #{tpu_custom_call.1} parent=71 // pred_fallthru
          _
      $region72: #{tpu_custom_call.1} parent=5 // pred_fallthru
        _
      %p2330 = scmp.le.s32.totalorder 2, %s23
      // Predicated region
      $region81: #{tpu_custom_call.1} parent=5 // pred_check
        %p2331 = pneg %p2330
      $region82: #{tpu_custom_call.1} parent=5 // pred_check_branch
        %2333 = sbr.rel (%p2331) target = $region84
      $region83: #{tpu_custom_call.1} parent=5 // pred_region
        %s2334 = ssub.s32 %s23, 2
        // Predicated region
        $region85: #{tpu_custom_call.1} parent=83 // pred_check
          %p2335 = pneg %p330
        $region86: #{tpu_custom_call.1} parent=83 // pred_check_branch
          %2337 = sbr.rel (%p2335) target = $region88
        $region87: #{tpu_custom_call.1} parent=83 // pred_region
          %s2338 = sand.u32 %s315, 1
          %s2339 = scalar_lea.sflag [#allocation6], %s2338
          %s2340 = sand.u32 %s315, 1
          %s2341 = smul.addr %s2340, 16
          %s2342 = scalar_lea.vmem [#allocation7], %s2341
          %2343 = dma.done %s2339, 256
        $region88: #{tpu_custom_call.1} parent=83 // pred_fallthru
          _
      $region84: #{tpu_custom_call.1} parent=5 // pred_fallthru
        _
    $region6: #{tpu_custom_call.1} parent=1 // loop_footer
      %s27 = sadd.s32 1, %s23
    $region7: #{tpu_custom_call.1} parent=1 // loop_footer_branch
      %22 = sbr.rel target = $region3
    $region8: #{tpu_custom_call.1} parent=1 // loop_exit
      _
    %2344 = vsyncpa [#allocation5], 1
    %s2345 = scalar_lea.sflag [#allocation5], 1
    %2346 = vsyncpa %s2345, 1
    %2347 = vsyncpa [#allocation6], 1
    %s2348 = scalar_lea.sflag [#allocation6], 1
    %2349 = vsyncpa %s2348, 1

</llo_original>
